<compile_context>
chip_gen: v7x
topology: tpu7x:2x2x1
jax: 0.10.0
libtpu: 0.0.40
codegen_flags: <defaults>
</compile_context>

<pallas_src>
import math
from functools import partial

import jax
import jax.numpy as jnp
from jax.experimental import pallas as pl
from jax.experimental.pallas import tpu as pltpu


# --------------------------------------------------------------------------- kernel
def _mlp_kernel(x_ref, w1_ref, b1_ref, w2_ref, b2_ref, o_ref, acc_ref, *,
                approximate_gelu):
    """One (tm, D_in) token tile x one t_hid hidden block of fc1 -> GELU -> fc2."""
    j = pl.program_id(1)

    @pl.when(j == 0)
    def _():
        acc_ref[...] = jnp.zeros_like(acc_ref)

    # Cast x in-kernel (cheap VPU op hidden under the MXU): x is read from HBM exactly
    # once in its original dtype instead of paying a separate host-side cast pass.
    x = x_ref[...].astype(w1_ref.dtype)

    # fc1 partial: (tm, D_in) @ (D_in, t_hid) with f32 accumulation on the MXU.
    h = jnp.dot(x, w1_ref[...], preferred_element_type=jnp.float32)
    h = h + b1_ref[...]                                  # (1, t_hid) broadcasts over rows

    if approximate_gelu:
        # torch GELU(approximate='tanh'): tanh runs on the EUP (its own VLIW slot),
        # leaving only a few VALU muls -- preferred on v6e/v7x (erf polynomial = VALU-bound).
        c = math.sqrt(2.0 / math.pi)
        h = 0.5 * h * (1.0 + jnp.tanh(c * (h + 0.044715 * (h * h * h))))
    else:
        # Exact erf GELU (torch.nn.GELU default).
        h = 0.5 * h * (1.0 + jax.lax.erf(h * (1.0 / math.sqrt(2.0))))

    # dropout(p=0.0) == identity.  # TODO(synk): stochastic dropout for p > 0 (training).

    # fc2 partial: accumulate this hidden block's contribution into the f32 scratch.
    h = h.astype(w2_ref.dtype)
    acc_ref[...] += jnp.dot(h, w2_ref[...], preferred_element_type=jnp.float32)

    @pl.when(j == pl.num_programs(1) - 1)
    def _():
        o_ref[...] = (acc_ref[...] + b2_ref[...]).astype(o_ref.dtype)


# --------------------------------------------------------------------------- helpers
def _round_up(x, m):
    return ((x + m - 1) // m) * m


def _vmem_cap_bytes():
    """Generation-aware VMEM ceiling: ~85% of physical (v5e/v6e ~109 MiB, v7x ~54 MiB);
    conservative 64 MiB fallback if the query is unavailable."""
    try:
        cap = int(pltpu.get_tpu_info().vmem_capacity_bytes)
        return max(int(cap * 0.85), 32 * 1024 * 1024)
    except Exception:
        return 64 * 1024 * 1024


def _choose_hidden_tile(d_in, d_hid, d_out, tm, csz, fixed_bytes, cap):
    """Largest hidden tile (divisor of d_hid, multiple of 128) whose pipelined weight
    blocks + f32 intermediate fit under the VMEM cap; full d_hid if it fits (resident)."""
    budget = cap - fixed_bytes - (4 << 20)

    def cost(t):
        w_blocks = 2 * ((d_in * t + t * d_out) * csz + t * 4)   # w1/w2 blocks + b1 (x2 bufs)
        h_interm = 2 * tm * t * 4                               # f32 fc1 output + GELU temps
        return w_blocks + h_interm

    if d_hid % 128 != 0 or cost(d_hid) <= budget:
        return d_hid
    best = 128
    for cand in range(256, d_hid, 128):
        if d_hid % cand == 0 and cost(cand) <= budget:
            best = cand
    return best


# --------------------------------------------------------------------------- wrapper
def mlp_pallas(x, w1, b1, w2, b2, *, tm=256, t_hid=None,
               compute_dtype=jnp.bfloat16, gelu_approximate=False,
               single_buffer_resident=True):
    """x: (B, S, D_in). w1: (D_in, D_hid), b1: (D_hid,), w2: (D_hid, D_out), b2: (D_out,).

    Weights are stored pre-transposed so the kernel does plain row-major MXU matmuls.
    Tokens are flattened to (B*S, D_in); the last (ragged) token block is masked by
    Pallas, so there is no host-side pad/slice and no host-side dtype cast of x.
    """
    B, S, D_in = x.shape
    D_hid = w1.shape[1]
    D_out = w2.shape[1]
    out_dtype = x.dtype
    M = B * S

    # Token tile: multiple of 8 sublanes; guarantee >= 2 M-steps when possible so both
    # TensorCores on v7x get work ("parallel" axis).
    tm = max(8, min(tm, _round_up(M, 8)))
    while tm > 128 and pl.cdiv(M, tm) < 2:
        tm //= 2
    tm = _round_up(tm, 8)

    csz = jnp.dtype(compute_dtype).itemsize
    x_isz = jnp.dtype(x.dtype).itemsize
    o_isz = jnp.dtype(out_dtype).itemsize
    cap = _vmem_cap_bytes()

    fixed_bytes = (2 * tm * D_in * x_isz        # double-buffered x tiles
                   + 2 * tm * D_out * o_isz     # double-buffered out tiles
                   + tm * D_out * 4             # f32 accumulator scratch
                   + D_out * 4)                 # b2

    if t_hid is None:
        t_hid = _choose_hidden_tile(D_in, D_hid, D_out, tm, csz, fixed_bytes, cap)
    if t_hid != D_hid and (D_hid % t_hid != 0 or t_hid % 128 != 0):
        t_hid = D_hid                            # padding in the reduction dim is unsafe
    gj = D_hid // t_hid
    resident = gj == 1                           # weights fully resident across the grid

    est = (fixed_bytes
           + 2 * ((D_in * t_hid + t_hid * D_out) * csz + t_hid * 4)
           + 2 * tm * t_hid * 4)
    vmem_limit = int(min(max(est + (4 << 20), 32 << 20), cap))

    x2 = x.reshape(M, D_in)                      # no dtype cast here -- cast in-kernel
    w1c = w1.astype(compute_dtype)
    w2c = w2.astype(compute_dtype)
    b1c = b1.reshape(1, D_hid).astype(jnp.float32)   # biases stay f32 (added to f32 acc)
    b2c = b2.reshape(1, D_out).astype(jnp.float32)

    def build(use_buffered):
        const_kw = dict(pipeline_mode=pl.Buffered(1)) if use_buffered else {}
        w_kw = const_kw if resident else {}
        in_specs = [
            pl.BlockSpec((tm, D_in), lambda i, j: (i, 0)),              # x tile (streamed)
            pl.BlockSpec((D_in, t_hid), lambda i, j: (0, j), **w_kw),   # w1 block
            pl.BlockSpec((1, t_hid), lambda i, j: (0, j), **w_kw),      # b1 block
            pl.BlockSpec((t_hid, D_out), lambda i, j: (j, 0), **w_kw),  # w2 block
            pl.BlockSpec((1, D_out), lambda i, j: (0, 0), **const_kw),  # b2 (resident)
        ]
        return pl.pallas_call(
            partial(_mlp_kernel, approximate_gelu=gelu_approximate),
            out_shape=jax.ShapeDtypeStruct((M, D_out), out_dtype),
            grid_spec=pltpu.PrefetchScalarGridSpec(
                num_scalar_prefetch=0,
                grid=(pl.cdiv(M, tm), gj),
                in_specs=in_specs,
                out_specs=pl.BlockSpec((tm, D_out), lambda i, j: (i, 0)),
                scratch_shapes=[pltpu.VMEM((tm, D_out), jnp.float32)],
            ),
            compiler_params=pltpu.CompilerParams(
                dimension_semantics=("parallel", "arbitrary"),
                vmem_limit_bytes=vmem_limit,
            ),
        )

    args = (x2, w1c, b1c, w2c, b2c)
    if single_buffer_resident:
        try:
            return build(True)(*args).reshape(B, S, D_out)
        except Exception:
            pass
    return build(False)(*args).reshape(B, S, D_out)


# --------------------------------------------------------------------------- reference
def _reference_mlp(x, w1, b1, w2, b2, approximate=False):
    h = jnp.einsum("bsd,dh->bsh", x, w1) + b1
    if approximate:
        c = math.sqrt(2.0 / math.pi)
        h = 0.5 * h * (1.0 + jnp.tanh(c * (h + 0.044715 * (h * h * h))))
    else:
        h = 0.5 * h * (1.0 + jax.lax.erf(h / jnp.sqrt(2.0)))
    return jnp.einsum("bsh,ho->bso", h, w2) + b2


if __name__ == "__main__":
    # Small ViT-style token grid (197 tokens/clip) so the ragged-last-block path is exercised.
    B, S = 2, 197
    D_in, D_hid, D_out = 128, 512, 128   # hidden_features = 4x, out_features = in_features

    key = jax.random.PRNGKey(0)
    kx, k1, kb1, k2, kb2 = jax.random.split(key, 5)

    x = jax.random.normal(kx, (B, S, D_in), dtype=jnp.float32)

    # Deterministic init mimicking nn.Linear's uniform(-1/sqrt(fan_in), 1/sqrt(fan_in)).
    lim1 = 1.0 / math.sqrt(D_in)
    lim2 = 1.0 / math.sqrt(D_hid)
    w1 = jax.random.uniform(k1, (D_in, D_hid), jnp.float32, -lim1, lim1)
    b1 = jax.random.uniform(kb1, (D_hid,), jnp.float32, -lim1, lim1)
    w2 = jax.random.uniform(k2, (D_hid, D_out), jnp.float32, -lim2, lim2)
    b2 = jax.random.uniform(kb2, (D_out,), jnp.float32, -lim2, lim2)

    ref_erf = _reference_mlp(x, w1, b1, w2, b2, approximate=False)
    ref_tanh = _reference_mlp(x, w1, b1, w2, b2, approximate=True)

    def run(compute_dtype, gelu_approximate, single_buffer, t_hid=None):
        fn = jax.jit(partial(mlp_pallas,
                             compute_dtype=compute_dtype,
                             gelu_approximate=gelu_approximate,
                             single_buffer_resident=single_buffer,
                             t_hid=t_hid))
        return jax.block_until_ready(fn(x, w1, b1, w2, b2))

    # Prefer single-buffered resident weights; fall back cleanly if this JAX build
    # rejects BlockSpec(pipeline_mode=pl.Buffered(1)) anywhere in trace/compile/run.
    try:
        out_f32 = run(jnp.float32, False, True)
        sb = True
    except Exception:
        out_f32 = run(jnp.float32, False, False)
        sb = False

    out_bf16 = run(jnp.bfloat16, False, sb)          # bf16 MXU path, exact erf GELU
    out_tanh = run(jnp.float32, True, sb)            # tanh-GELU (EUP) path
    out_tiled = run(jnp.bfloat16, False, sb, t_hid=256)   # exercise D_hid-tiled accumulator

    assert out_f32.shape == (B, S, D_out)
    assert out_bf16.shape == (B, S, D_out)
    # f32 compute path: tight match against the exact erf-GELU reference.
    assert jnp.allclose(out_f32, ref_erf, atol=1e-4, rtol=1e-4), "f32 erf path mismatch"
    # tanh-GELU path matches the tanh reference (== torch GELU(approximate='tanh')).
    assert jnp.allclose(out_tanh, ref_tanh, atol=1e-4, rtol=1e-4), "f32 tanh path mismatch"
    # bf16 operands + f32 accumulation: loosened tolerance.
    assert jnp.allclose(out_bf16.astype(jnp.float32), ref_erf, atol=3e-2, rtol=3e-2), \
        "bf16 path mismatch vs reference"
    assert jnp.allclose(out_tiled.astype(jnp.float32), ref_erf, atol=3e-2, rtol=3e-2), \
        "hidden-tiled path mismatch vs reference"

    print("KERNEL_OK")
</pallas_src>

<mosaic_0001>
module attributes {stable_mosaic.version = 11 : i64} {
  func.func @_mlp_kernel(%arg0: i32, %arg1: i32, %arg2: memref<256x128xf32, #tpu.memory_space<vmem>>, %arg3: memref<128x512xf32, #tpu.memory_space<vmem>>, %arg4: memref<1x512xf32, #tpu.memory_space<vmem>>, %arg5: memref<512x128xf32, #tpu.memory_space<vmem>>, %arg6: memref<1x128xf32, #tpu.memory_space<vmem>>, %arg7: memref<256x128xf32, #tpu.memory_space<vmem>>, %arg8: memref<256x128xf32, #tpu.memory_space<vmem>>) attributes {dimension_semantics = [#tpu.dimension_semantics<parallel>, #tpu.dimension_semantics<arbitrary>], iteration_bounds = array<i64: 2, 1>, scalar_prefetch = 0 : i64, scratch_operands = 1 : i64, tpu.core_type = #tpu.core_type<tc>, window_params = [{transform_indices = @transform_0, window_bounds = array<i64: 256, 128>}, {pipeline_mode = #tpu.pipeline_mode<synchronous>, transform_indices = @transform_1, window_bounds = array<i64: 128, 512>}, {pipeline_mode = #tpu.pipeline_mode<synchronous>, transform_indices = @transform_2, window_bounds = array<i64: 1, 512>}, {pipeline_mode = #tpu.pipeline_mode<synchronous>, transform_indices = @transform_3, window_bounds = array<i64: 512, 128>}, {pipeline_mode = #tpu.pipeline_mode<synchronous>, transform_indices = @transform_4, window_bounds = array<i64: 1, 128>}, {transform_indices = @transform_5, window_bounds = array<i64: 256, 128>}]} {
    %c0_i32 = arith.constant 0 : i32
    %0 = arith.cmpi eq, %arg1, %c0_i32 : i32
    %1 = arith.extui %0 : i1 to i32
    %c0_i32_0 = arith.constant 0 : i32
    %2 = arith.cmpi ne, %1, %c0_i32_0 : i32
    scf.if %2 {
      %cst_18 = arith.constant 0.000000e+00 : f32
      %25 = vector.broadcast %cst_18 : f32 to vector<256x128xf32>
      %c0_19 = arith.constant 0 : index
      %c0_20 = arith.constant 0 : index
      %26 = vector.load %arg8[%c0_19, %c0_20] : memref<256x128xf32, #tpu.memory_space<vmem>>, vector<256x128xf32>
      tpu.vector_store %arg8[%c0_19, %c0_20], %25 {strides = array<i32>} : memref<256x128xf32, #tpu.memory_space<vmem>>, vector<256x128xf32>,
    } else {
    }
    %c0 = arith.constant 0 : index
    %c0_1 = arith.constant 0 : index
    %3 = vector.load %arg2[%c0, %c0_1] : memref<256x128xf32, #tpu.memory_space<vmem>>, vector<256x128xf32>
    %c0_2 = arith.constant 0 : index
    %c0_3 = arith.constant 0 : index
    %4 = vector.load %arg3[%c0_2, %c0_3] : memref<128x512xf32, #tpu.memory_space<vmem>>, vector<128x512xf32>
    %cst = arith.constant dense<0.000000e+00> : vector<256x512xf32>
    %5 = tpu.matmul %3, %4, %cst {dimension_numbers = #tpu.dot_dimension_numbers<[1], [0], [0], [1], [0, 0, 1, 1], [], []>} : vector<256x128xf32>, vector<128x512xf32>, vector<256x512xf32> -> vector<256x512xf32>
    %c0_4 = arith.constant 0 : index
    %c0_5 = arith.constant 0 : index
    %6 = vector.load %arg4[%c0_4, %c0_5] : memref<1x512xf32, #tpu.memory_space<vmem>>, vector<1x512xf32>
    %7 = vector.broadcast %6 : vector<1x512xf32> to vector<256x512xf32>
    %8 = arith.addf %5, %7 : vector<256x512xf32>
    %cst_6 = arith.constant 5.000000e-01 : f32
    %9 = vector.broadcast %cst_6 : f32 to vector<256x512xf32>
    %10 = arith.mulf %9, %8 : vector<256x512xf32>
    %cst_7 = arith.constant 0.707106769 : f32
    %11 = vector.broadcast %cst_7 : f32 to vector<256x512xf32>
    %12 = arith.mulf %8, %11 : vector<256x512xf32>
    %13 = math.erf %12 : vector<256x512xf32>
    %cst_8 = arith.constant 1.000000e+00 : f32
    %14 = vector.broadcast %cst_8 : f32 to vector<256x512xf32>
    %15 = arith.addf %14, %13 : vector<256x512xf32>
    %16 = arith.mulf %10, %15 : vector<256x512xf32>
    %c0_9 = arith.constant 0 : index
    %c0_10 = arith.constant 0 : index
    %17 = vector.load %arg8[%c0_9, %c0_10] : memref<256x128xf32, #tpu.memory_space<vmem>>, vector<256x128xf32>
    %c0_11 = arith.constant 0 : index
    %c0_12 = arith.constant 0 : index
    %18 = vector.load %arg5[%c0_11, %c0_12] : memref<512x128xf32, #tpu.memory_space<vmem>>, vector<512x128xf32>
    %cst_13 = arith.constant dense<0.000000e+00> : vector<256x128xf32>
    %19 = tpu.matmul %16, %18, %cst_13 {dimension_numbers = #tpu.dot_dimension_numbers<[1], [0], [0], [1], [0, 0, 1, 1], [], []>} : vector<256x512xf32>, vector<512x128xf32>, vector<256x128xf32> -> vector<256x128xf32>
    %20 = arith.addf %17, %19 : vector<256x128xf32>
    %c0_14 = arith.constant 0 : index
    %c0_15 = arith.constant 0 : index
    %21 = vector.load %arg8[%c0_14, %c0_15] : memref<256x128xf32, #tpu.memory_space<vmem>>, vector<256x128xf32>
    tpu.vector_store %arg8[%c0_14, %c0_15], %20 {strides = array<i32>} : memref<256x128xf32, #tpu.memory_space<vmem>>, vector<256x128xf32>,
    %c0_i32_16 = arith.constant 0 : i32
    %22 = arith.cmpi eq, %arg1, %c0_i32_16 : i32
    %23 = arith.extui %22 : i1 to i32
    %c0_i32_17 = arith.constant 0 : i32
    %24 = arith.cmpi ne, %23, %c0_i32_17 : i32
    scf.if %24 {
      %c0_18 = arith.constant 0 : index
      %c0_19 = arith.constant 0 : index
      %25 = vector.load %arg8[%c0_18, %c0_19] : memref<256x128xf32, #tpu.memory_space<vmem>>, vector<256x128xf32>
      %c0_20 = arith.constant 0 : index
      %c0_21 = arith.constant 0 : index
      %26 = vector.load %arg6[%c0_20, %c0_21] : memref<1x128xf32, #tpu.memory_space<vmem>>, vector<1x128xf32>
      %27 = vector.broadcast %26 : vector<1x128xf32> to vector<256x128xf32>
      %28 = arith.addf %25, %27 : vector<256x128xf32>
      %c0_22 = arith.constant 0 : index
      %c0_23 = arith.constant 0 : index
      %29 = vector.load %arg7[%c0_22, %c0_23] : memref<256x128xf32, #tpu.memory_space<vmem>>, vector<256x128xf32>
      tpu.vector_store %arg7[%c0_22, %c0_23], %28 {strides = array<i32>} : memref<256x128xf32, #tpu.memory_space<vmem>>, vector<256x128xf32>,
    } else {
    }
    return
  }
  func.func @transform_0(%arg0: i32, %arg1: i32) -> (i32, i32) {
    %c0_i32 = arith.constant 0 : i32
    %c0_i32_0 = arith.constant 0 : i32
    return %arg0, %c0_i32 : i32, i32
  }
  func.func @transform_1(%arg0: i32, %arg1: i32) -> (i32, i32) {
    %c0_i32 = arith.constant 0 : i32
    %c0_i32_0 = arith.constant 0 : i32
    return %c0_i32, %arg1 : i32, i32
  }
  func.func @transform_2(%arg0: i32, %arg1: i32) -> (i32, i32) {
    %c0_i32 = arith.constant 0 : i32
    %c0_i32_0 = arith.constant 0 : i32
    return %c0_i32, %arg1 : i32, i32
  }
  func.func @transform_3(%arg0: i32, %arg1: i32) -> (i32, i32) {
    %c0_i32 = arith.constant 0 : i32
    %c0_i32_0 = arith.constant 0 : i32
    return %arg1, %c0_i32 : i32, i32
  }
  func.func @transform_4(%arg0: i32, %arg1: i32) -> (i32, i32) {
    %c0_i32 = arith.constant 0 : i32
    %c0_i32_0 = arith.constant 0 : i32
    %c0_i32_1 = arith.constant 0 : i32
    return %c0_i32, %c0_i32_0 : i32, i32
  }
  func.func @transform_5(%arg0: i32, %arg1: i32) -> (i32, i32) {
    %c0_i32 = arith.constant 0 : i32
    %c0_i32_0 = arith.constant 0 : i32
    return %arg0, %c0_i32 : i32, i32
  }
}

module attributes {stable_mosaic.version = 11 : i64} {
  func.func @_mlp_kernel(%arg0: i32, %arg1: i32, %arg2: memref<256x128xf32, #tpu.memory_space<vmem>>, %arg3: memref<128x512xf32, #tpu.memory_space<vmem>>, %arg4: memref<1x512xf32, #tpu.memory_space<vmem>>, %arg5: memref<512x128xf32, #tpu.memory_space<vmem>>, %arg6: memref<1x128xf32, #tpu.memory_space<vmem>>, %arg7: memref<256x128xf32, #tpu.memory_space<vmem>>, %arg8: memref<256x128xf32, #tpu.memory_space<vmem>>) attributes {dimension_semantics = [#tpu.dimension_semantics<parallel>, #tpu.dimension_semantics<arbitrary>], iteration_bounds = array<i64: 2, 1>, scalar_prefetch = 0 : i64, scratch_operands = 1 : i64, tpu.core_type = #tpu.core_type<tc>, window_params = [{transform_indices = @transform_0, window_bounds = array<i64: 256, 128>}, {transform_indices = @transform_1, window_bounds = array<i64: 128, 512>}, {transform_indices = @transform_2, window_bounds = array<i64: 1, 512>}, {transform_indices = @transform_3, window_bounds = array<i64: 512, 128>}, {pipeline_mode = #tpu.pipeline_mode<synchronous>, transform_indices = @transform_4, window_bounds = array<i64: 1, 128>}, {transform_indices = @transform_5, window_bounds = array<i64: 256, 128>}]} {
    %c0_i32 = arith.constant 0 : i32
    %0 = arith.cmpi eq, %arg1, %c0_i32 : i32
    %1 = arith.extui %0 : i1 to i32
    %c0_i32_0 = arith.constant 0 : i32
    %2 = arith.cmpi ne, %1, %c0_i32_0 : i32
    scf.if %2 {
      %cst_18 = arith.constant 0.000000e+00 : f32
      %25 = vector.broadcast %cst_18 : f32 to vector<256x128xf32>
      %c0_19 = arith.constant 0 : index
      %c0_20 = arith.constant 0 : index
      %26 = vector.load %arg8[%c0_19, %c0_20] : memref<256x128xf32, #tpu.memory_space<vmem>>, vector<256x128xf32>
      tpu.vector_store %arg8[%c0_19, %c0_20], %25 {strides = array<i32>} : memref<256x128xf32, #tpu.memory_space<vmem>>, vector<256x128xf32>,
    } else {
    }
    %c0 = arith.constant 0 : index
    %c0_1 = arith.constant 0 : index
    %3 = vector.load %arg2[%c0, %c0_1] : memref<256x128xf32, #tpu.memory_space<vmem>>, vector<256x128xf32>
    %c0_2 = arith.constant 0 : index
    %c0_3 = arith.constant 0 : index
    %4 = vector.load %arg3[%c0_2, %c0_3] : memref<128x512xf32, #tpu.memory_space<vmem>>, vector<128x512xf32>
    %cst = arith.constant dense<0.000000e+00> : vector<256x512xf32>
    %5 = tpu.matmul %3, %4, %cst {dimension_numbers = #tpu.dot_dimension_numbers<[1], [0], [0], [1], [0, 0, 1, 1], [], []>} : vector<256x128xf32>, vector<128x512xf32>, vector<256x512xf32> -> vector<256x512xf32>
    %c0_4 = arith.constant 0 : index
    %c0_5 = arith.constant 0 : index
    %6 = vector.load %arg4[%c0_4, %c0_5] : memref<1x512xf32, #tpu.memory_space<vmem>>, vector<1x512xf32>
    %7 = vector.broadcast %6 : vector<1x512xf32> to vector<256x512xf32>
    %8 = arith.addf %5, %7 : vector<256x512xf32>
    %cst_6 = arith.constant 5.000000e-01 : f32
    %9 = vector.broadcast %cst_6 : f32 to vector<256x512xf32>
    %10 = arith.mulf %9, %8 : vector<256x512xf32>
    %cst_7 = arith.constant 0.707106769 : f32
    %11 = vector.broadcast %cst_7 : f32 to vector<256x512xf32>
    %12 = arith.mulf %8, %11 : vector<256x512xf32>
    %13 = math.erf %12 : vector<256x512xf32>
    %cst_8 = arith.constant 1.000000e+00 : f32
    %14 = vector.broadcast %cst_8 : f32 to vector<256x512xf32>
    %15 = arith.addf %14, %13 : vector<256x512xf32>
    %16 = arith.mulf %10, %15 : vector<256x512xf32>
    %c0_9 = arith.constant 0 : index
    %c0_10 = arith.constant 0 : index
    %17 = vector.load %arg8[%c0_9, %c0_10] : memref<256x128xf32, #tpu.memory_space<vmem>>, vector<256x128xf32>
    %c0_11 = arith.constant 0 : index
    %c0_12 = arith.constant 0 : index
    %18 = vector.load %arg5[%c0_11, %c0_12] : memref<512x128xf32, #tpu.memory_space<vmem>>, vector<512x128xf32>
    %cst_13 = arith.constant dense<0.000000e+00> : vector<256x128xf32>
    %19 = tpu.matmul %16, %18, %cst_13 {dimension_numbers = #tpu.dot_dimension_numbers<[1], [0], [0], [1], [0, 0, 1, 1], [], []>} : vector<256x512xf32>, vector<512x128xf32>, vector<256x128xf32> -> vector<256x128xf32>
    %20 = arith.addf %17, %19 : vector<256x128xf32>
    %c0_14 = arith.constant 0 : index
    %c0_15 = arith.constant 0 : index
    %21 = vector.load %arg8[%c0_14, %c0_15] : memref<256x128xf32, #tpu.memory_space<vmem>>, vector<256x128xf32>
    tpu.vector_store %arg8[%c0_14, %c0_15], %20 {strides = array<i32>} : memref<256x128xf32, #tpu.memory_space<vmem>>, vector<256x128xf32>,
    %c0_i32_16 = arith.constant 0 : i32
    %22 = arith.cmpi eq, %arg1, %c0_i32_16 : i32
    %23 = arith.extui %22 : i1 to i32
    %c0_i32_17 = arith.constant 0 : i32
    %24 = arith.cmpi ne, %23, %c0_i32_17 : i32
    scf.if %24 {
      %c0_18 = arith.constant 0 : index
      %c0_19 = arith.constant 0 : index
      %25 = vector.load %arg8[%c0_18, %c0_19] : memref<256x128xf32, #tpu.memory_space<vmem>>, vector<256x128xf32>
      %c0_20 = arith.constant 0 : index
      %c0_21 = arith.constant 0 : index
      %26 = vector.load %arg6[%c0_20, %c0_21] : memref<1x128xf32, #tpu.memory_space<vmem>>, vector<1x128xf32>
      %27 = vector.broadcast %26 : vector<1x128xf32> to vector<256x128xf32>
      %28 = arith.addf %25, %27 : vector<256x128xf32>
      %c0_22 = arith.constant 0 : index
      %c0_23 = arith.constant 0 : index
      %29 = vector.load %arg7[%c0_22, %c0_23] : memref<256x128xf32, #tpu.memory_space<vmem>>, vector<256x128xf32>
      tpu.vector_store %arg7[%c0_22, %c0_23], %28 {strides = array<i32>} : memref<256x128xf32, #tpu.memory_space<vmem>>, vector<256x128xf32>,
    } else {
    }
    return
  }
  func.func @transform_0(%arg0: i32, %arg1: i32) -> (i32, i32) {
    %c0_i32 = arith.constant 0 : i32
    %c0_i32_0 = arith.constant 0 : i32
    return %arg0, %c0_i32 : i32, i32
  }
  func.func @transform_1(%arg0: i32, %arg1: i32) -> (i32, i32) {
    %c0_i32 = arith.constant 0 : i32
    %c0_i32_0 = arith.constant 0 : i32
    return %c0_i32, %arg1 : i32, i32
  }
  func.func @transform_2(%arg0: i32, %arg1: i32) -> (i32, i32) {
    %c0_i32 = arith.constant 0 : i32
    %c0_i32_0 = arith.constant 0 : i32
    return %c0_i32, %arg1 : i32, i32
  }
  func.func @transform_3(%arg0: i32, %arg1: i32) -> (i32, i32) {
    %c0_i32 = arith.constant 0 : i32
    %c0_i32_0 = arith.constant 0 : i32
    return %arg1, %c0_i32 : i32, i32
  }
  func.func @transform_4(%arg0: i32, %arg1: i32) -> (i32, i32) {
    %c0_i32 = arith.constant 0 : i32
    %c0_i32_0 = arith.constant 0 : i32
    %c0_i32_1 = arith.constant 0 : i32
    return %c0_i32, %c0_i32_0 : i32, i32
  }
  func.func @transform_5(%arg0: i32, %arg1: i32) -> (i32, i32) {
    %c0_i32 = arith.constant 0 : i32
    %c0_i32_0 = arith.constant 0 : i32
    return %arg0, %c0_i32 : i32, i32
  }
}

</mosaic_0001>

<llo_original>
// kernel: mlp_pallas.1
$region0: #{mlp_pallas.1}
  #allocation0 [shape = 'u32[]', space=smem, size = 0x4, offset = 0x4, fixed_abs, tag = 'smem constant byte address 0x4 - core index']
  #allocation1 [shape = 'u32[144,128]{1,0:T(1,128)}', space=vmem, size = 0x12000, scoped, tag = 'internal scratch']
  #allocation2 [shape = 'f32[256,128]{1,0:T(8,128)}', space=vmem, size = 0x20000, scoped, tag = 'scratch operand']
  %s0 = inlined_call_operand.vmem [shape: f32[394,128], index: 0, kind: input, shape index: {}]
  %s1 = inlined_call_operand.vmem [shape: f32[128,512], index: 1, kind: input, shape index: {}]
  %s2 = inlined_call_operand.vmem [shape: f32[1,512], index: 2, kind: input, shape index: {}]
  %s3 = inlined_call_operand.vmem [shape: f32[512,128], index: 3, kind: input, shape index: {}]
  %s4 = inlined_call_operand.vmem [shape: f32[1,128], index: 4, kind: input, shape index: {}]
  %s5 = inlined_call_operand.vmem [shape: f32[394,128], index: 5, kind: output, shape index: {}]
  %s6 = sld [smem:[#allocation0]]
  $region109: #{mlp_pallas.1} parent=0
    _
  %s8 = ssub.s32 1, %s6
  %s9 = scalar_select 0, %s8, %s6
  $region1: #{mlp_pallas.1} parent=0
    #allocation3 [shape = 'u8[262144]{0}', space=vmem, size = 0x40000, scoped, tag = 'output window, operand 0']
    loop: start=0, step=1, limit=4
    $region2: #{mlp_pallas.1} parent=1 // loop_pre_header
      _
    $region3: #{mlp_pallas.1} parent=1 // loop_header
      %s11 = sphi 0, %s15
      %p12 = scmp.ge.s32.totalorder %s11, 4
      %s18 = sphi 0, %s30
      %s19 = sphi 0, %s26
      %s20 = sphi 0, %s18
      %s21 = sphi 0, %s19
      %s22 = sphi 0, %s20
      %s23 = sphi 0, %s21
      %s33 = sphi 0, %s35
      %s36 = sphi 0, %s33
      %s37 = sphi 0, %s36
      %s53 = sphi 0, %s37
      %s59 = sphi 0, %s61
      %s62 = sphi 0, %s59
      %s63 = sphi 0, %s62
      %s79 = sphi 0, %s63
      %s85 = sphi 0, %s87
      %s88 = sphi 0, %s85
      %s89 = sphi 0, %s88
      %s105 = sphi 0, %s89
      %s111 = sphi 0, %s113
      %s114 = sphi 0, %s111
      %s115 = sphi 0, %s114
      %s131 = sphi 0, %s115
      %s135 = sphi 0, %s135
      %s137 = sphi 0, %s135
      %s138 = sphi 0, %s137
      %s152 = sphi 0, %s138
      %s158 = sphi 0, %s160
      %s161 = sphi 0, %s158
      %s162 = sphi 0, %s161
      %s178 = sphi 0, %s162
    $region4: #{mlp_pallas.1} parent=1 // loop_header_branch
      %14 = sbr.rel (%p12) target = $region8
    $region5: #{mlp_pallas.1} parent=1 // loop_body
      %s16 = ssub.s32 %s11, 1
      %s17 = ssub.s32 %s11, 2
      %s24 = sadd.s32 1, %s19
      %p25 = scmp.ge.s32.totalorder %s24, 1
      %s26 = scalar_select %p25, 0, %s24
      %s27 = sadd.s32 1, %s18
      %s28 = scalar_select %p25, %s27, %s18
      %p29 = scmp.ge.s32.totalorder %s28, 2
      %s30 = scalar_select %p29, 0, %s28
      %s31 = ssub.s32 %s18, %s30
      %p32 = scmp.eq.s32.totalorder %s31, 0
      %s34 = sadd.s32 %s33, 1
      %s35 = scalar_select %p32, %s33, %s34
      %p38 = pneg %p32
      %p39 = scmp.eq.s32.totalorder %s11, 1
      %p40 = por %p38, %p39
      %p41 = scmp.ne.s32.totalorder %s33, %s36
      %p42 = scmp.eq.s32.totalorder %s11, 0
      %p43 = por %p41, %p42
      %p44 = scmp.ne.s32.totalorder %s33, %s36
      %p45 = scmp.eq.s32.totalorder %s16, 1
      %p46 = por %p44, %p45
      %p47 = scmp.ne.s32.totalorder %s36, %s37
      %p48 = scmp.eq.s32.totalorder %s16, 0
      %p49 = por %p47, %p48
      %p50 = scmp.ne.s32.totalorder %s36, %s37
      %p51 = scmp.eq.s32.totalorder %s17, 1
      %p52 = por %p50, %p51
      %p54 = scmp.ne.s32.totalorder %s37, %s53
      %p55 = scmp.eq.s32.totalorder %s17, 0
      %p56 = por %p54, %p55
      %s57 = ssub.s32 %s19, %s26
      %p58 = scmp.eq.s32.totalorder %s57, 0
      %s60 = sadd.s32 %s59, 1
      %s61 = scalar_select %p58, %s59, %s60
      %p64 = pneg %p58
      %p65 = scmp.eq.s32.totalorder %s11, 1
      %p66 = por %p64, %p65
      %p67 = scmp.ne.s32.totalorder %s59, %s62
      %p68 = scmp.eq.s32.totalorder %s11, 0
      %p69 = por %p67, %p68
      %p70 = scmp.ne.s32.totalorder %s59, %s62
      %p71 = scmp.eq.s32.totalorder %s16, 1
      %p72 = por %p70, %p71
      %p73 = scmp.ne.s32.totalorder %s62, %s63
      %p74 = scmp.eq.s32.totalorder %s16, 0
      %p75 = por %p73, %p74
      %p76 = scmp.ne.s32.totalorder %s62, %s63
      %p77 = scmp.eq.s32.totalorder %s17, 1
      %p78 = por %p76, %p77
      %p80 = scmp.ne.s32.totalorder %s63, %s79
      %p81 = scmp.eq.s32.totalorder %s17, 0
      %p82 = por %p80, %p81
      %s83 = ssub.s32 %s19, %s26
      %p84 = scmp.eq.s32.totalorder %s83, 0
      %s86 = sadd.s32 %s85, 1
      %s87 = scalar_select %p84, %s85, %s86
      %p90 = pneg %p84
      %p91 = scmp.eq.s32.totalorder %s11, 1
      %p92 = por %p90, %p91
      %p93 = scmp.ne.s32.totalorder %s85, %s88
      %p94 = scmp.eq.s32.totalorder %s11, 0
      %p95 = por %p93, %p94
      %p96 = scmp.ne.s32.totalorder %s85, %s88
      %p97 = scmp.eq.s32.totalorder %s16, 1
      %p98 = por %p96, %p97
      %p99 = scmp.ne.s32.totalorder %s88, %s89
      %p100 = scmp.eq.s32.totalorder %s16, 0
      %p101 = por %p99, %p100
      %p102 = scmp.ne.s32.totalorder %s88, %s89
      %p103 = scmp.eq.s32.totalorder %s17, 1
      %p104 = por %p102, %p103
      %p106 = scmp.ne.s32.totalorder %s89, %s105
      %p107 = scmp.eq.s32.totalorder %s17, 0
      %p108 = por %p106, %p107
      %s109 = ssub.s32 %s19, %s26
      %p110 = scmp.eq.s32.totalorder %s109, 0
      %s112 = sadd.s32 %s111, 1
      %s113 = scalar_select %p110, %s111, %s112
      %p116 = pneg %p110
      %p117 = scmp.eq.s32.totalorder %s11, 1
      %p118 = por %p116, %p117
      %p119 = scmp.ne.s32.totalorder %s111, %s114
      %p120 = scmp.eq.s32.totalorder %s11, 0
      %p121 = por %p119, %p120
      %p122 = scmp.ne.s32.totalorder %s111, %s114
      %p123 = scmp.eq.s32.totalorder %s16, 1
      %p124 = por %p122, %p123
      %p125 = scmp.ne.s32.totalorder %s114, %s115
      %p126 = scmp.eq.s32.totalorder %s16, 0
      %p127 = por %p125, %p126
      %p128 = scmp.ne.s32.totalorder %s114, %s115
      %p129 = scmp.eq.s32.totalorder %s17, 1
      %p130 = por %p128, %p129
      %p132 = scmp.ne.s32.totalorder %s115, %s131
      %p133 = scmp.eq.s32.totalorder %s17, 0
      %p134 = por %p132, %p133
      %s136 = sadd.s32 %s135, 1
      %p139 = scmp.eq.s32.totalorder %s11, 1
      %p140 = scmp.ne.s32.totalorder %s135, %s137
      %p141 = scmp.eq.s32.totalorder %s11, 0
      %p142 = por %p140, %p141
      %p143 = scmp.ne.s32.totalorder %s135, %s137
      %p144 = scmp.eq.s32.totalorder %s16, 1
      %p145 = por %p143, %p144
      %p146 = scmp.ne.s32.totalorder %s137, %s138
      %p147 = scmp.eq.s32.totalorder %s16, 0
      %p148 = por %p146, %p147
      %p149 = scmp.ne.s32.totalorder %s137, %s138
      %p150 = scmp.eq.s32.totalorder %s17, 1
      %p151 = por %p149, %p150
      %p153 = scmp.ne.s32.totalorder %s138, %s152
      %p154 = scmp.eq.s32.totalorder %s17, 0
      %p155 = por %p153, %p154
      %s156 = ssub.s32 %s18, %s30
      %p157 = scmp.eq.s32.totalorder %s156, 0
      %s159 = sadd.s32 %s158, 1
      %s160 = scalar_select %p157, %s158, %s159
      %p163 = pneg %p157
      %p164 = scmp.eq.s32.totalorder %s11, 1
      %p165 = por %p163, %p164
      %p166 = scmp.ne.s32.totalorder %s158, %s161
      %p167 = scmp.eq.s32.totalorder %s11, 0
      %p168 = por %p166, %p167
      %p169 = scmp.ne.s32.totalorder %s158, %s161
      %p170 = scmp.eq.s32.totalorder %s16, 1
      %p171 = por %p169, %p170
      %p172 = scmp.ne.s32.totalorder %s161, %s162
      %p173 = scmp.eq.s32.totalorder %s16, 0
      %p174 = por %p172, %p173
      %p175 = scmp.ne.s32.totalorder %s161, %s162
      %p176 = scmp.eq.s32.totalorder %s17, 1
      %p177 = por %p175, %p176
      %p179 = scmp.ne.s32.totalorder %s162, %s178
      %p180 = scmp.eq.s32.totalorder %s17, 0
      %p181 = por %p179, %p180
      %p182 = scmp.le.s32.totalorder 1, %s11
      %p183 = scmp.lt.s32.totalorder %s11, 3
      %p184 = pnand %p182, %p183
      %p185 = pneg %p184
      // Predicated region
      $region9: #{mlp_pallas.1} parent=5 // pred_check
        _
      $region10: #{mlp_pallas.1} parent=5 // pred_check_branch
        %187 = sbr.rel (%p184) target = $region12
      $region11: #{mlp_pallas.1} parent=5 // pred_region
        %s188 = ssub.s32 %s11, 1
        // Predicated region
        $region13: #{mlp_pallas.1} parent=11 // pred_check
          %p189 = pneg %p75
        $region14: #{mlp_pallas.1} parent=11 // pred_check_branch
          %191 = sbr.rel (%p189) target = $region16
        $region15: #{mlp_pallas.1} parent=11 // pred_region
          %s192 = smul.u32 4, %s21
          %p193 = scmp.lt.s32.totalorder %s192, 3
          %s194 = scalar_select %p193, %s192, 3
          %s195 = smul.addr %s194, 8
          %s196 = scalar_lea.vmem %s1, %s195
          %s197 = smul.u32 4, %s21
        $region16: #{mlp_pallas.1} parent=11 // pred_fallthru
          _
        // Predicated region
        $region17: #{mlp_pallas.1} parent=11 // pred_check
          %p198 = pneg %p101
        $region18: #{mlp_pallas.1} parent=11 // pred_check_branch
          %200 = sbr.rel (%p198) target = $region20
        $region19: #{mlp_pallas.1} parent=11 // pred_region
          %s201 = smul.u32 4, %s21
          %p202 = scmp.lt.s32.totalorder %s201, 3
          %s203 = scalar_select %p202, %s201, 3
          %s204 = scalar_lea.vmem %s2, %s203
          %s205 = smul.u32 4, %s21
        $region20: #{mlp_pallas.1} parent=11 // pred_fallthru
          _
        // Predicated region
        $region21: #{mlp_pallas.1} parent=11 // pred_check
          %p206 = pneg %p127
        $region22: #{mlp_pallas.1} parent=11 // pred_check_branch
          %208 = sbr.rel (%p206) target = $region24
        $region23: #{mlp_pallas.1} parent=11 // pred_region
          %s209 = smul.u32 64, %s21
          %p210 = scmp.lt.s32.totalorder %s209, 63
          %s211 = scalar_select %p210, %s209, 63
          %s212 = smul.addr %s211, 8
          %s213 = scalar_lea.vmem %s3, %s212
          %s214 = smul.u32 64, %s21
        $region24: #{mlp_pallas.1} parent=11 // pred_fallthru
          _
        // Predicated region
        $region25: #{mlp_pallas.1} parent=11 // pred_check
          %p215 = pneg %p148
        $region26: #{mlp_pallas.1} parent=11 // pred_check_branch
          %217 = sbr.rel (%p215) target = $region28
        $region27: #{mlp_pallas.1} parent=11 // pred_region
          _
        $region28: #{mlp_pallas.1} parent=11 // pred_fallthru
          _
      $region12: #{mlp_pallas.1} parent=5 // pred_fallthru
        _
      %p218 = scmp.lt.s32.totalorder %s11, 2
      // Predicated region
      $region29: #{mlp_pallas.1} parent=5 // pred_check
        %p219 = pneg %p218
      $region30: #{mlp_pallas.1} parent=5 // pred_check_branch
        %221 = sbr.rel (%p219) target = $region32
      $region31: #{mlp_pallas.1} parent=5 // pred_region
        // Predicated region
        $region33: #{mlp_pallas.1} parent=31 // pred_check
          %p222 = pneg %p43
        $region34: #{mlp_pallas.1} parent=31 // pred_check_branch
          %224 = sbr.rel (%p222) target = $region36
        $region35: #{mlp_pallas.1} parent=31 // pred_region
          %s225 = smul.u32 32, %s18
          %s226 = ssub.s32 50, %s225
          %p227 = scmp.lt.s32.totalorder %s226, 32
          %s228 = scalar_select %p227, %s226, 32
          %s229 = smul.u32 128, %s228
          %p230 = scmp.lt.s32.totalorder %s225, 49
          %s231 = scalar_select %p230, %s225, 49
          %s232 = smul.addr %s231, 8
          %s233 = scalar_lea.vmem %s0, %s232
          %s234 = smul.u32 32, %s18
          %s235 = ssub.s32 50, %s234
          %p236 = scmp.lt.s32.totalorder %s235, 32
          %s237 = scalar_select %p236, %s235, 32
          %s238 = smul.u32 128, %s237
        $region36: #{mlp_pallas.1} parent=31 // pred_fallthru
          _
      $region32: #{mlp_pallas.1} parent=5 // pred_fallthru
        _
      %p239 = scmp.le.s32.totalorder 1, %s11
      %p240 = scmp.lt.s32.totalorder %s11, 3
      %p241 = pnand %p239, %p240
      %p242 = pneg %p241
      // Predicated region
      $region37: #{mlp_pallas.1} parent=5 // pred_check
        _
      $region38: #{mlp_pallas.1} parent=5 // pred_check_branch
        %244 = sbr.rel (%p241) target = $region40
      $region39: #{mlp_pallas.1} parent=5 // pred_region
        %s245 = ssub.s32 %s11, 1
        %s246 = smul.u32 32, %s20
        %s247 = ssub.s32 50, %s246
        %p248 = scmp.lt.s32.totalorder %s247, 32
        %s249 = scalar_select %p248, %s247, 32
        %s250 = smul.u32 128, %s249
        %p251 = scmp.lt.s32.totalorder %s246, 49
        %s252 = scalar_select %p251, %s246, 49
        %s253 = smul.addr %s252, 8
        %s254 = scalar_lea.vmem %s0, %s253
        %p255 = pneg %p49
        %p256 = pneg %p46
        %s257 = smul.u32 4, %s21
        %p258 = scmp.lt.s32.totalorder %s257, 3
        %s259 = scalar_select %p258, %s257, 3
        %s260 = smul.addr %s259, 8
        %s261 = scalar_lea.vmem %s1, %s260
        %p262 = pneg %p75
        %p263 = pneg %p72
        %s264 = smul.u32 4, %s21
        %p265 = scmp.lt.s32.totalorder %s264, 3
        %s266 = scalar_select %p265, %s264, 3
        %s267 = scalar_lea.vmem %s2, %s266
        %p268 = pneg %p101
        %p269 = pneg %p98
        %s270 = smul.u32 64, %s21
        %p271 = scmp.lt.s32.totalorder %s270, 63
        %s272 = scalar_select %p271, %s270, 63
        %s273 = smul.addr %s272, 8
        %s274 = scalar_lea.vmem %s3, %s273
        %p275 = pneg %p127
        %p276 = pneg %p124
        %p277 = pneg %p148
        %p278 = pneg %p145
        %p279 = pneg %p174
        %p280 = pneg %p171
        %s281 = sand.u32 %s161, 1
        %s282 = sand.u32 %s161, 1
        %s283 = smul.addr %s282, 256
        %s284 = scalar_lea.vmem [#allocation3], %s283
        %s285 = smul.u32 32, %s20
        %s286 = ssub.s32 50, %s285
        %p287 = scmp.lt.s32.totalorder %s286, 32
        %s288 = scalar_select %p287, %s286, 32
        %s289 = smul.u32 128, %s288
        %p290 = scmp.lt.s32.totalorder %s285, 49
        %s291 = scalar_select %p290, %s285, 49
        %s292 = smul.addr %s291, 8
        %s293 = scalar_lea.vmem %s0, %s292
        %s294 = smul.u32 32, %s20
        %s295 = ssub.s32 50, %s294
        %p296 = scmp.lt.s32.totalorder %s295, 32
        %s297 = scalar_select %p296, %s295, 32
        %s298 = smul.u32 128, %s297
        %s299 = smul.u32 4, %s21
        %p300 = scmp.lt.s32.totalorder %s299, 3
        %s301 = scalar_select %p300, %s299, 3
        %s302 = smul.addr %s301, 8
        %s303 = scalar_lea.vmem %s1, %s302
        %s304 = smul.u32 4, %s21
        %s305 = smul.u32 4, %s21
        %p306 = scmp.lt.s32.totalorder %s305, 3
        %s307 = scalar_select %p306, %s305, 3
        %s308 = scalar_lea.vmem %s2, %s307
        %s309 = smul.u32 4, %s21
        %s310 = smul.u32 64, %s21
        %p311 = scmp.lt.s32.totalorder %s310, 63
        %s312 = scalar_select %p311, %s310, 63
        %s313 = smul.addr %s312, 8
        %s314 = scalar_lea.vmem %s3, %s313
        %s315 = smul.u32 64, %s21
        %s316 = smul.u32 32, %s20
        %s317 = ssub.s32 50, %s316
        %p318 = scmp.lt.s32.totalorder %s317, 32
        %s319 = scalar_select %p318, %s317, 32
        %s320 = smul.u32 128, %s319
        %p321 = scmp.eq.s32.totalorder %s21, 0
        // Predicated region
        $region41: #{mlp_pallas.1} parent=39 // pred_check
          %p322 = pneg %p321
        $region42: #{mlp_pallas.1} parent=39 // pred_check_branch
          %324 = sbr.rel (%p322) target = $region44
        $region43: #{mlp_pallas.1} parent=39 // pred_region
          %325 = vst [vmem:[#allocation2] sm:$0xff] 0.0
          %326 = vst [vmem:[#allocation2 + $0x8] sm:$0xff] 0.0
          %327 = vst [vmem:[#allocation2 + $0x10] sm:$0xff] 0.0
          %328 = vst [vmem:[#allocation2 + $0x18] sm:$0xff] 0.0
          %329 = vst [vmem:[#allocation2 + $0x20] sm:$0xff] 0.0
          %330 = vst [vmem:[#allocation2 + $0x28] sm:$0xff] 0.0
          %331 = vst [vmem:[#allocation2 + $0x30] sm:$0xff] 0.0
          %332 = vst [vmem:[#allocation2 + $0x38] sm:$0xff] 0.0
          %333 = vst [vmem:[#allocation2 + $0x40] sm:$0xff] 0.0
          %334 = vst [vmem:[#allocation2 + $0x48] sm:$0xff] 0.0
          %335 = vst [vmem:[#allocation2 + $0x50] sm:$0xff] 0.0
          %336 = vst [vmem:[#allocation2 + $0x58] sm:$0xff] 0.0
          %337 = vst [vmem:[#allocation2 + $0x60] sm:$0xff] 0.0
          %338 = vst [vmem:[#allocation2 + $0x68] sm:$0xff] 0.0
          %339 = vst [vmem:[#allocation2 + $0x70] sm:$0xff] 0.0
          %340 = vst [vmem:[#allocation2 + $0x78] sm:$0xff] 0.0
          %341 = vst [vmem:[#allocation2 + $0x80] sm:$0xff] 0.0
          %342 = vst [vmem:[#allocation2 + $0x88] sm:$0xff] 0.0
          %343 = vst [vmem:[#allocation2 + $0x90] sm:$0xff] 0.0
          %344 = vst [vmem:[#allocation2 + $0x98] sm:$0xff] 0.0
          %345 = vst [vmem:[#allocation2 + $0xa0] sm:$0xff] 0.0
          %346 = vst [vmem:[#allocation2 + $0xa8] sm:$0xff] 0.0
          %347 = vst [vmem:[#allocation2 + $0xb0] sm:$0xff] 0.0
          %348 = vst [vmem:[#allocation2 + $0xb8] sm:$0xff] 0.0
          %349 = vst [vmem:[#allocation2 + $0xc0] sm:$0xff] 0.0
          %350 = vst [vmem:[#allocation2 + $0xc8] sm:$0xff] 0.0
          %351 = vst [vmem:[#allocation2 + $0xd0] sm:$0xff] 0.0
          %352 = vst [vmem:[#allocation2 + $0xd8] sm:$0xff] 0.0
          %353 = vst [vmem:[#allocation2 + $0xe0] sm:$0xff] 0.0
          %354 = vst [vmem:[#allocation2 + $0xe8] sm:$0xff] 0.0
          %355 = vst [vmem:[#allocation2 + $0xf0] sm:$0xff] 0.0
          %356 = vst [vmem:[#allocation2 + $0xf8] sm:$0xff] 0.0
        $region44: #{mlp_pallas.1} parent=39 // pred_fallthru
          _
        %v357 = vld [vmem:[%s293] sm:$0xff]
        %v358 = vld [vmem:[%s293 + $0x8] sm:$0xff]
        %v359 = vld [vmem:[%s293 + $0x10] sm:$0xff]
        %v360 = vld [vmem:[%s293 + $0x18] sm:$0xff]
        %v361 = vld [vmem:[%s293 + $0x20] sm:$0xff]
        %v362 = vld [vmem:[%s293 + $0x28] sm:$0xff]
        %v363 = vld [vmem:[%s293 + $0x30] sm:$0xff]
        %v364 = vld [vmem:[%s293 + $0x38] sm:$0xff]
        %v365 = vld [vmem:[%s293 + $0x40] sm:$0xff]
        %v366 = vld [vmem:[%s293 + $0x48] sm:$0xff]
        %v367 = vld [vmem:[%s293 + $0x50] sm:$0xff]
        %v368 = vld [vmem:[%s293 + $0x58] sm:$0xff]
        %v369 = vld [vmem:[%s293 + $0x60] sm:$0xff]
        %v370 = vld [vmem:[%s293 + $0x68] sm:$0xff]
        %v371 = vld [vmem:[%s293 + $0x70] sm:$0xff]
        %v372 = vld [vmem:[%s293 + $0x78] sm:$0xff]
        %v373 = vld [vmem:[%s293 + $0x80] sm:$0xff]
        %v374 = vld [vmem:[%s293 + $0x88] sm:$0xff]
        %v375 = vld [vmem:[%s293 + $0x90] sm:$0xff]
        %v376 = vld [vmem:[%s293 + $0x98] sm:$0xff]
        %v377 = vld [vmem:[%s293 + $0xa0] sm:$0xff]
        %v378 = vld [vmem:[%s293 + $0xa8] sm:$0xff]
        %v379 = vld [vmem:[%s293 + $0xb0] sm:$0xff]
        %v380 = vld [vmem:[%s293 + $0xb8] sm:$0xff]
        %v381 = vld [vmem:[%s293 + $0xc0] sm:$0xff]
        %v382 = vld [vmem:[%s293 + $0xc8] sm:$0xff]
        %v383 = vld [vmem:[%s293 + $0xd0] sm:$0xff]
        %v384 = vld [vmem:[%s293 + $0xd8] sm:$0xff]
        %v385 = vld [vmem:[%s293 + $0xe0] sm:$0xff]
        %v386 = vld [vmem:[%s293 + $0xe8] sm:$0xff]
        %v387 = vld [vmem:[%s293 + $0xf0] sm:$0xff]
        %v388 = vld [vmem:[%s293 + $0xf8] sm:$0xff]
        %v389 = vld [vmem:[%s303] sm:$0xff]
        %v390 = vld [vmem:[%s303 + $0x8] sm:$0xff]
        %v391 = vld [vmem:[%s303 + $0x10] sm:$0xff]
        %v392 = vld [vmem:[%s303 + $0x18] sm:$0xff]
        %v393 = vld [vmem:[%s303 + $0x20] sm:$0xff]
        %v394 = vld [vmem:[%s303 + $0x28] sm:$0xff]
        %v395 = vld [vmem:[%s303 + $0x30] sm:$0xff]
        %v396 = vld [vmem:[%s303 + $0x38] sm:$0xff]
        %v397 = vld [vmem:[%s303 + $0x40] sm:$0xff]
        %v398 = vld [vmem:[%s303 + $0x48] sm:$0xff]
        %v399 = vld [vmem:[%s303 + $0x50] sm:$0xff]
        %v400 = vld [vmem:[%s303 + $0x58] sm:$0xff]
        %v401 = vld [vmem:[%s303 + $0x60] sm:$0xff]
        %v402 = vld [vmem:[%s303 + $0x68] sm:$0xff]
        %v403 = vld [vmem:[%s303 + $0x70] sm:$0xff]
        %v404 = vld [vmem:[%s303 + $0x78] sm:$0xff]
        %v405 = vld [vmem:[%s303 + $0x80] sm:$0xff]
        %v406 = vld [vmem:[%s303 + $0x88] sm:$0xff]
        %v407 = vld [vmem:[%s303 + $0x90] sm:$0xff]
        %v408 = vld [vmem:[%s303 + $0x98] sm:$0xff]
        %v409 = vld [vmem:[%s303 + $0xa0] sm:$0xff]
        %v410 = vld [vmem:[%s303 + $0xa8] sm:$0xff]
        %v411 = vld [vmem:[%s303 + $0xb0] sm:$0xff]
        %v412 = vld [vmem:[%s303 + $0xb8] sm:$0xff]
        %v413 = vld [vmem:[%s303 + $0xc0] sm:$0xff]
        %v414 = vld [vmem:[%s303 + $0xc8] sm:$0xff]
        %v415 = vld [vmem:[%s303 + $0xd0] sm:$0xff]
        %v416 = vld [vmem:[%s303 + $0xd8] sm:$0xff]
        %v417 = vld [vmem:[%s303 + $0xe0] sm:$0xff]
        %v418 = vld [vmem:[%s303 + $0xe8] sm:$0xff]
        %v419 = vld [vmem:[%s303 + $0xf0] sm:$0xff]
        %v420 = vld [vmem:[%s303 + $0xf8] sm:$0xff]
        %v421 = vld [vmem:[%s303 + $0x100] sm:$0xff]
        %v422 = vld [vmem:[%s303 + $0x108] sm:$0xff]
        %v423 = vld [vmem:[%s303 + $0x110] sm:$0xff]
        %v424 = vld [vmem:[%s303 + $0x118] sm:$0xff]
        %v425 = vld [vmem:[%s303 + $0x120] sm:$0xff]
        %v426 = vld [vmem:[%s303 + $0x128] sm:$0xff]
        %v427 = vld [vmem:[%s303 + $0x130] sm:$0xff]
        %v428 = vld [vmem:[%s303 + $0x138] sm:$0xff]
        %v429 = vld [vmem:[%s303 + $0x140] sm:$0xff]
        %v430 = vld [vmem:[%s303 + $0x148] sm:$0xff]
        %v431 = vld [vmem:[%s303 + $0x150] sm:$0xff]
        %v432 = vld [vmem:[%s303 + $0x158] sm:$0xff]
        %v433 = vld [vmem:[%s303 + $0x160] sm:$0xff]
        %v434 = vld [vmem:[%s303 + $0x168] sm:$0xff]
        %v435 = vld [vmem:[%s303 + $0x170] sm:$0xff]
        %v436 = vld [vmem:[%s303 + $0x178] sm:$0xff]
        %v437 = vld [vmem:[%s303 + $0x180] sm:$0xff]
        %v438 = vld [vmem:[%s303 + $0x188] sm:$0xff]
        %v439 = vld [vmem:[%s303 + $0x190] sm:$0xff]
        %v440 = vld [vmem:[%s303 + $0x198] sm:$0xff]
        %v441 = vld [vmem:[%s303 + $0x1a0] sm:$0xff]
        %v442 = vld [vmem:[%s303 + $0x1a8] sm:$0xff]
        %v443 = vld [vmem:[%s303 + $0x1b0] sm:$0xff]
        %v444 = vld [vmem:[%s303 + $0x1b8] sm:$0xff]
        %v445 = vld [vmem:[%s303 + $0x1c0] sm:$0xff]
        %v446 = vld [vmem:[%s303 + $0x1c8] sm:$0xff]
        %v447 = vld [vmem:[%s303 + $0x1d0] sm:$0xff]
        %v448 = vld [vmem:[%s303 + $0x1d8] sm:$0xff]
        %v449 = vld [vmem:[%s303 + $0x1e0] sm:$0xff]
        %v450 = vld [vmem:[%s303 + $0x1e8] sm:$0xff]
        %v451 = vld [vmem:[%s303 + $0x1f0] sm:$0xff]
        %v452 = vld [vmem:[%s303 + $0x1f8] sm:$0xff]
        %v453 = vld [vmem:[%s308] sm:$0xf]
        %v455 = vlaneseq
        %v456 = vshrl.u32 %v455, 7
        %v457 = vsub.s32 0, %v456
        %v458 = vrot.slane %v453, %v457
        %v459 = vlaneseq
        %v460 = vshrl.u32 %v459, 7
        %v461 = vsub.s32 1, %v460
        %v462 = vrot.slane %v453, %v461
        %v463 = vlaneseq
        %v464 = vshrl.u32 %v463, 7
        %v465 = vsub.s32 2, %v464
        %v466 = vrot.slane %v453, %v465
        %v467 = vlaneseq
        %v468 = vshrl.u32 %v467, 7
        %v469 = vsub.s32 3, %v468
        %v470 = vrot.slane %v453, %v469
        %475 = vmatprep.subr.mxu0 %v390
        %476 = vmatpush1.msra.mxu0 %v389
        %477 = vmatprep.subr.mxu0 %v394
        %478 = vmatpush1.msra.mxu0 %v393
        %479 = vmatprep.subr.mxu0 %v398
        %480 = vmatpush1.msra.mxu0 %v397
        %481 = vmatprep.subr.mxu0 %v402
        %482 = vmatpush1.msra.mxu0 %v401
        %483 = vmatprep.subr.mxu0 %v406
        %484 = vmatpush1.msra.mxu0 %v405
        %485 = vmatprep.subr.mxu0 %v410
        %486 = vmatpush1.msra.mxu0 %v409
        %487 = vmatprep.subr.mxu0 %v414
        %488 = vmatpush1.msra.mxu0 %v413
        %489 = vmatprep.subr.mxu0 %v418
        %490 = vmatpush1.msra.mxu0 %v417
        %491 = vmatprep.subr.mxu0 %v422
        %492 = vmatpush1.msra.mxu0 %v421
        %493 = vmatprep.subr.mxu0 %v426
        %494 = vmatpush1.msra.mxu0 %v425
        %495 = vmatprep.subr.mxu0 %v430
        %496 = vmatpush1.msra.mxu0 %v429
        %497 = vmatprep.subr.mxu0 %v434
        %498 = vmatpush1.msra.mxu0 %v433
        %499 = vmatprep.subr.mxu0 %v438
        %500 = vmatpush1.msra.mxu0 %v437
        %501 = vmatprep.subr.mxu0 %v442
        %502 = vmatpush1.msra.mxu0 %v441
        %503 = vmatprep.subr.mxu0 %v446
        %504 = vmatpush1.msra.mxu0 %v445
        %505 = vmatprep.subr.mxu0 %v450
        %506 = vmatpush1.msra.mxu0 %v449
        %507 = vmatprep.subr.mxu0 0.0
        %508 = vmatpush1.msra.mxu0 0.0
        %509 = vmatprep.subr.mxu0 0.0
        %510 = vmatpush1.msra.mxu0 0.0
        %511 = vmatprep.subr.mxu0 0.0
        %512 = vmatpush1.msra.mxu0 0.0
        %513 = vmatprep.subr.mxu0 0.0
        %514 = vmatpush1.msra.mxu0 0.0
        %515 = vmatprep.subr.mxu0 0.0
        %516 = vmatpush1.msra.mxu0 0.0
        %517 = vmatprep.subr.mxu0 0.0
        %518 = vmatpush1.msra.mxu0 0.0
        %519 = vmatprep.subr.mxu0 0.0
        %520 = vmatpush1.msra.mxu0 0.0
        %521 = vmatprep.subr.mxu0 0.0
        %522 = vmatpush1.msra.mxu0 0.0
        %523 = vmatprep.subr.mxu0 0.0
        %524 = vmatpush1.msra.mxu0 0.0
        %525 = vmatprep.subr.mxu0 0.0
        %526 = vmatpush1.msra.mxu0 0.0
        %527 = vmatprep.subr.mxu0 0.0
        %528 = vmatpush1.msra.mxu0 0.0
        %529 = vmatprep.subr.mxu0 0.0
        %530 = vmatpush1.msra.mxu0 0.0
        %531 = vmatprep.subr.mxu0 0.0
        %532 = vmatpush1.msra.mxu0 0.0
        %533 = vmatprep.subr.mxu0 0.0
        %534 = vmatpush1.msra.mxu0 0.0
        %535 = vmatprep.subr.mxu0 0.0
        %536 = vmatpush1.msra.mxu0 0.0
        %537 = vmatprep.subr.mxu0 0.0
        %538 = vmatpush1.msra.mxu0 0.0
        %539 = vmatprep.mubr.f32.mxu0 0.0
        %540 = vmatmul.mubr.f32.gmra.mrb[0].mxu0 %v357
        %v541 = vpop.f32.mrb[0].mxu0
        %v542 = vadd.f32 %v458, %v541
        %v543 = vpop.f32.mrb[0].mxu0
        %v544 = vadd.f32 %v462, %v543
        %545 = vmatprep.mubr.f32.mxu0 0.0
        %546 = vmatmul.mubr.f32.gmra.mrb[0].mxu0 %v358
        %v547 = vpop.f32.mrb[0].mxu0
        %v548 = vadd.f32 %v458, %v547
        %v549 = vpop.f32.mrb[0].mxu0
        %v550 = vadd.f32 %v462, %v549
        %551 = vmatprep.mubr.f32.mxu0 0.0
        %552 = vmatmul.mubr.f32.gmra.mrb[0].mxu0 %v359
        %v553 = vpop.f32.mrb[0].mxu0
        %v554 = vadd.f32 %v458, %v553
        %v555 = vpop.f32.mrb[0].mxu0
        %v556 = vadd.f32 %v462, %v555
        %557 = vmatprep.mubr.f32.mxu0 0.0
        %558 = vmatmul.mubr.f32.gmra.mrb[0].mxu0 %v360
        %v559 = vpop.f32.mrb[0].mxu0
        %v560 = vadd.f32 %v458, %v559
        %v561 = vpop.f32.mrb[0].mxu0
        %v562 = vadd.f32 %v462, %v561
        %563 = vmatprep.mubr.f32.mxu0 0.0
        %564 = vmatmul.mubr.f32.gmra.mrb[0].mxu0 %v361
        %v565 = vpop.f32.mrb[0].mxu0
        %v566 = vadd.f32 %v458, %v565
        %v567 = vpop.f32.mrb[0].mxu0
        %v568 = vadd.f32 %v462, %v567
        %569 = vmatprep.mubr.f32.mxu0 0.0
        %570 = vmatmul.mubr.f32.gmra.mrb[0].mxu0 %v362
        %v571 = vpop.f32.mrb[0].mxu0
        %v572 = vadd.f32 %v458, %v571
        %v573 = vpop.f32.mrb[0].mxu0
        %v574 = vadd.f32 %v462, %v573
        %575 = vmatprep.mubr.f32.mxu0 0.0
        %576 = vmatmul.mubr.f32.gmra.mrb[0].mxu0 %v363
        %v577 = vpop.f32.mrb[0].mxu0
        %v578 = vadd.f32 %v458, %v577
        %v579 = vpop.f32.mrb[0].mxu0
        %v580 = vadd.f32 %v462, %v579
        %581 = vmatprep.mubr.f32.mxu0 0.0
        %582 = vmatmul.mubr.f32.gmra.mrb[0].mxu0 %v364
        %v583 = vpop.f32.mrb[0].mxu0
        %v584 = vadd.f32 %v458, %v583
        %v585 = vpop.f32.mrb[0].mxu0
        %v586 = vadd.f32 %v462, %v585
        %587 = vmatprep.mubr.f32.mxu0 0.0
        %588 = vmatmul.mubr.f32.gmra.mrb[0].mxu0 %v365
        %v589 = vpop.f32.mrb[0].mxu0
        %v590 = vadd.f32 %v458, %v589
        %v591 = vpop.f32.mrb[0].mxu0
        %v592 = vadd.f32 %v462, %v591
        %593 = vmatprep.mubr.f32.mxu0 0.0
        %594 = vmatmul.mubr.f32.gmra.mrb[0].mxu0 %v366
        %v595 = vpop.f32.mrb[0].mxu0
        %v596 = vadd.f32 %v458, %v595
        %v597 = vpop.f32.mrb[0].mxu0
        %v598 = vadd.f32 %v462, %v597
        %599 = vmatprep.mubr.f32.mxu0 0.0
        %600 = vmatmul.mubr.f32.gmra.mrb[0].mxu0 %v367
        %v601 = vpop.f32.mrb[0].mxu0
        %v602 = vadd.f32 %v458, %v601
        %v603 = vpop.f32.mrb[0].mxu0
        %v604 = vadd.f32 %v462, %v603
        %605 = vmatprep.mubr.f32.mxu0 0.0
        %606 = vmatmul.mubr.f32.gmra.mrb[0].mxu0 %v368
        %v607 = vpop.f32.mrb[0].mxu0
        %v608 = vadd.f32 %v458, %v607
        %v609 = vpop.f32.mrb[0].mxu0
        %v610 = vadd.f32 %v462, %v609
        %611 = vmatprep.mubr.f32.mxu0 0.0
        %612 = vmatmul.mubr.f32.gmra.mrb[0].mxu0 %v369
        %v613 = vpop.f32.mrb[0].mxu0
        %v614 = vadd.f32 %v458, %v613
        %v615 = vpop.f32.mrb[0].mxu0
        %v616 = vadd.f32 %v462, %v615
        %617 = vmatprep.mubr.f32.mxu0 0.0
        %618 = vmatmul.mubr.f32.gmra.mrb[0].mxu0 %v370
        %v619 = vpop.f32.mrb[0].mxu0
        %v620 = vadd.f32 %v458, %v619
        %v621 = vpop.f32.mrb[0].mxu0
        %v622 = vadd.f32 %v462, %v621
        %623 = vmatprep.mubr.f32.mxu0 0.0
        %624 = vmatmul.mubr.f32.gmra.mrb[0].mxu0 %v371
        %v625 = vpop.f32.mrb[0].mxu0
        %v626 = vadd.f32 %v458, %v625
        %v627 = vpop.f32.mrb[0].mxu0
        %v628 = vadd.f32 %v462, %v627
        %629 = vmatprep.mubr.f32.mxu0 0.0
        %630 = vmatmul.mubr.f32.gmra.mrb[0].mxu0 %v372
        %v631 = vpop.f32.mrb[0].mxu0
        %v632 = vadd.f32 %v458, %v631
        %v633 = vpop.f32.mrb[0].mxu0
        %v634 = vadd.f32 %v462, %v633
        %635 = vmatprep.mubr.f32.mxu0 0.0
        %636 = vmatmul.mubr.f32.gmra.mrb[0].mxu0 %v373
        %v637 = vpop.f32.mrb[0].mxu0
        %v638 = vadd.f32 %v458, %v637
        %v639 = vpop.f32.mrb[0].mxu0
        %v640 = vadd.f32 %v462, %v639
        %641 = vmatprep.mubr.f32.mxu0 0.0
        %642 = vmatmul.mubr.f32.gmra.mrb[0].mxu0 %v374
        %v643 = vpop.f32.mrb[0].mxu0
        %v644 = vadd.f32 %v458, %v643
        %v645 = vpop.f32.mrb[0].mxu0
        %v646 = vadd.f32 %v462, %v645
        %647 = vmatprep.mubr.f32.mxu0 0.0
        %648 = vmatmul.mubr.f32.gmra.mrb[0].mxu0 %v375
        %v649 = vpop.f32.mrb[0].mxu0
        %v650 = vadd.f32 %v458, %v649
        %v651 = vpop.f32.mrb[0].mxu0
        %v652 = vadd.f32 %v462, %v651
        %653 = vmatprep.mubr.f32.mxu0 0.0
        %654 = vmatmul.mubr.f32.gmra.mrb[0].mxu0 %v376
        %v655 = vpop.f32.mrb[0].mxu0
        %v656 = vadd.f32 %v458, %v655
        %v657 = vpop.f32.mrb[0].mxu0
        %v658 = vadd.f32 %v462, %v657
        %659 = vmatprep.mubr.f32.mxu0 0.0
        %660 = vmatmul.mubr.f32.gmra.mrb[0].mxu0 %v377
        %v661 = vpop.f32.mrb[0].mxu0
        %v662 = vadd.f32 %v458, %v661
        %v663 = vpop.f32.mrb[0].mxu0
        %v664 = vadd.f32 %v462, %v663
        %665 = vmatprep.mubr.f32.mxu0 0.0
        %666 = vmatmul.mubr.f32.gmra.mrb[0].mxu0 %v378
        %v667 = vpop.f32.mrb[0].mxu0
        %v668 = vadd.f32 %v458, %v667
        %v669 = vpop.f32.mrb[0].mxu0
        %v670 = vadd.f32 %v462, %v669
        %671 = vmatprep.mubr.f32.mxu0 0.0
        %672 = vmatmul.mubr.f32.gmra.mrb[0].mxu0 %v379
        %v673 = vpop.f32.mrb[0].mxu0
        %v674 = vadd.f32 %v458, %v673
        %v675 = vpop.f32.mrb[0].mxu0
        %v676 = vadd.f32 %v462, %v675
        %677 = vmatprep.mubr.f32.mxu0 0.0
        %678 = vmatmul.mubr.f32.gmra.mrb[0].mxu0 %v380
        %v679 = vpop.f32.mrb[0].mxu0
        %v680 = vadd.f32 %v458, %v679
        %v681 = vpop.f32.mrb[0].mxu0
        %v682 = vadd.f32 %v462, %v681
        %683 = vmatprep.mubr.f32.mxu0 0.0
        %684 = vmatmul.mubr.f32.gmra.mrb[0].mxu0 %v381
        %v685 = vpop.f32.mrb[0].mxu0
        %v686 = vadd.f32 %v458, %v685
        %v687 = vpop.f32.mrb[0].mxu0
        %v688 = vadd.f32 %v462, %v687
        %689 = vmatprep.mubr.f32.mxu0 0.0
        %690 = vmatmul.mubr.f32.gmra.mrb[0].mxu0 %v382
        %v691 = vpop.f32.mrb[0].mxu0
        %v692 = vadd.f32 %v458, %v691
        %v693 = vpop.f32.mrb[0].mxu0
        %v694 = vadd.f32 %v462, %v693
        %695 = vmatprep.mubr.f32.mxu0 0.0
        %696 = vmatmul.mubr.f32.gmra.mrb[0].mxu0 %v383
        %v697 = vpop.f32.mrb[0].mxu0
        %v698 = vadd.f32 %v458, %v697
        %v699 = vpop.f32.mrb[0].mxu0
        %v700 = vadd.f32 %v462, %v699
        %701 = vmatprep.mubr.f32.mxu0 0.0
        %702 = vmatmul.mubr.f32.gmra.mrb[0].mxu0 %v384
        %v703 = vpop.f32.mrb[0].mxu0
        %v704 = vadd.f32 %v458, %v703
        %v705 = vpop.f32.mrb[0].mxu0
        %v706 = vadd.f32 %v462, %v705
        %707 = vmatprep.mubr.f32.mxu0 0.0
        %708 = vmatmul.mubr.f32.gmra.mrb[0].mxu0 %v385
        %v709 = vpop.f32.mrb[0].mxu0
        %v710 = vadd.f32 %v458, %v709
        %v711 = vpop.f32.mrb[0].mxu0
        %v712 = vadd.f32 %v462, %v711
        %713 = vmatprep.mubr.f32.mxu0 0.0
        %714 = vmatmul.mubr.f32.gmra.mrb[0].mxu0 %v386
        %v715 = vpop.f32.mrb[0].mxu0
        %v716 = vadd.f32 %v458, %v715
        %v717 = vpop.f32.mrb[0].mxu0
        %v718 = vadd.f32 %v462, %v717
        %719 = vmatprep.mubr.f32.mxu0 0.0
        %720 = vmatmul.mubr.f32.gmra.mrb[0].mxu0 %v387
        %v721 = vpop.f32.mrb[0].mxu0
        %v722 = vadd.f32 %v458, %v721
        %v723 = vpop.f32.mrb[0].mxu0
        %v724 = vadd.f32 %v462, %v723
        %725 = vmatprep.mubr.f32.mxu0 0.0
        %726 = vmatmul.mubr.f32.gmra.mrb[0].mxu0 %v388
        %v727 = vpop.f32.mrb[0].mxu0
        %v728 = vadd.f32 %v458, %v727
        %v729 = vpop.f32.mrb[0].mxu0
        %v730 = vadd.f32 %v462, %v729
        %731 = vdwg.mxu0
        %732 = vmatprep.subr.mxu0 %v392
        %733 = vmatpush1.msra.mxu0 %v391
        %734 = vmatprep.subr.mxu0 %v396
        %735 = vmatpush1.msra.mxu0 %v395
        %736 = vmatprep.subr.mxu0 %v400
        %737 = vmatpush1.msra.mxu0 %v399
        %738 = vmatprep.subr.mxu0 %v404
        %739 = vmatpush1.msra.mxu0 %v403
        %740 = vmatprep.subr.mxu0 %v408
        %741 = vmatpush1.msra.mxu0 %v407
        %742 = vmatprep.subr.mxu0 %v412
        %743 = vmatpush1.msra.mxu0 %v411
        %744 = vmatprep.subr.mxu0 %v416
        %745 = vmatpush1.msra.mxu0 %v415
        %746 = vmatprep.subr.mxu0 %v420
        %747 = vmatpush1.msra.mxu0 %v419
        %748 = vmatprep.subr.mxu0 %v424
        %749 = vmatpush1.msra.mxu0 %v423
        %750 = vmatprep.subr.mxu0 %v428
        %751 = vmatpush1.msra.mxu0 %v427
        %752 = vmatprep.subr.mxu0 %v432
        %753 = vmatpush1.msra.mxu0 %v431
        %754 = vmatprep.subr.mxu0 %v436
        %755 = vmatpush1.msra.mxu0 %v435
        %756 = vmatprep.subr.mxu0 %v440
        %757 = vmatpush1.msra.mxu0 %v439
        %758 = vmatprep.subr.mxu0 %v444
        %759 = vmatpush1.msra.mxu0 %v443
        %760 = vmatprep.subr.mxu0 %v448
        %761 = vmatpush1.msra.mxu0 %v447
        %762 = vmatprep.subr.mxu0 %v452
        %763 = vmatpush1.msra.mxu0 %v451
        %764 = vmatprep.subr.mxu0 0.0
        %765 = vmatpush1.msra.mxu0 0.0
        %766 = vmatprep.subr.mxu0 0.0
        %767 = vmatpush1.msra.mxu0 0.0
        %768 = vmatprep.subr.mxu0 0.0
        %769 = vmatpush1.msra.mxu0 0.0
        %770 = vmatprep.subr.mxu0 0.0
        %771 = vmatpush1.msra.mxu0 0.0
        %772 = vmatprep.subr.mxu0 0.0
        %773 = vmatpush1.msra.mxu0 0.0
        %774 = vmatprep.subr.mxu0 0.0
        %775 = vmatpush1.msra.mxu0 0.0
        %776 = vmatprep.subr.mxu0 0.0
        %777 = vmatpush1.msra.mxu0 0.0
        %778 = vmatprep.subr.mxu0 0.0
        %779 = vmatpush1.msra.mxu0 0.0
        %780 = vmatprep.subr.mxu0 0.0
        %781 = vmatpush1.msra.mxu0 0.0
        %782 = vmatprep.subr.mxu0 0.0
        %783 = vmatpush1.msra.mxu0 0.0
        %784 = vmatprep.subr.mxu0 0.0
        %785 = vmatpush1.msra.mxu0 0.0
        %786 = vmatprep.subr.mxu0 0.0
        %787 = vmatpush1.msra.mxu0 0.0
        %788 = vmatprep.subr.mxu0 0.0
        %789 = vmatpush1.msra.mxu0 0.0
        %790 = vmatprep.subr.mxu0 0.0
        %791 = vmatpush1.msra.mxu0 0.0
        %792 = vmatprep.subr.mxu0 0.0
        %793 = vmatpush1.msra.mxu0 0.0
        %794 = vmatprep.subr.mxu0 0.0
        %795 = vmatpush1.msra.mxu0 0.0
        %796 = vmatprep.mubr.f32.mxu0 0.0
        %797 = vmatmul.mubr.f32.gmra.mrb[0].mxu0 %v357
        %v798 = vpop.f32.mrb[0].mxu0
        %v799 = vadd.f32 %v466, %v798
        %v800 = vpop.f32.mrb[0].mxu0
        %v801 = vadd.f32 %v470, %v800
        %802 = vmatprep.mubr.f32.mxu0 0.0
        %803 = vmatmul.mubr.f32.gmra.mrb[0].mxu0 %v358
        %v804 = vpop.f32.mrb[0].mxu0
        %v805 = vadd.f32 %v466, %v804
        %v806 = vpop.f32.mrb[0].mxu0
        %v807 = vadd.f32 %v470, %v806
        %808 = vmatprep.mubr.f32.mxu0 0.0
        %809 = vmatmul.mubr.f32.gmra.mrb[0].mxu0 %v359
        %v810 = vpop.f32.mrb[0].mxu0
        %v811 = vadd.f32 %v466, %v810
        %v812 = vpop.f32.mrb[0].mxu0
        %v813 = vadd.f32 %v470, %v812
        %814 = vmatprep.mubr.f32.mxu0 0.0
        %815 = vmatmul.mubr.f32.gmra.mrb[0].mxu0 %v360
        %v816 = vpop.f32.mrb[0].mxu0
        %v817 = vadd.f32 %v466, %v816
        %v818 = vpop.f32.mrb[0].mxu0
        %v819 = vadd.f32 %v470, %v818
        %820 = vmatprep.mubr.f32.mxu0 0.0
        %821 = vmatmul.mubr.f32.gmra.mrb[0].mxu0 %v361
        %v822 = vpop.f32.mrb[0].mxu0
        %v823 = vadd.f32 %v466, %v822
        %v824 = vpop.f32.mrb[0].mxu0
        %v825 = vadd.f32 %v470, %v824
        %826 = vmatprep.mubr.f32.mxu0 0.0
        %827 = vmatmul.mubr.f32.gmra.mrb[0].mxu0 %v362
        %v828 = vpop.f32.mrb[0].mxu0
        %v829 = vadd.f32 %v466, %v828
        %v830 = vpop.f32.mrb[0].mxu0
        %v831 = vadd.f32 %v470, %v830
        %832 = vmatprep.mubr.f32.mxu0 0.0
        %833 = vmatmul.mubr.f32.gmra.mrb[0].mxu0 %v363
        %v834 = vpop.f32.mrb[0].mxu0
        %v835 = vadd.f32 %v466, %v834
        %v836 = vpop.f32.mrb[0].mxu0
        %v837 = vadd.f32 %v470, %v836
        %838 = vmatprep.mubr.f32.mxu0 0.0
        %839 = vmatmul.mubr.f32.gmra.mrb[0].mxu0 %v364
        %v840 = vpop.f32.mrb[0].mxu0
        %v841 = vadd.f32 %v466, %v840
        %v842 = vpop.f32.mrb[0].mxu0
        %v843 = vadd.f32 %v470, %v842
        %844 = vmatprep.mubr.f32.mxu0 0.0
        %845 = vmatmul.mubr.f32.gmra.mrb[0].mxu0 %v365
        %v846 = vpop.f32.mrb[0].mxu0
        %v847 = vadd.f32 %v466, %v846
        %v848 = vpop.f32.mrb[0].mxu0
        %v849 = vadd.f32 %v470, %v848
        %850 = vmatprep.mubr.f32.mxu0 0.0
        %851 = vmatmul.mubr.f32.gmra.mrb[0].mxu0 %v366
        %v852 = vpop.f32.mrb[0].mxu0
        %v853 = vadd.f32 %v466, %v852
        %v854 = vpop.f32.mrb[0].mxu0
        %v855 = vadd.f32 %v470, %v854
        %856 = vmatprep.mubr.f32.mxu0 0.0
        %857 = vmatmul.mubr.f32.gmra.mrb[0].mxu0 %v367
        %v858 = vpop.f32.mrb[0].mxu0
        %v859 = vadd.f32 %v466, %v858
        %v860 = vpop.f32.mrb[0].mxu0
        %v861 = vadd.f32 %v470, %v860
        %862 = vmatprep.mubr.f32.mxu0 0.0
        %863 = vmatmul.mubr.f32.gmra.mrb[0].mxu0 %v368
        %v864 = vpop.f32.mrb[0].mxu0
        %v865 = vadd.f32 %v466, %v864
        %v866 = vpop.f32.mrb[0].mxu0
        %v867 = vadd.f32 %v470, %v866
        %868 = vmatprep.mubr.f32.mxu0 0.0
        %869 = vmatmul.mubr.f32.gmra.mrb[0].mxu0 %v369
        %v870 = vpop.f32.mrb[0].mxu0
        %v871 = vadd.f32 %v466, %v870
        %v872 = vpop.f32.mrb[0].mxu0
        %v873 = vadd.f32 %v470, %v872
        %874 = vmatprep.mubr.f32.mxu0 0.0
        %875 = vmatmul.mubr.f32.gmra.mrb[0].mxu0 %v370
        %v876 = vpop.f32.mrb[0].mxu0
        %v877 = vadd.f32 %v466, %v876
        %v878 = vpop.f32.mrb[0].mxu0
        %v879 = vadd.f32 %v470, %v878
        %880 = vmatprep.mubr.f32.mxu0 0.0
        %881 = vmatmul.mubr.f32.gmra.mrb[0].mxu0 %v371
        %v882 = vpop.f32.mrb[0].mxu0
        %v883 = vadd.f32 %v466, %v882
        %v884 = vpop.f32.mrb[0].mxu0
        %v885 = vadd.f32 %v470, %v884
        %886 = vmatprep.mubr.f32.mxu0 0.0
        %887 = vmatmul.mubr.f32.gmra.mrb[0].mxu0 %v372
        %v888 = vpop.f32.mrb[0].mxu0
        %v889 = vadd.f32 %v466, %v888
        %v890 = vpop.f32.mrb[0].mxu0
        %v891 = vadd.f32 %v470, %v890
        %892 = vmatprep.mubr.f32.mxu0 0.0
        %893 = vmatmul.mubr.f32.gmra.mrb[0].mxu0 %v373
        %v894 = vpop.f32.mrb[0].mxu0
        %v895 = vadd.f32 %v466, %v894
        %v896 = vpop.f32.mrb[0].mxu0
        %v897 = vadd.f32 %v470, %v896
        %898 = vmatprep.mubr.f32.mxu0 0.0
        %899 = vmatmul.mubr.f32.gmra.mrb[0].mxu0 %v374
        %v900 = vpop.f32.mrb[0].mxu0
        %v901 = vadd.f32 %v466, %v900
        %v902 = vpop.f32.mrb[0].mxu0
        %v903 = vadd.f32 %v470, %v902
        %904 = vmatprep.mubr.f32.mxu0 0.0
        %905 = vmatmul.mubr.f32.gmra.mrb[0].mxu0 %v375
        %v906 = vpop.f32.mrb[0].mxu0
        %v907 = vadd.f32 %v466, %v906
        %v908 = vpop.f32.mrb[0].mxu0
        %v909 = vadd.f32 %v470, %v908
        %910 = vmatprep.mubr.f32.mxu0 0.0
        %911 = vmatmul.mubr.f32.gmra.mrb[0].mxu0 %v376
        %v912 = vpop.f32.mrb[0].mxu0
        %v913 = vadd.f32 %v466, %v912
        %v914 = vpop.f32.mrb[0].mxu0
        %v915 = vadd.f32 %v470, %v914
        %916 = vmatprep.mubr.f32.mxu0 0.0
        %917 = vmatmul.mubr.f32.gmra.mrb[0].mxu0 %v377
        %v918 = vpop.f32.mrb[0].mxu0
        %v919 = vadd.f32 %v466, %v918
        %v920 = vpop.f32.mrb[0].mxu0
        %v921 = vadd.f32 %v470, %v920
        %922 = vmatprep.mubr.f32.mxu0 0.0
        %923 = vmatmul.mubr.f32.gmra.mrb[0].mxu0 %v378
        %v924 = vpop.f32.mrb[0].mxu0
        %v925 = vadd.f32 %v466, %v924
        %v926 = vpop.f32.mrb[0].mxu0
        %v927 = vadd.f32 %v470, %v926
        %928 = vmatprep.mubr.f32.mxu0 0.0
        %929 = vmatmul.mubr.f32.gmra.mrb[0].mxu0 %v379
        %v930 = vpop.f32.mrb[0].mxu0
        %v931 = vadd.f32 %v466, %v930
        %v932 = vpop.f32.mrb[0].mxu0
        %v933 = vadd.f32 %v470, %v932
        %934 = vmatprep.mubr.f32.mxu0 0.0
        %935 = vmatmul.mubr.f32.gmra.mrb[0].mxu0 %v380
        %v936 = vpop.f32.mrb[0].mxu0
        %v937 = vadd.f32 %v466, %v936
        %v938 = vpop.f32.mrb[0].mxu0
        %v939 = vadd.f32 %v470, %v938
        %940 = vmatprep.mubr.f32.mxu0 0.0
        %941 = vmatmul.mubr.f32.gmra.mrb[0].mxu0 %v381
        %v942 = vpop.f32.mrb[0].mxu0
        %v943 = vadd.f32 %v466, %v942
        %v944 = vpop.f32.mrb[0].mxu0
        %v945 = vadd.f32 %v470, %v944
        %946 = vmatprep.mubr.f32.mxu0 0.0
        %947 = vmatmul.mubr.f32.gmra.mrb[0].mxu0 %v382
        %v948 = vpop.f32.mrb[0].mxu0
        %v949 = vadd.f32 %v466, %v948
        %v950 = vpop.f32.mrb[0].mxu0
        %v951 = vadd.f32 %v470, %v950
        %952 = vmatprep.mubr.f32.mxu0 0.0
        %953 = vmatmul.mubr.f32.gmra.mrb[0].mxu0 %v383
        %v954 = vpop.f32.mrb[0].mxu0
        %v955 = vadd.f32 %v466, %v954
        %v956 = vpop.f32.mrb[0].mxu0
        %v957 = vadd.f32 %v470, %v956
        %958 = vmatprep.mubr.f32.mxu0 0.0
        %959 = vmatmul.mubr.f32.gmra.mrb[0].mxu0 %v384
        %v960 = vpop.f32.mrb[0].mxu0
        %v961 = vadd.f32 %v466, %v960
        %v962 = vpop.f32.mrb[0].mxu0
        %v963 = vadd.f32 %v470, %v962
        %964 = vmatprep.mubr.f32.mxu0 0.0
        %965 = vmatmul.mubr.f32.gmra.mrb[0].mxu0 %v385
        %v966 = vpop.f32.mrb[0].mxu0
        %v967 = vadd.f32 %v466, %v966
        %v968 = vpop.f32.mrb[0].mxu0
        %v969 = vadd.f32 %v470, %v968
        %970 = vmatprep.mubr.f32.mxu0 0.0
        %971 = vmatmul.mubr.f32.gmra.mrb[0].mxu0 %v386
        %v972 = vpop.f32.mrb[0].mxu0
        %v973 = vadd.f32 %v466, %v972
        %v974 = vpop.f32.mrb[0].mxu0
        %v975 = vadd.f32 %v470, %v974
        %976 = vmatprep.mubr.f32.mxu0 0.0
        %977 = vmatmul.mubr.f32.gmra.mrb[0].mxu0 %v387
        %v978 = vpop.f32.mrb[0].mxu0
        %v979 = vadd.f32 %v466, %v978
        %v980 = vpop.f32.mrb[0].mxu0
        %v981 = vadd.f32 %v470, %v980
        %982 = vmatprep.mubr.f32.mxu0 0.0
        %983 = vmatmul.mubr.f32.gmra.mrb[0].mxu0 %v388
        %v984 = vpop.f32.mrb[0].mxu0
        %v985 = vadd.f32 %v466, %v984
        %v986 = vpop.f32.mrb[0].mxu0
        %v987 = vadd.f32 %v470, %v986
        %988 = vdwg.mxu0
        %v989 = vmul.f32 %v542, 0.5
        %v990 = vmul.f32 %v544, 0.5
        %v991 = vmul.f32 %v799, 0.5
        %v992 = vmul.f32 %v801, 0.5
        %v993 = vmul.f32 %v548, 0.5
        %v994 = vmul.f32 %v550, 0.5
        %v995 = vmul.f32 %v805, 0.5
        %v996 = vmul.f32 %v807, 0.5
        %v997 = vmul.f32 %v554, 0.5
        %v998 = vmul.f32 %v556, 0.5
        %v999 = vmul.f32 %v811, 0.5
        %v1000 = vmul.f32 %v813, 0.5
        %v1001 = vmul.f32 %v560, 0.5
        %v1002 = vmul.f32 %v562, 0.5
        %v1003 = vmul.f32 %v817, 0.5
        %v1004 = vmul.f32 %v819, 0.5
        %v1005 = vmul.f32 %v566, 0.5
        %v1006 = vmul.f32 %v568, 0.5
        %v1007 = vmul.f32 %v823, 0.5
        %v1008 = vmul.f32 %v825, 0.5
        %v1009 = vmul.f32 %v572, 0.5
        %v1010 = vmul.f32 %v574, 0.5
        %v1011 = vmul.f32 %v829, 0.5
        %v1012 = vmul.f32 %v831, 0.5
        %v1013 = vmul.f32 %v578, 0.5
        %v1014 = vmul.f32 %v580, 0.5
        %v1015 = vmul.f32 %v835, 0.5
        %v1016 = vmul.f32 %v837, 0.5
        %v1017 = vmul.f32 %v584, 0.5
        %v1018 = vmul.f32 %v586, 0.5
        %v1019 = vmul.f32 %v841, 0.5
        %v1020 = vmul.f32 %v843, 0.5
        %v1021 = vmul.f32 %v590, 0.5
        %v1022 = vmul.f32 %v592, 0.5
        %v1023 = vmul.f32 %v847, 0.5
        %v1024 = vmul.f32 %v849, 0.5
        %v1025 = vmul.f32 %v596, 0.5
        %v1026 = vmul.f32 %v598, 0.5
        %v1027 = vmul.f32 %v853, 0.5
        %v1028 = vmul.f32 %v855, 0.5
        %v1029 = vmul.f32 %v602, 0.5
        %v1030 = vmul.f32 %v604, 0.5
        %v1031 = vmul.f32 %v859, 0.5
        %v1032 = vmul.f32 %v861, 0.5
        %v1033 = vmul.f32 %v608, 0.5
        %v1034 = vmul.f32 %v610, 0.5
        %v1035 = vmul.f32 %v865, 0.5
        %v1036 = vmul.f32 %v867, 0.5
        %v1037 = vmul.f32 %v614, 0.5
        %v1038 = vmul.f32 %v616, 0.5
        %v1039 = vmul.f32 %v871, 0.5
        %v1040 = vmul.f32 %v873, 0.5
        %v1041 = vmul.f32 %v620, 0.5
        %v1042 = vmul.f32 %v622, 0.5
        %v1043 = vmul.f32 %v877, 0.5
        %v1044 = vmul.f32 %v879, 0.5
        %v1045 = vmul.f32 %v626, 0.5
        %v1046 = vmul.f32 %v628, 0.5
        %v1047 = vmul.f32 %v883, 0.5
        %v1048 = vmul.f32 %v885, 0.5
        %v1049 = vmul.f32 %v632, 0.5
        %v1050 = vmul.f32 %v634, 0.5
        %v1051 = vmul.f32 %v889, 0.5
        %v1052 = vmul.f32 %v891, 0.5
        %v1053 = vmul.f32 %v638, 0.5
        %v1054 = vmul.f32 %v640, 0.5
        %v1055 = vmul.f32 %v895, 0.5
        %v1056 = vmul.f32 %v897, 0.5
        %v1057 = vmul.f32 %v644, 0.5
        %v1058 = vmul.f32 %v646, 0.5
        %v1059 = vmul.f32 %v901, 0.5
        %v1060 = vmul.f32 %v903, 0.5
        %v1061 = vmul.f32 %v650, 0.5
        %v1062 = vmul.f32 %v652, 0.5
        %v1063 = vmul.f32 %v907, 0.5
        %v1064 = vmul.f32 %v909, 0.5
        %v1065 = vmul.f32 %v656, 0.5
        %v1066 = vmul.f32 %v658, 0.5
        %v1067 = vmul.f32 %v913, 0.5
        %v1068 = vmul.f32 %v915, 0.5
        %v1069 = vmul.f32 %v662, 0.5
        %v1070 = vmul.f32 %v664, 0.5
        %v1071 = vmul.f32 %v919, 0.5
        %v1072 = vmul.f32 %v921, 0.5
        %v1073 = vmul.f32 %v668, 0.5
        %v1074 = vmul.f32 %v670, 0.5
        %v1075 = vmul.f32 %v925, 0.5
        %v1076 = vmul.f32 %v927, 0.5
        %v1077 = vmul.f32 %v674, 0.5
        %v1078 = vmul.f32 %v676, 0.5
        %v1079 = vmul.f32 %v931, 0.5
        %v1080 = vmul.f32 %v933, 0.5
        %v1081 = vmul.f32 %v680, 0.5
        %v1082 = vmul.f32 %v682, 0.5
        %v1083 = vmul.f32 %v937, 0.5
        %v1084 = vmul.f32 %v939, 0.5
        %v1085 = vmul.f32 %v686, 0.5
        %v1086 = vmul.f32 %v688, 0.5
        %v1087 = vmul.f32 %v943, 0.5
        %v1088 = vmul.f32 %v945, 0.5
        %v1089 = vmul.f32 %v692, 0.5
        %v1090 = vmul.f32 %v694, 0.5
        %v1091 = vmul.f32 %v949, 0.5
        %v1092 = vmul.f32 %v951, 0.5
        %v1093 = vmul.f32 %v698, 0.5
        %v1094 = vmul.f32 %v700, 0.5
        %v1095 = vmul.f32 %v955, 0.5
        %v1096 = vmul.f32 %v957, 0.5
        %v1097 = vmul.f32 %v704, 0.5
        %v1098 = vmul.f32 %v706, 0.5
        %v1099 = vmul.f32 %v961, 0.5
        %v1100 = vmul.f32 %v963, 0.5
        %v1101 = vmul.f32 %v710, 0.5
        %v1102 = vmul.f32 %v712, 0.5
        %v1103 = vmul.f32 %v967, 0.5
        %v1104 = vmul.f32 %v969, 0.5
        %v1105 = vmul.f32 %v716, 0.5
        %v1106 = vmul.f32 %v718, 0.5
        %v1107 = vmul.f32 %v973, 0.5
        %v1108 = vmul.f32 %v975, 0.5
        %v1109 = vmul.f32 %v722, 0.5
        %v1110 = vmul.f32 %v724, 0.5
        %v1111 = vmul.f32 %v979, 0.5
        %v1112 = vmul.f32 %v981, 0.5
        %v1113 = vmul.f32 %v728, 0.5
        %v1114 = vmul.f32 %v730, 0.5
        %v1115 = vmul.f32 %v985, 0.5
        %v1116 = vmul.f32 %v987, 0.5
        %v1117 = vmul.f32 %v542, 0.70710677
        %v1118 = vmul.f32 %v544, 0.70710677
        %v1119 = vmul.f32 %v799, 0.70710677
        %v1120 = vmul.f32 %v801, 0.70710677
        %v1121 = vmul.f32 %v548, 0.70710677
        %v1122 = vmul.f32 %v550, 0.70710677
        %v1123 = vmul.f32 %v805, 0.70710677
        %v1124 = vmul.f32 %v807, 0.70710677
        %v1125 = vmul.f32 %v554, 0.70710677
        %v1126 = vmul.f32 %v556, 0.70710677
        %v1127 = vmul.f32 %v811, 0.70710677
        %v1128 = vmul.f32 %v813, 0.70710677
        %v1129 = vmul.f32 %v560, 0.70710677
        %v1130 = vmul.f32 %v562, 0.70710677
        %v1131 = vmul.f32 %v817, 0.70710677
        %v1132 = vmul.f32 %v819, 0.70710677
        %v1133 = vmul.f32 %v566, 0.70710677
        %v1134 = vmul.f32 %v568, 0.70710677
        %v1135 = vmul.f32 %v823, 0.70710677
        %v1136 = vmul.f32 %v825, 0.70710677
        %v1137 = vmul.f32 %v572, 0.70710677
        %v1138 = vmul.f32 %v574, 0.70710677
        %v1139 = vmul.f32 %v829, 0.70710677
        %v1140 = vmul.f32 %v831, 0.70710677
        %v1141 = vmul.f32 %v578, 0.70710677
        %v1142 = vmul.f32 %v580, 0.70710677
        %v1143 = vmul.f32 %v835, 0.70710677
        %v1144 = vmul.f32 %v837, 0.70710677
        %v1145 = vmul.f32 %v584, 0.70710677
        %v1146 = vmul.f32 %v586, 0.70710677
        %v1147 = vmul.f32 %v841, 0.70710677
        %v1148 = vmul.f32 %v843, 0.70710677
        %v1149 = vmul.f32 %v590, 0.70710677
        %v1150 = vmul.f32 %v592, 0.70710677
        %v1151 = vmul.f32 %v847, 0.70710677
        %v1152 = vmul.f32 %v849, 0.70710677
        %v1153 = vmul.f32 %v596, 0.70710677
        %v1154 = vmul.f32 %v598, 0.70710677
        %v1155 = vmul.f32 %v853, 0.70710677
        %v1156 = vmul.f32 %v855, 0.70710677
        %v1157 = vmul.f32 %v602, 0.70710677
        %v1158 = vmul.f32 %v604, 0.70710677
        %v1159 = vmul.f32 %v859, 0.70710677
        %v1160 = vmul.f32 %v861, 0.70710677
        %v1161 = vmul.f32 %v608, 0.70710677
        %v1162 = vmul.f32 %v610, 0.70710677
        %v1163 = vmul.f32 %v865, 0.70710677
        %v1164 = vmul.f32 %v867, 0.70710677
        %v1165 = vmul.f32 %v614, 0.70710677
        %v1166 = vmul.f32 %v616, 0.70710677
        %v1167 = vmul.f32 %v871, 0.70710677
        %v1168 = vmul.f32 %v873, 0.70710677
        %v1169 = vmul.f32 %v620, 0.70710677
        %v1170 = vmul.f32 %v622, 0.70710677
        %v1171 = vmul.f32 %v877, 0.70710677
        %v1172 = vmul.f32 %v879, 0.70710677
        %v1173 = vmul.f32 %v626, 0.70710677
        %v1174 = vmul.f32 %v628, 0.70710677
        %v1175 = vmul.f32 %v883, 0.70710677
        %v1176 = vmul.f32 %v885, 0.70710677
        %v1177 = vmul.f32 %v632, 0.70710677
        %v1178 = vmul.f32 %v634, 0.70710677
        %v1179 = vmul.f32 %v889, 0.70710677
        %v1180 = vmul.f32 %v891, 0.70710677
        %v1181 = vmul.f32 %v638, 0.70710677
        %v1182 = vmul.f32 %v640, 0.70710677
        %v1183 = vmul.f32 %v895, 0.70710677
        %v1184 = vmul.f32 %v897, 0.70710677
        %v1185 = vmul.f32 %v644, 0.70710677
        %v1186 = vmul.f32 %v646, 0.70710677
        %v1187 = vmul.f32 %v901, 0.70710677
        %v1188 = vmul.f32 %v903, 0.70710677
        %v1189 = vmul.f32 %v650, 0.70710677
        %v1190 = vmul.f32 %v652, 0.70710677
        %v1191 = vmul.f32 %v907, 0.70710677
        %v1192 = vmul.f32 %v909, 0.70710677
        %v1193 = vmul.f32 %v656, 0.70710677
        %v1194 = vmul.f32 %v658, 0.70710677
        %v1195 = vmul.f32 %v913, 0.70710677
        %v1196 = vmul.f32 %v915, 0.70710677
        %v1197 = vmul.f32 %v662, 0.70710677
        %v1198 = vmul.f32 %v664, 0.70710677
        %v1199 = vmul.f32 %v919, 0.70710677
        %v1200 = vmul.f32 %v921, 0.70710677
        %v1201 = vmul.f32 %v668, 0.70710677
        %v1202 = vmul.f32 %v670, 0.70710677
        %v1203 = vmul.f32 %v925, 0.70710677
        %v1204 = vmul.f32 %v927, 0.70710677
        %v1205 = vmul.f32 %v674, 0.70710677
        %v1206 = vmul.f32 %v676, 0.70710677
        %v1207 = vmul.f32 %v931, 0.70710677
        %v1208 = vmul.f32 %v933, 0.70710677
        %v1209 = vmul.f32 %v680, 0.70710677
        %v1210 = vmul.f32 %v682, 0.70710677
        %v1211 = vmul.f32 %v937, 0.70710677
        %v1212 = vmul.f32 %v939, 0.70710677
        %v1213 = vmul.f32 %v686, 0.70710677
        %v1214 = vmul.f32 %v688, 0.70710677
        %v1215 = vmul.f32 %v943, 0.70710677
        %v1216 = vmul.f32 %v945, 0.70710677
        %v1217 = vmul.f32 %v692, 0.70710677
        %v1218 = vmul.f32 %v694, 0.70710677
        %v1219 = vmul.f32 %v949, 0.70710677
        %v1220 = vmul.f32 %v951, 0.70710677
        %v1221 = vmul.f32 %v698, 0.70710677
        %v1222 = vmul.f32 %v700, 0.70710677
        %v1223 = vmul.f32 %v955, 0.70710677
        %v1224 = vmul.f32 %v957, 0.70710677
        %v1225 = vmul.f32 %v704, 0.70710677
        %v1226 = vmul.f32 %v706, 0.70710677
        %v1227 = vmul.f32 %v961, 0.70710677
        %v1228 = vmul.f32 %v963, 0.70710677
        %v1229 = vmul.f32 %v710, 0.70710677
        %v1230 = vmul.f32 %v712, 0.70710677
        %v1231 = vmul.f32 %v967, 0.70710677
        %v1232 = vmul.f32 %v969, 0.70710677
        %v1233 = vmul.f32 %v716, 0.70710677
        %v1234 = vmul.f32 %v718, 0.70710677
        %v1235 = vmul.f32 %v973, 0.70710677
        %v1236 = vmul.f32 %v975, 0.70710677
        %v1237 = vmul.f32 %v722, 0.70710677
        %v1238 = vmul.f32 %v724, 0.70710677
        %v1239 = vmul.f32 %v979, 0.70710677
        %v1240 = vmul.f32 %v981, 0.70710677
        %v1241 = vmul.f32 %v728, 0.70710677
        %v1242 = vmul.f32 %v730, 0.70710677
        %v1243 = vmul.f32 %v985, 0.70710677
        %v1244 = vmul.f32 %v987, 0.70710677
        %v1245 = verf.f32.pop %v1117
        %v1246 = verf.f32.pop %v1118
        %v1247 = verf.f32.pop %v1119
        %v1248 = verf.f32.pop %v1120
        %v1249 = verf.f32.pop %v1121
        %v1250 = verf.f32.pop %v1122
        %v1251 = verf.f32.pop %v1123
        %v1252 = verf.f32.pop %v1124
        %v1253 = verf.f32.pop %v1125
        %v1254 = verf.f32.pop %v1126
        %v1255 = verf.f32.pop %v1127
        %v1256 = verf.f32.pop %v1128
        %v1257 = verf.f32.pop %v1129
        %v1258 = verf.f32.pop %v1130
        %v1259 = verf.f32.pop %v1131
        %v1260 = verf.f32.pop %v1132
        %v1261 = verf.f32.pop %v1133
        %v1262 = verf.f32.pop %v1134
        %v1263 = verf.f32.pop %v1135
        %v1264 = verf.f32.pop %v1136
        %v1265 = verf.f32.pop %v1137
        %v1266 = verf.f32.pop %v1138
        %v1267 = verf.f32.pop %v1139
        %v1268 = verf.f32.pop %v1140
        %v1269 = verf.f32.pop %v1141
        %v1270 = verf.f32.pop %v1142
        %v1271 = verf.f32.pop %v1143
        %v1272 = verf.f32.pop %v1144
        %v1273 = verf.f32.pop %v1145
        %v1274 = verf.f32.pop %v1146
        %v1275 = verf.f32.pop %v1147
        %v1276 = verf.f32.pop %v1148
        %v1277 = verf.f32.pop %v1149
        %v1278 = verf.f32.pop %v1150
        %v1279 = verf.f32.pop %v1151
        %v1280 = verf.f32.pop %v1152
        %v1281 = verf.f32.pop %v1153
        %v1282 = verf.f32.pop %v1154
        %v1283 = verf.f32.pop %v1155
        %v1284 = verf.f32.pop %v1156
        %v1285 = verf.f32.pop %v1157
        %v1286 = verf.f32.pop %v1158
        %v1287 = verf.f32.pop %v1159
        %v1288 = verf.f32.pop %v1160
        %v1289 = verf.f32.pop %v1161
        %v1290 = verf.f32.pop %v1162
        %v1291 = verf.f32.pop %v1163
        %v1292 = verf.f32.pop %v1164
        %v1293 = verf.f32.pop %v1165
        %v1294 = verf.f32.pop %v1166
        %v1295 = verf.f32.pop %v1167
        %v1296 = verf.f32.pop %v1168
        %v1297 = verf.f32.pop %v1169
        %v1298 = verf.f32.pop %v1170
        %v1299 = verf.f32.pop %v1171
        %v1300 = verf.f32.pop %v1172
        %v1301 = verf.f32.pop %v1173
        %v1302 = verf.f32.pop %v1174
        %v1303 = verf.f32.pop %v1175
        %v1304 = verf.f32.pop %v1176
        %v1305 = verf.f32.pop %v1177
        %v1306 = verf.f32.pop %v1178
        %v1307 = verf.f32.pop %v1179
        %v1308 = verf.f32.pop %v1180
        %v1309 = verf.f32.pop %v1181
        %v1310 = verf.f32.pop %v1182
        %v1311 = verf.f32.pop %v1183
        %v1312 = verf.f32.pop %v1184
        %v1313 = verf.f32.pop %v1185
        %v1314 = verf.f32.pop %v1186
        %v1315 = verf.f32.pop %v1187
        %v1316 = verf.f32.pop %v1188
        %v1317 = verf.f32.pop %v1189
        %v1318 = verf.f32.pop %v1190
        %v1319 = verf.f32.pop %v1191
        %v1320 = verf.f32.pop %v1192
        %v1321 = verf.f32.pop %v1193
        %v1322 = verf.f32.pop %v1194
        %v1323 = verf.f32.pop %v1195
        %v1324 = verf.f32.pop %v1196
        %v1325 = verf.f32.pop %v1197
        %v1326 = verf.f32.pop %v1198
        %v1327 = verf.f32.pop %v1199
        %v1328 = verf.f32.pop %v1200
        %v1329 = verf.f32.pop %v1201
        %v1330 = verf.f32.pop %v1202
        %v1331 = verf.f32.pop %v1203
        %v1332 = verf.f32.pop %v1204
        %v1333 = verf.f32.pop %v1205
        %v1334 = verf.f32.pop %v1206
        %v1335 = verf.f32.pop %v1207
        %v1336 = verf.f32.pop %v1208
        %v1337 = verf.f32.pop %v1209
        %v1338 = verf.f32.pop %v1210
        %v1339 = verf.f32.pop %v1211
        %v1340 = verf.f32.pop %v1212
        %v1341 = verf.f32.pop %v1213
        %v1342 = verf.f32.pop %v1214
        %v1343 = verf.f32.pop %v1215
        %v1344 = verf.f32.pop %v1216
        %v1345 = verf.f32.pop %v1217
        %v1346 = verf.f32.pop %v1218
        %v1347 = verf.f32.pop %v1219
        %v1348 = verf.f32.pop %v1220
        %v1349 = verf.f32.pop %v1221
        %v1350 = verf.f32.pop %v1222
        %v1351 = verf.f32.pop %v1223
        %v1352 = verf.f32.pop %v1224
        %v1353 = verf.f32.pop %v1225
        %v1354 = verf.f32.pop %v1226
        %v1355 = verf.f32.pop %v1227
        %v1356 = verf.f32.pop %v1228
        %v1357 = verf.f32.pop %v1229
        %v1358 = verf.f32.pop %v1230
        %v1359 = verf.f32.pop %v1231
        %v1360 = verf.f32.pop %v1232
        %v1361 = verf.f32.pop %v1233
        %v1362 = verf.f32.pop %v1234
        %v1363 = verf.f32.pop %v1235
        %v1364 = verf.f32.pop %v1236
        %v1365 = verf.f32.pop %v1237
        %v1366 = verf.f32.pop %v1238
        %v1367 = verf.f32.pop %v1239
        %v1368 = verf.f32.pop %v1240
        %v1369 = verf.f32.pop %v1241
        %v1370 = verf.f32.pop %v1242
        %v1371 = verf.f32.pop %v1243
        %v1372 = verf.f32.pop %v1244
        %v1373 = vadd.f32 %v1245, 1.0
        %v1374 = vadd.f32 %v1246, 1.0
        %v1375 = vadd.f32 %v1247, 1.0
        %v1376 = vadd.f32 %v1248, 1.0
        %v1377 = vadd.f32 %v1249, 1.0
        %v1378 = vadd.f32 %v1250, 1.0
        %v1379 = vadd.f32 %v1251, 1.0
        %v1380 = vadd.f32 %v1252, 1.0
        %v1381 = vadd.f32 %v1253, 1.0
        %v1382 = vadd.f32 %v1254, 1.0
        %v1383 = vadd.f32 %v1255, 1.0
        %v1384 = vadd.f32 %v1256, 1.0
        %v1385 = vadd.f32 %v1257, 1.0
        %v1386 = vadd.f32 %v1258, 1.0
        %v1387 = vadd.f32 %v1259, 1.0
        %v1388 = vadd.f32 %v1260, 1.0
        %v1389 = vadd.f32 %v1261, 1.0
        %v1390 = vadd.f32 %v1262, 1.0
        %v1391 = vadd.f32 %v1263, 1.0
        %v1392 = vadd.f32 %v1264, 1.0
        %v1393 = vadd.f32 %v1265, 1.0
        %v1394 = vadd.f32 %v1266, 1.0
        %v1395 = vadd.f32 %v1267, 1.0
        %v1396 = vadd.f32 %v1268, 1.0
        %v1397 = vadd.f32 %v1269, 1.0
        %v1398 = vadd.f32 %v1270, 1.0
        %v1399 = vadd.f32 %v1271, 1.0
        %v1400 = vadd.f32 %v1272, 1.0
        %v1401 = vadd.f32 %v1273, 1.0
        %v1402 = vadd.f32 %v1274, 1.0
        %v1403 = vadd.f32 %v1275, 1.0
        %v1404 = vadd.f32 %v1276, 1.0
        %v1405 = vadd.f32 %v1277, 1.0
        %v1406 = vadd.f32 %v1278, 1.0
        %v1407 = vadd.f32 %v1279, 1.0
        %v1408 = vadd.f32 %v1280, 1.0
        %v1409 = vadd.f32 %v1281, 1.0
        %v1410 = vadd.f32 %v1282, 1.0
        %v1411 = vadd.f32 %v1283, 1.0
        %v1412 = vadd.f32 %v1284, 1.0
        %v1413 = vadd.f32 %v1285, 1.0
        %v1414 = vadd.f32 %v1286, 1.0
        %v1415 = vadd.f32 %v1287, 1.0
        %v1416 = vadd.f32 %v1288, 1.0
        %v1417 = vadd.f32 %v1289, 1.0
        %v1418 = vadd.f32 %v1290, 1.0
        %v1419 = vadd.f32 %v1291, 1.0
        %v1420 = vadd.f32 %v1292, 1.0
        %v1421 = vadd.f32 %v1293, 1.0
        %v1422 = vadd.f32 %v1294, 1.0
        %v1423 = vadd.f32 %v1295, 1.0
        %v1424 = vadd.f32 %v1296, 1.0
        %v1425 = vadd.f32 %v1297, 1.0
        %v1426 = vadd.f32 %v1298, 1.0
        %v1427 = vadd.f32 %v1299, 1.0
        %v1428 = vadd.f32 %v1300, 1.0
        %v1429 = vadd.f32 %v1301, 1.0
        %v1430 = vadd.f32 %v1302, 1.0
        %v1431 = vadd.f32 %v1303, 1.0
        %v1432 = vadd.f32 %v1304, 1.0
        %v1433 = vadd.f32 %v1305, 1.0
        %v1434 = vadd.f32 %v1306, 1.0
        %v1435 = vadd.f32 %v1307, 1.0
        %v1436 = vadd.f32 %v1308, 1.0
        %v1437 = vadd.f32 %v1309, 1.0
        %v1438 = vadd.f32 %v1310, 1.0
        %v1439 = vadd.f32 %v1311, 1.0
        %v1440 = vadd.f32 %v1312, 1.0
        %v1441 = vadd.f32 %v1313, 1.0
        %v1442 = vadd.f32 %v1314, 1.0
        %v1443 = vadd.f32 %v1315, 1.0
        %v1444 = vadd.f32 %v1316, 1.0
        %v1445 = vadd.f32 %v1317, 1.0
        %v1446 = vadd.f32 %v1318, 1.0
        %v1447 = vadd.f32 %v1319, 1.0
        %v1448 = vadd.f32 %v1320, 1.0
        %v1449 = vadd.f32 %v1321, 1.0
        %v1450 = vadd.f32 %v1322, 1.0
        %v1451 = vadd.f32 %v1323, 1.0
        %v1452 = vadd.f32 %v1324, 1.0
        %v1453 = vadd.f32 %v1325, 1.0
        %v1454 = vadd.f32 %v1326, 1.0
        %v1455 = vadd.f32 %v1327, 1.0
        %v1456 = vadd.f32 %v1328, 1.0
        %v1457 = vadd.f32 %v1329, 1.0
        %v1458 = vadd.f32 %v1330, 1.0
        %v1459 = vadd.f32 %v1331, 1.0
        %v1460 = vadd.f32 %v1332, 1.0
        %v1461 = vadd.f32 %v1333, 1.0
        %v1462 = vadd.f32 %v1334, 1.0
        %v1463 = vadd.f32 %v1335, 1.0
        %v1464 = vadd.f32 %v1336, 1.0
        %v1465 = vadd.f32 %v1337, 1.0
        %v1466 = vadd.f32 %v1338, 1.0
        %v1467 = vadd.f32 %v1339, 1.0
        %v1468 = vadd.f32 %v1340, 1.0
        %v1469 = vadd.f32 %v1341, 1.0
        %v1470 = vadd.f32 %v1342, 1.0
        %v1471 = vadd.f32 %v1343, 1.0
        %v1472 = vadd.f32 %v1344, 1.0
        %v1473 = vadd.f32 %v1345, 1.0
        %v1474 = vadd.f32 %v1346, 1.0
        %v1475 = vadd.f32 %v1347, 1.0
        %v1476 = vadd.f32 %v1348, 1.0
        %v1477 = vadd.f32 %v1349, 1.0
        %v1478 = vadd.f32 %v1350, 1.0
        %v1479 = vadd.f32 %v1351, 1.0
        %v1480 = vadd.f32 %v1352, 1.0
        %v1481 = vadd.f32 %v1353, 1.0
        %v1482 = vadd.f32 %v1354, 1.0
        %v1483 = vadd.f32 %v1355, 1.0
        %v1484 = vadd.f32 %v1356, 1.0
        %v1485 = vadd.f32 %v1357, 1.0
        %v1486 = vadd.f32 %v1358, 1.0
        %v1487 = vadd.f32 %v1359, 1.0
        %v1488 = vadd.f32 %v1360, 1.0
        %v1489 = vadd.f32 %v1361, 1.0
        %v1490 = vadd.f32 %v1362, 1.0
        %v1491 = vadd.f32 %v1363, 1.0
        %v1492 = vadd.f32 %v1364, 1.0
        %v1493 = vadd.f32 %v1365, 1.0
        %v1494 = vadd.f32 %v1366, 1.0
        %v1495 = vadd.f32 %v1367, 1.0
        %v1496 = vadd.f32 %v1368, 1.0
        %v1497 = vadd.f32 %v1369, 1.0
        %v1498 = vadd.f32 %v1370, 1.0
        %v1499 = vadd.f32 %v1371, 1.0
        %v1500 = vadd.f32 %v1372, 1.0
        %v1501 = vmul.f32 %v989, %v1373
        %v1502 = vmul.f32 %v990, %v1374
        %v1503 = vmul.f32 %v991, %v1375
        %v1504 = vmul.f32 %v992, %v1376
        %v1505 = vmul.f32 %v993, %v1377
        %v1506 = vmul.f32 %v994, %v1378
        %v1507 = vmul.f32 %v995, %v1379
        %v1508 = vmul.f32 %v996, %v1380
        %v1509 = vmul.f32 %v997, %v1381
        %v1510 = vmul.f32 %v998, %v1382
        %v1511 = vmul.f32 %v999, %v1383
        %v1512 = vmul.f32 %v1000, %v1384
        %v1513 = vmul.f32 %v1001, %v1385
        %v1514 = vmul.f32 %v1002, %v1386
        %v1515 = vmul.f32 %v1003, %v1387
        %v1516 = vmul.f32 %v1004, %v1388
        %v1517 = vmul.f32 %v1005, %v1389
        %v1518 = vmul.f32 %v1006, %v1390
        %v1519 = vmul.f32 %v1007, %v1391
        %v1520 = vmul.f32 %v1008, %v1392
        %v1521 = vmul.f32 %v1009, %v1393
        %v1522 = vmul.f32 %v1010, %v1394
        %v1523 = vmul.f32 %v1011, %v1395
        %v1524 = vmul.f32 %v1012, %v1396
        %v1525 = vmul.f32 %v1013, %v1397
        %v1526 = vmul.f32 %v1014, %v1398
        %v1527 = vmul.f32 %v1015, %v1399
        %v1528 = vmul.f32 %v1016, %v1400
        %v1529 = vmul.f32 %v1017, %v1401
        %v1530 = vmul.f32 %v1018, %v1402
        %v1531 = vmul.f32 %v1019, %v1403
        %v1532 = vmul.f32 %v1020, %v1404
        %v1533 = vmul.f32 %v1021, %v1405
        %v1534 = vmul.f32 %v1022, %v1406
        %v1535 = vmul.f32 %v1023, %v1407
        %v1536 = vmul.f32 %v1024, %v1408
        %v1537 = vmul.f32 %v1025, %v1409
        %v1538 = vmul.f32 %v1026, %v1410
        %v1539 = vmul.f32 %v1027, %v1411
        %v1540 = vmul.f32 %v1028, %v1412
        %v1541 = vmul.f32 %v1029, %v1413
        %v1542 = vmul.f32 %v1030, %v1414
        %v1543 = vmul.f32 %v1031, %v1415
        %v1544 = vmul.f32 %v1032, %v1416
        %v1545 = vmul.f32 %v1033, %v1417
        %v1546 = vmul.f32 %v1034, %v1418
        %v1547 = vmul.f32 %v1035, %v1419
        %v1548 = vmul.f32 %v1036, %v1420
        %v1549 = vmul.f32 %v1037, %v1421
        %v1550 = vmul.f32 %v1038, %v1422
        %v1551 = vmul.f32 %v1039, %v1423
        %v1552 = vmul.f32 %v1040, %v1424
        %v1553 = vmul.f32 %v1041, %v1425
        %v1554 = vmul.f32 %v1042, %v1426
        %v1555 = vmul.f32 %v1043, %v1427
        %v1556 = vmul.f32 %v1044, %v1428
        %v1557 = vmul.f32 %v1045, %v1429
        %v1558 = vmul.f32 %v1046, %v1430
        %v1559 = vmul.f32 %v1047, %v1431
        %v1560 = vmul.f32 %v1048, %v1432
        %v1561 = vmul.f32 %v1049, %v1433
        %v1562 = vmul.f32 %v1050, %v1434
        %v1563 = vmul.f32 %v1051, %v1435
        %v1564 = vmul.f32 %v1052, %v1436
        %v1565 = vmul.f32 %v1053, %v1437
        %v1566 = vmul.f32 %v1054, %v1438
        %v1567 = vmul.f32 %v1055, %v1439
        %v1568 = vmul.f32 %v1056, %v1440
        %v1569 = vmul.f32 %v1057, %v1441
        %v1570 = vmul.f32 %v1058, %v1442
        %v1571 = vmul.f32 %v1059, %v1443
        %v1572 = vmul.f32 %v1060, %v1444
        %v1573 = vmul.f32 %v1061, %v1445
        %v1574 = vmul.f32 %v1062, %v1446
        %v1575 = vmul.f32 %v1063, %v1447
        %v1576 = vmul.f32 %v1064, %v1448
        %v1577 = vmul.f32 %v1065, %v1449
        %v1578 = vmul.f32 %v1066, %v1450
        %v1579 = vmul.f32 %v1067, %v1451
        %v1580 = vmul.f32 %v1068, %v1452
        %v1581 = vmul.f32 %v1069, %v1453
        %v1582 = vmul.f32 %v1070, %v1454
        %v1583 = vmul.f32 %v1071, %v1455
        %v1584 = vmul.f32 %v1072, %v1456
        %v1585 = vmul.f32 %v1073, %v1457
        %v1586 = vmul.f32 %v1074, %v1458
        %v1587 = vmul.f32 %v1075, %v1459
        %v1588 = vmul.f32 %v1076, %v1460
        %v1589 = vmul.f32 %v1077, %v1461
        %v1590 = vmul.f32 %v1078, %v1462
        %v1591 = vmul.f32 %v1079, %v1463
        %v1592 = vmul.f32 %v1080, %v1464
        %v1593 = vmul.f32 %v1081, %v1465
        %v1594 = vmul.f32 %v1082, %v1466
        %v1595 = vmul.f32 %v1083, %v1467
        %v1596 = vmul.f32 %v1084, %v1468
        %v1597 = vmul.f32 %v1085, %v1469
        %v1598 = vmul.f32 %v1086, %v1470
        %v1599 = vmul.f32 %v1087, %v1471
        %v1600 = vmul.f32 %v1088, %v1472
        %v1601 = vmul.f32 %v1089, %v1473
        %v1602 = vmul.f32 %v1090, %v1474
        %v1603 = vmul.f32 %v1091, %v1475
        %v1604 = vmul.f32 %v1092, %v1476
        %v1605 = vmul.f32 %v1093, %v1477
        %v1606 = vmul.f32 %v1094, %v1478
        %v1607 = vmul.f32 %v1095, %v1479
        %v1608 = vmul.f32 %v1096, %v1480
        %v1609 = vmul.f32 %v1097, %v1481
        %v1610 = vmul.f32 %v1098, %v1482
        %v1611 = vmul.f32 %v1099, %v1483
        %v1612 = vmul.f32 %v1100, %v1484
        %v1613 = vmul.f32 %v1101, %v1485
        %v1614 = vmul.f32 %v1102, %v1486
        %v1615 = vmul.f32 %v1103, %v1487
        %v1616 = vmul.f32 %v1104, %v1488
        %v1617 = vmul.f32 %v1105, %v1489
        %v1618 = vmul.f32 %v1106, %v1490
        %v1619 = vmul.f32 %v1107, %v1491
        %v1620 = vmul.f32 %v1108, %v1492
        %v1621 = vmul.f32 %v1109, %v1493
        %v1622 = vmul.f32 %v1110, %v1494
        %v1623 = vmul.f32 %v1111, %v1495
        %v1624 = vmul.f32 %v1112, %v1496
        %v1625 = vmul.f32 %v1113, %v1497
        %v1626 = vmul.f32 %v1114, %v1498
        %v1627 = vmul.f32 %v1115, %v1499
        %v1628 = vmul.f32 %v1116, %v1500
        %v1629 = vld [vmem:[#allocation2] sm:$0xff]
        %v1630 = vld [vmem:[#allocation2 + $0x8] sm:$0xff]
        %v1631 = vld [vmem:[#allocation2 + $0x10] sm:$0xff]
        %v1632 = vld [vmem:[#allocation2 + $0x18] sm:$0xff]
        %v1633 = vld [vmem:[#allocation2 + $0x20] sm:$0xff]
        %v1634 = vld [vmem:[#allocation2 + $0x28] sm:$0xff]
        %v1635 = vld [vmem:[#allocation2 + $0x30] sm:$0xff]
        %v1636 = vld [vmem:[#allocation2 + $0x38] sm:$0xff]
        %v1637 = vld [vmem:[#allocation2 + $0x40] sm:$0xff]
        %v1638 = vld [vmem:[#allocation2 + $0x48] sm:$0xff]
        %v1639 = vld [vmem:[#allocation2 + $0x50] sm:$0xff]
        %v1640 = vld [vmem:[#allocation2 + $0x58] sm:$0xff]
        %v1641 = vld [vmem:[#allocation2 + $0x60] sm:$0xff]
        %v1642 = vld [vmem:[#allocation2 + $0x68] sm:$0xff]
        %v1643 = vld [vmem:[#allocation2 + $0x70] sm:$0xff]
        %v1644 = vld [vmem:[#allocation2 + $0x78] sm:$0xff]
        %v1645 = vld [vmem:[#allocation2 + $0x80] sm:$0xff]
        %v1646 = vld [vmem:[#allocation2 + $0x88] sm:$0xff]
        %v1647 = vld [vmem:[#allocation2 + $0x90] sm:$0xff]
        %v1648 = vld [vmem:[#allocation2 + $0x98] sm:$0xff]
        %v1649 = vld [vmem:[#allocation2 + $0xa0] sm:$0xff]
        %v1650 = vld [vmem:[#allocation2 + $0xa8] sm:$0xff]
        %v1651 = vld [vmem:[#allocation2 + $0xb0] sm:$0xff]
        %v1652 = vld [vmem:[#allocation2 + $0xb8] sm:$0xff]
        %v1653 = vld [vmem:[#allocation2 + $0xc0] sm:$0xff]
        %v1654 = vld [vmem:[#allocation2 + $0xc8] sm:$0xff]
        %v1655 = vld [vmem:[#allocation2 + $0xd0] sm:$0xff]
        %v1656 = vld [vmem:[#allocation2 + $0xd8] sm:$0xff]
        %v1657 = vld [vmem:[#allocation2 + $0xe0] sm:$0xff]
        %v1658 = vld [vmem:[#allocation2 + $0xe8] sm:$0xff]
        %v1659 = vld [vmem:[#allocation2 + $0xf0] sm:$0xff]
        %v1660 = vld [vmem:[#allocation2 + $0xf8] sm:$0xff]
        %v1661 = vld [vmem:[%s314] sm:$0xff]
        %v1662 = vld [vmem:[%s314 + $0x8] sm:$0xff]
        %v1663 = vld [vmem:[%s314 + $0x10] sm:$0xff]
        %v1664 = vld [vmem:[%s314 + $0x18] sm:$0xff]
        %v1665 = vld [vmem:[%s314 + $0x20] sm:$0xff]
        %v1666 = vld [vmem:[%s314 + $0x28] sm:$0xff]
        %v1667 = vld [vmem:[%s314 + $0x30] sm:$0xff]
        %v1668 = vld [vmem:[%s314 + $0x38] sm:$0xff]
        %v1669 = vld [vmem:[%s314 + $0x40] sm:$0xff]
        %v1670 = vld [vmem:[%s314 + $0x48] sm:$0xff]
        %v1671 = vld [vmem:[%s314 + $0x50] sm:$0xff]
        %v1672 = vld [vmem:[%s314 + $0x58] sm:$0xff]
        %v1673 = vld [vmem:[%s314 + $0x60] sm:$0xff]
        %v1674 = vld [vmem:[%s314 + $0x68] sm:$0xff]
        %v1675 = vld [vmem:[%s314 + $0x70] sm:$0xff]
        %v1676 = vld [vmem:[%s314 + $0x78] sm:$0xff]
        %v1677 = vld [vmem:[%s314 + $0x80] sm:$0xff]
        %v1678 = vld [vmem:[%s314 + $0x88] sm:$0xff]
        %v1679 = vld [vmem:[%s314 + $0x90] sm:$0xff]
        %v1680 = vld [vmem:[%s314 + $0x98] sm:$0xff]
        %v1681 = vld [vmem:[%s314 + $0xa0] sm:$0xff]
        %v1682 = vld [vmem:[%s314 + $0xa8] sm:$0xff]
        %v1683 = vld [vmem:[%s314 + $0xb0] sm:$0xff]
        %v1684 = vld [vmem:[%s314 + $0xb8] sm:$0xff]
        %v1685 = vld [vmem:[%s314 + $0xc0] sm:$0xff]
        %v1686 = vld [vmem:[%s314 + $0xc8] sm:$0xff]
        %v1687 = vld [vmem:[%s314 + $0xd0] sm:$0xff]
        %v1688 = vld [vmem:[%s314 + $0xd8] sm:$0xff]
        %v1689 = vld [vmem:[%s314 + $0xe0] sm:$0xff]
        %v1690 = vld [vmem:[%s314 + $0xe8] sm:$0xff]
        %v1691 = vld [vmem:[%s314 + $0xf0] sm:$0xff]
        %v1692 = vld [vmem:[%s314 + $0xf8] sm:$0xff]
        %v1693 = vld [vmem:[%s314 + $0x100] sm:$0xff]
        %v1694 = vld [vmem:[%s314 + $0x108] sm:$0xff]
        %v1695 = vld [vmem:[%s314 + $0x110] sm:$0xff]
        %v1696 = vld [vmem:[%s314 + $0x118] sm:$0xff]
        %v1697 = vld [vmem:[%s314 + $0x120] sm:$0xff]
        %v1698 = vld [vmem:[%s314 + $0x128] sm:$0xff]
        %v1699 = vld [vmem:[%s314 + $0x130] sm:$0xff]
        %v1700 = vld [vmem:[%s314 + $0x138] sm:$0xff]
        %v1701 = vld [vmem:[%s314 + $0x140] sm:$0xff]
        %v1702 = vld [vmem:[%s314 + $0x148] sm:$0xff]
        %v1703 = vld [vmem:[%s314 + $0x150] sm:$0xff]
        %v1704 = vld [vmem:[%s314 + $0x158] sm:$0xff]
        %v1705 = vld [vmem:[%s314 + $0x160] sm:$0xff]
        %v1706 = vld [vmem:[%s314 + $0x168] sm:$0xff]
        %v1707 = vld [vmem:[%s314 + $0x170] sm:$0xff]
        %v1708 = vld [vmem:[%s314 + $0x178] sm:$0xff]
        %v1709 = vld [vmem:[%s314 + $0x180] sm:$0xff]
        %v1710 = vld [vmem:[%s314 + $0x188] sm:$0xff]
        %v1711 = vld [vmem:[%s314 + $0x190] sm:$0xff]
        %v1712 = vld [vmem:[%s314 + $0x198] sm:$0xff]
        %v1713 = vld [vmem:[%s314 + $0x1a0] sm:$0xff]
        %v1714 = vld [vmem:[%s314 + $0x1a8] sm:$0xff]
        %v1715 = vld [vmem:[%s314 + $0x1b0] sm:$0xff]
        %v1716 = vld [vmem:[%s314 + $0x1b8] sm:$0xff]
        %v1717 = vld [vmem:[%s314 + $0x1c0] sm:$0xff]
        %v1718 = vld [vmem:[%s314 + $0x1c8] sm:$0xff]
        %v1719 = vld [vmem:[%s314 + $0x1d0] sm:$0xff]
        %v1720 = vld [vmem:[%s314 + $0x1d8] sm:$0xff]
        %v1721 = vld [vmem:[%s314 + $0x1e0] sm:$0xff]
        %v1722 = vld [vmem:[%s314 + $0x1e8] sm:$0xff]
        %v1723 = vld [vmem:[%s314 + $0x1f0] sm:$0xff]
        %v1724 = vld [vmem:[%s314 + $0x1f8] sm:$0xff]
        %1725 = vmatprep.subr.mxu0 0.0
        %1726 = vmatpush1.msra.mxu0 %v1661
        %1727 = vmatprep.subr.mxu0 0.0
        %1728 = vmatpush1.msra.mxu0 %v1662
        %1729 = vmatprep.subr.mxu0 0.0
        %1730 = vmatpush1.msra.mxu0 %v1663
        %1731 = vmatprep.subr.mxu0 0.0
        %1732 = vmatpush1.msra.mxu0 %v1664
        %1733 = vmatprep.subr.mxu0 0.0
        %1734 = vmatpush1.msra.mxu0 %v1665
        %1735 = vmatprep.subr.mxu0 0.0
        %1736 = vmatpush1.msra.mxu0 %v1666
        %1737 = vmatprep.subr.mxu0 0.0
        %1738 = vmatpush1.msra.mxu0 %v1667
        %1739 = vmatprep.subr.mxu0 0.0
        %1740 = vmatpush1.msra.mxu0 %v1668
        %1741 = vmatprep.subr.mxu0 0.0
        %1742 = vmatpush1.msra.mxu0 %v1669
        %1743 = vmatprep.subr.mxu0 0.0
        %1744 = vmatpush1.msra.mxu0 %v1670
        %1745 = vmatprep.subr.mxu0 0.0
        %1746 = vmatpush1.msra.mxu0 %v1671
        %1747 = vmatprep.subr.mxu0 0.0
        %1748 = vmatpush1.msra.mxu0 %v1672
        %1749 = vmatprep.subr.mxu0 0.0
        %1750 = vmatpush1.msra.mxu0 %v1673
        %1751 = vmatprep.subr.mxu0 0.0
        %1752 = vmatpush1.msra.mxu0 %v1674
        %1753 = vmatprep.subr.mxu0 0.0
        %1754 = vmatpush1.msra.mxu0 %v1675
        %1755 = vmatprep.subr.mxu0 0.0
        %1756 = vmatpush1.msra.mxu0 %v1676
        %1757 = vmatprep.subr.mxu0 0.0
        %1758 = vmatpush1.msra.mxu0 %v1677
        %1759 = vmatprep.subr.mxu0 0.0
        %1760 = vmatpush1.msra.mxu0 %v1678
        %1761 = vmatprep.subr.mxu0 0.0
        %1762 = vmatpush1.msra.mxu0 %v1679
        %1763 = vmatprep.subr.mxu0 0.0
        %1764 = vmatpush1.msra.mxu0 %v1680
        %1765 = vmatprep.subr.mxu0 0.0
        %1766 = vmatpush1.msra.mxu0 %v1681
        %1767 = vmatprep.subr.mxu0 0.0
        %1768 = vmatpush1.msra.mxu0 %v1682
        %1769 = vmatprep.subr.mxu0 0.0
        %1770 = vmatpush1.msra.mxu0 %v1683
        %1771 = vmatprep.subr.mxu0 0.0
        %1772 = vmatpush1.msra.mxu0 %v1684
        %1773 = vmatprep.subr.mxu0 0.0
        %1774 = vmatpush1.msra.mxu0 %v1685
        %1775 = vmatprep.subr.mxu0 0.0
        %1776 = vmatpush1.msra.mxu0 %v1686
        %1777 = vmatprep.subr.mxu0 0.0
        %1778 = vmatpush1.msra.mxu0 %v1687
        %1779 = vmatprep.subr.mxu0 0.0
        %1780 = vmatpush1.msra.mxu0 %v1688
        %1781 = vmatprep.subr.mxu0 0.0
        %1782 = vmatpush1.msra.mxu0 %v1689
        %1783 = vmatprep.subr.mxu0 0.0
        %1784 = vmatpush1.msra.mxu0 %v1690
        %1785 = vmatprep.subr.mxu0 0.0
        %1786 = vmatpush1.msra.mxu0 %v1691
        %1787 = vmatprep.subr.mxu0 0.0
        %1788 = vmatpush1.msra.mxu0 %v1692
        %1789 = vmatprep.mubr.f32.mxu0 %v1502
        %1790 = vmatmul.mubr.f32.gmra.mrb[0].mxu0 %v1501
        %v1791 = vpop.f32.mrb[0].mxu0
        %v1792 = vadd.f32 0.0, %v1791
        %v1793 = vpop.f32.mrb[0].mxu0
        %1794 = vmatprep.mubr.f32.mxu0 %v1506
        %1795 = vmatmul.mubr.f32.gmra.mrb[0].mxu0 %v1505
        %v1796 = vpop.f32.mrb[0].mxu0
        %v1797 = vadd.f32 0.0, %v1796
        %v1798 = vpop.f32.mrb[0].mxu0
        %1799 = vmatprep.mubr.f32.mxu0 %v1510
        %1800 = vmatmul.mubr.f32.gmra.mrb[0].mxu0 %v1509
        %v1801 = vpop.f32.mrb[0].mxu0
        %v1802 = vadd.f32 0.0, %v1801
        %v1803 = vpop.f32.mrb[0].mxu0
        %1804 = vmatprep.mubr.f32.mxu0 %v1514
        %1805 = vmatmul.mubr.f32.gmra.mrb[0].mxu0 %v1513
        %v1806 = vpop.f32.mrb[0].mxu0
        %v1807 = vadd.f32 0.0, %v1806
        %v1808 = vpop.f32.mrb[0].mxu0
        %1809 = vmatprep.mubr.f32.mxu0 %v1518
        %1810 = vmatmul.mubr.f32.gmra.mrb[0].mxu0 %v1517
        %v1811 = vpop.f32.mrb[0].mxu0
        %v1812 = vadd.f32 0.0, %v1811
        %v1813 = vpop.f32.mrb[0].mxu0
        %1814 = vmatprep.mubr.f32.mxu0 %v1522
        %1815 = vmatmul.mubr.f32.gmra.mrb[0].mxu0 %v1521
        %v1816 = vpop.f32.mrb[0].mxu0
        %v1817 = vadd.f32 0.0, %v1816
        %v1818 = vpop.f32.mrb[0].mxu0
        %1819 = vmatprep.mubr.f32.mxu0 %v1526
        %1820 = vmatmul.mubr.f32.gmra.mrb[0].mxu0 %v1525
        %v1821 = vpop.f32.mrb[0].mxu0
        %v1822 = vadd.f32 0.0, %v1821
        %v1823 = vpop.f32.mrb[0].mxu0
        %1824 = vmatprep.mubr.f32.mxu0 %v1530
        %1825 = vmatmul.mubr.f32.gmra.mrb[0].mxu0 %v1529
        %v1826 = vpop.f32.mrb[0].mxu0
        %v1827 = vadd.f32 0.0, %v1826
        %v1828 = vpop.f32.mrb[0].mxu0
        %1829 = vmatprep.mubr.f32.mxu0 %v1534
        %1830 = vmatmul.mubr.f32.gmra.mrb[0].mxu0 %v1533
        %v1831 = vpop.f32.mrb[0].mxu0
        %v1832 = vadd.f32 0.0, %v1831
        %v1833 = vpop.f32.mrb[0].mxu0
        %1834 = vmatprep.mubr.f32.mxu0 %v1538
        %1835 = vmatmul.mubr.f32.gmra.mrb[0].mxu0 %v1537
        %v1836 = vpop.f32.mrb[0].mxu0
        %v1837 = vadd.f32 0.0, %v1836
        %v1838 = vpop.f32.mrb[0].mxu0
        %1839 = vmatprep.mubr.f32.mxu0 %v1542
        %1840 = vmatmul.mubr.f32.gmra.mrb[0].mxu0 %v1541
        %v1841 = vpop.f32.mrb[0].mxu0
        %v1842 = vadd.f32 0.0, %v1841
        %v1843 = vpop.f32.mrb[0].mxu0
        %1844 = vmatprep.mubr.f32.mxu0 %v1546
        %1845 = vmatmul.mubr.f32.gmra.mrb[0].mxu0 %v1545
        %v1846 = vpop.f32.mrb[0].mxu0
        %v1847 = vadd.f32 0.0, %v1846
        %v1848 = vpop.f32.mrb[0].mxu0
        %1849 = vmatprep.mubr.f32.mxu0 %v1550
        %1850 = vmatmul.mubr.f32.gmra.mrb[0].mxu0 %v1549
        %v1851 = vpop.f32.mrb[0].mxu0
        %v1852 = vadd.f32 0.0, %v1851
        %v1853 = vpop.f32.mrb[0].mxu0
        %1854 = vmatprep.mubr.f32.mxu0 %v1554
        %1855 = vmatmul.mubr.f32.gmra.mrb[0].mxu0 %v1553
        %v1856 = vpop.f32.mrb[0].mxu0
        %v1857 = vadd.f32 0.0, %v1856
        %v1858 = vpop.f32.mrb[0].mxu0
        %1859 = vmatprep.mubr.f32.mxu0 %v1558
        %1860 = vmatmul.mubr.f32.gmra.mrb[0].mxu0 %v1557
        %v1861 = vpop.f32.mrb[0].mxu0
        %v1862 = vadd.f32 0.0, %v1861
        %v1863 = vpop.f32.mrb[0].mxu0
        %1864 = vmatprep.mubr.f32.mxu0 %v1562
        %1865 = vmatmul.mubr.f32.gmra.mrb[0].mxu0 %v1561
        %v1866 = vpop.f32.mrb[0].mxu0
        %v1867 = vadd.f32 0.0, %v1866
        %v1868 = vpop.f32.mrb[0].mxu0
        %1869 = vmatprep.mubr.f32.mxu0 %v1566
        %1870 = vmatmul.mubr.f32.gmra.mrb[0].mxu0 %v1565
        %v1871 = vpop.f32.mrb[0].mxu0
        %v1872 = vadd.f32 0.0, %v1871
        %v1873 = vpop.f32.mrb[0].mxu0
        %1874 = vmatprep.mubr.f32.mxu0 %v1570
        %1875 = vmatmul.mubr.f32.gmra.mrb[0].mxu0 %v1569
        %v1876 = vpop.f32.mrb[0].mxu0
        %v1877 = vadd.f32 0.0, %v1876
        %v1878 = vpop.f32.mrb[0].mxu0
        %1879 = vmatprep.mubr.f32.mxu0 %v1574
        %1880 = vmatmul.mubr.f32.gmra.mrb[0].mxu0 %v1573
        %v1881 = vpop.f32.mrb[0].mxu0
        %v1882 = vadd.f32 0.0, %v1881
        %v1883 = vpop.f32.mrb[0].mxu0
        %1884 = vmatprep.mubr.f32.mxu0 %v1578
        %1885 = vmatmul.mubr.f32.gmra.mrb[0].mxu0 %v1577
        %v1886 = vpop.f32.mrb[0].mxu0
        %v1887 = vadd.f32 0.0, %v1886
        %v1888 = vpop.f32.mrb[0].mxu0
        %1889 = vmatprep.mubr.f32.mxu0 %v1582
        %1890 = vmatmul.mubr.f32.gmra.mrb[0].mxu0 %v1581
        %v1891 = vpop.f32.mrb[0].mxu0
        %v1892 = vadd.f32 0.0, %v1891
        %v1893 = vpop.f32.mrb[0].mxu0
        %1894 = vmatprep.mubr.f32.mxu0 %v1586
        %1895 = vmatmul.mubr.f32.gmra.mrb[0].mxu0 %v1585
        %v1896 = vpop.f32.mrb[0].mxu0
        %v1897 = vadd.f32 0.0, %v1896
        %v1898 = vpop.f32.mrb[0].mxu0
        %1899 = vmatprep.mubr.f32.mxu0 %v1590
        %1900 = vmatmul.mubr.f32.gmra.mrb[0].mxu0 %v1589
        %v1901 = vpop.f32.mrb[0].mxu0
        %v1902 = vadd.f32 0.0, %v1901
        %v1903 = vpop.f32.mrb[0].mxu0
        %1904 = vmatprep.mubr.f32.mxu0 %v1594
        %1905 = vmatmul.mubr.f32.gmra.mrb[0].mxu0 %v1593
        %v1906 = vpop.f32.mrb[0].mxu0
        %v1907 = vadd.f32 0.0, %v1906
        %v1908 = vpop.f32.mrb[0].mxu0
        %1909 = vmatprep.mubr.f32.mxu0 %v1598
        %1910 = vmatmul.mubr.f32.gmra.mrb[0].mxu0 %v1597
        %v1911 = vpop.f32.mrb[0].mxu0
        %v1912 = vadd.f32 0.0, %v1911
        %v1913 = vpop.f32.mrb[0].mxu0
        %1914 = vmatprep.mubr.f32.mxu0 %v1602
        %1915 = vmatmul.mubr.f32.gmra.mrb[0].mxu0 %v1601
        %v1916 = vpop.f32.mrb[0].mxu0
        %v1917 = vadd.f32 0.0, %v1916
        %v1918 = vpop.f32.mrb[0].mxu0
        %1919 = vmatprep.mubr.f32.mxu0 %v1606
        %1920 = vmatmul.mubr.f32.gmra.mrb[0].mxu0 %v1605
        %v1921 = vpop.f32.mrb[0].mxu0
        %v1922 = vadd.f32 0.0, %v1921
        %v1923 = vpop.f32.mrb[0].mxu0
        %1924 = vmatprep.mubr.f32.mxu0 %v1610
        %1925 = vmatmul.mubr.f32.gmra.mrb[0].mxu0 %v1609
        %v1926 = vpop.f32.mrb[0].mxu0
        %v1927 = vadd.f32 0.0, %v1926
        %v1928 = vpop.f32.mrb[0].mxu0
        %1929 = vmatprep.mubr.f32.mxu0 %v1614
        %1930 = vmatmul.mubr.f32.gmra.mrb[0].mxu0 %v1613
        %v1931 = vpop.f32.mrb[0].mxu0
        %v1932 = vadd.f32 0.0, %v1931
        %v1933 = vpop.f32.mrb[0].mxu0
        %1934 = vmatprep.mubr.f32.mxu0 %v1618
        %1935 = vmatmul.mubr.f32.gmra.mrb[0].mxu0 %v1617
        %v1936 = vpop.f32.mrb[0].mxu0
        %v1937 = vadd.f32 0.0, %v1936
        %v1938 = vpop.f32.mrb[0].mxu0
        %1939 = vmatprep.mubr.f32.mxu0 %v1622
        %1940 = vmatmul.mubr.f32.gmra.mrb[0].mxu0 %v1621
        %v1941 = vpop.f32.mrb[0].mxu0
        %v1942 = vadd.f32 0.0, %v1941
        %v1943 = vpop.f32.mrb[0].mxu0
        %1944 = vmatprep.mubr.f32.mxu0 %v1626
        %1945 = vmatmul.mubr.f32.gmra.mrb[0].mxu0 %v1625
        %v1946 = vpop.f32.mrb[0].mxu0
        %v1947 = vadd.f32 0.0, %v1946
        %v1948 = vpop.f32.mrb[0].mxu0
        %1949 = vdwg.mxu0
        %1950 = vmatprep.subr.mxu0 0.0
        %1951 = vmatpush1.msra.mxu0 %v1693
        %1952 = vmatprep.subr.mxu0 0.0
        %1953 = vmatpush1.msra.mxu0 %v1694
        %1954 = vmatprep.subr.mxu0 0.0
        %1955 = vmatpush1.msra.mxu0 %v1695
        %1956 = vmatprep.subr.mxu0 0.0
        %1957 = vmatpush1.msra.mxu0 %v1696
        %1958 = vmatprep.subr.mxu0 0.0
        %1959 = vmatpush1.msra.mxu0 %v1697
        %1960 = vmatprep.subr.mxu0 0.0
        %1961 = vmatpush1.msra.mxu0 %v1698
        %1962 = vmatprep.subr.mxu0 0.0
        %1963 = vmatpush1.msra.mxu0 %v1699
        %1964 = vmatprep.subr.mxu0 0.0
        %1965 = vmatpush1.msra.mxu0 %v1700
        %1966 = vmatprep.subr.mxu0 0.0
        %1967 = vmatpush1.msra.mxu0 %v1701
        %1968 = vmatprep.subr.mxu0 0.0
        %1969 = vmatpush1.msra.mxu0 %v1702
        %1970 = vmatprep.subr.mxu0 0.0
        %1971 = vmatpush1.msra.mxu0 %v1703
        %1972 = vmatprep.subr.mxu0 0.0
        %1973 = vmatpush1.msra.mxu0 %v1704
        %1974 = vmatprep.subr.mxu0 0.0
        %1975 = vmatpush1.msra.mxu0 %v1705
        %1976 = vmatprep.subr.mxu0 0.0
        %1977 = vmatpush1.msra.mxu0 %v1706
        %1978 = vmatprep.subr.mxu0 0.0
        %1979 = vmatpush1.msra.mxu0 %v1707
        %1980 = vmatprep.subr.mxu0 0.0
        %1981 = vmatpush1.msra.mxu0 %v1708
        %1982 = vmatprep.subr.mxu0 0.0
        %1983 = vmatpush1.msra.mxu0 %v1709
        %1984 = vmatprep.subr.mxu0 0.0
        %1985 = vmatpush1.msra.mxu0 %v1710
        %1986 = vmatprep.subr.mxu0 0.0
        %1987 = vmatpush1.msra.mxu0 %v1711
        %1988 = vmatprep.subr.mxu0 0.0
        %1989 = vmatpush1.msra.mxu0 %v1712
        %1990 = vmatprep.subr.mxu0 0.0
        %1991 = vmatpush1.msra.mxu0 %v1713
        %1992 = vmatprep.subr.mxu0 0.0
        %1993 = vmatpush1.msra.mxu0 %v1714
        %1994 = vmatprep.subr.mxu0 0.0
        %1995 = vmatpush1.msra.mxu0 %v1715
        %1996 = vmatprep.subr.mxu0 0.0
        %1997 = vmatpush1.msra.mxu0 %v1716
        %1998 = vmatprep.subr.mxu0 0.0
        %1999 = vmatpush1.msra.mxu0 %v1717
        %2000 = vmatprep.subr.mxu0 0.0
        %2001 = vmatpush1.msra.mxu0 %v1718
        %2002 = vmatprep.subr.mxu0 0.0
        %2003 = vmatpush1.msra.mxu0 %v1719
        %2004 = vmatprep.subr.mxu0 0.0
        %2005 = vmatpush1.msra.mxu0 %v1720
        %2006 = vmatprep.subr.mxu0 0.0
        %2007 = vmatpush1.msra.mxu0 %v1721
        %2008 = vmatprep.subr.mxu0 0.0
        %2009 = vmatpush1.msra.mxu0 %v1722
        %2010 = vmatprep.subr.mxu0 0.0
        %2011 = vmatpush1.msra.mxu0 %v1723
        %2012 = vmatprep.subr.mxu0 0.0
        %2013 = vmatpush1.msra.mxu0 %v1724
        %2014 = vmatprep.mubr.f32.mxu0 %v1504
        %2015 = vmatmul.mubr.f32.gmra.mrb[0].mxu0 %v1503
        %v2016 = vpop.f32.mrb[0].mxu0
        %v2017 = vadd.f32 %v1792, %v2016
        %v2018 = vpop.f32.mrb[0].mxu0
        %2019 = vmatprep.mubr.f32.mxu0 %v1508
        %2020 = vmatmul.mubr.f32.gmra.mrb[0].mxu0 %v1507
        %v2021 = vpop.f32.mrb[0].mxu0
        %v2022 = vadd.f32 %v1797, %v2021
        %v2023 = vpop.f32.mrb[0].mxu0
        %2024 = vmatprep.mubr.f32.mxu0 %v1512
        %2025 = vmatmul.mubr.f32.gmra.mrb[0].mxu0 %v1511
        %v2026 = vpop.f32.mrb[0].mxu0
        %v2027 = vadd.f32 %v1802, %v2026
        %v2028 = vpop.f32.mrb[0].mxu0
        %2029 = vmatprep.mubr.f32.mxu0 %v1516
        %2030 = vmatmul.mubr.f32.gmra.mrb[0].mxu0 %v1515
        %v2031 = vpop.f32.mrb[0].mxu0
        %v2032 = vadd.f32 %v1807, %v2031
        %v2033 = vpop.f32.mrb[0].mxu0
        %2034 = vmatprep.mubr.f32.mxu0 %v1520
        %2035 = vmatmul.mubr.f32.gmra.mrb[0].mxu0 %v1519
        %v2036 = vpop.f32.mrb[0].mxu0
        %v2037 = vadd.f32 %v1812, %v2036
        %v2038 = vpop.f32.mrb[0].mxu0
        %2039 = vmatprep.mubr.f32.mxu0 %v1524
        %2040 = vmatmul.mubr.f32.gmra.mrb[0].mxu0 %v1523
        %v2041 = vpop.f32.mrb[0].mxu0
        %v2042 = vadd.f32 %v1817, %v2041
        %v2043 = vpop.f32.mrb[0].mxu0
        %2044 = vmatprep.mubr.f32.mxu0 %v1528
        %2045 = vmatmul.mubr.f32.gmra.mrb[0].mxu0 %v1527
        %v2046 = vpop.f32.mrb[0].mxu0
        %v2047 = vadd.f32 %v1822, %v2046
        %v2048 = vpop.f32.mrb[0].mxu0
        %2049 = vmatprep.mubr.f32.mxu0 %v1532
        %2050 = vmatmul.mubr.f32.gmra.mrb[0].mxu0 %v1531
        %v2051 = vpop.f32.mrb[0].mxu0
        %v2052 = vadd.f32 %v1827, %v2051
        %v2053 = vpop.f32.mrb[0].mxu0
        %2054 = vmatprep.mubr.f32.mxu0 %v1536
        %2055 = vmatmul.mubr.f32.gmra.mrb[0].mxu0 %v1535
        %v2056 = vpop.f32.mrb[0].mxu0
        %v2057 = vadd.f32 %v1832, %v2056
        %v2058 = vpop.f32.mrb[0].mxu0
        %2059 = vmatprep.mubr.f32.mxu0 %v1540
        %2060 = vmatmul.mubr.f32.gmra.mrb[0].mxu0 %v1539
        %v2061 = vpop.f32.mrb[0].mxu0
        %v2062 = vadd.f32 %v1837, %v2061
        %v2063 = vpop.f32.mrb[0].mxu0
        %2064 = vmatprep.mubr.f32.mxu0 %v1544
        %2065 = vmatmul.mubr.f32.gmra.mrb[0].mxu0 %v1543
        %v2066 = vpop.f32.mrb[0].mxu0
        %v2067 = vadd.f32 %v1842, %v2066
        %v2068 = vpop.f32.mrb[0].mxu0
        %2069 = vmatprep.mubr.f32.mxu0 %v1548
        %2070 = vmatmul.mubr.f32.gmra.mrb[0].mxu0 %v1547
        %v2071 = vpop.f32.mrb[0].mxu0
        %v2072 = vadd.f32 %v1847, %v2071
        %v2073 = vpop.f32.mrb[0].mxu0
        %2074 = vmatprep.mubr.f32.mxu0 %v1552
        %2075 = vmatmul.mubr.f32.gmra.mrb[0].mxu0 %v1551
        %v2076 = vpop.f32.mrb[0].mxu0
        %v2077 = vadd.f32 %v1852, %v2076
        %v2078 = vpop.f32.mrb[0].mxu0
        %2079 = vmatprep.mubr.f32.mxu0 %v1556
        %2080 = vmatmul.mubr.f32.gmra.mrb[0].mxu0 %v1555
        %v2081 = vpop.f32.mrb[0].mxu0
        %v2082 = vadd.f32 %v1857, %v2081
        %v2083 = vpop.f32.mrb[0].mxu0
        %2084 = vmatprep.mubr.f32.mxu0 %v1560
        %2085 = vmatmul.mubr.f32.gmra.mrb[0].mxu0 %v1559
        %v2086 = vpop.f32.mrb[0].mxu0
        %v2087 = vadd.f32 %v1862, %v2086
        %v2088 = vpop.f32.mrb[0].mxu0
        %2089 = vmatprep.mubr.f32.mxu0 %v1564
        %2090 = vmatmul.mubr.f32.gmra.mrb[0].mxu0 %v1563
        %v2091 = vpop.f32.mrb[0].mxu0
        %v2092 = vadd.f32 %v1867, %v2091
        %v2093 = vpop.f32.mrb[0].mxu0
        %2094 = vmatprep.mubr.f32.mxu0 %v1568
        %2095 = vmatmul.mubr.f32.gmra.mrb[0].mxu0 %v1567
        %v2096 = vpop.f32.mrb[0].mxu0
        %v2097 = vadd.f32 %v1872, %v2096
        %v2098 = vpop.f32.mrb[0].mxu0
        %2099 = vmatprep.mubr.f32.mxu0 %v1572
        %2100 = vmatmul.mubr.f32.gmra.mrb[0].mxu0 %v1571
        %v2101 = vpop.f32.mrb[0].mxu0
        %v2102 = vadd.f32 %v1877, %v2101
        %v2103 = vpop.f32.mrb[0].mxu0
        %2104 = vmatprep.mubr.f32.mxu0 %v1576
        %2105 = vmatmul.mubr.f32.gmra.mrb[0].mxu0 %v1575
        %v2106 = vpop.f32.mrb[0].mxu0
        %v2107 = vadd.f32 %v1882, %v2106
        %v2108 = vpop.f32.mrb[0].mxu0
        %2109 = vmatprep.mubr.f32.mxu0 %v1580
        %2110 = vmatmul.mubr.f32.gmra.mrb[0].mxu0 %v1579
        %v2111 = vpop.f32.mrb[0].mxu0
        %v2112 = vadd.f32 %v1887, %v2111
        %v2113 = vpop.f32.mrb[0].mxu0
        %2114 = vmatprep.mubr.f32.mxu0 %v1584
        %2115 = vmatmul.mubr.f32.gmra.mrb[0].mxu0 %v1583
        %v2116 = vpop.f32.mrb[0].mxu0
        %v2117 = vadd.f32 %v1892, %v2116
        %v2118 = vpop.f32.mrb[0].mxu0
        %2119 = vmatprep.mubr.f32.mxu0 %v1588
        %2120 = vmatmul.mubr.f32.gmra.mrb[0].mxu0 %v1587
        %v2121 = vpop.f32.mrb[0].mxu0
        %v2122 = vadd.f32 %v1897, %v2121
        %v2123 = vpop.f32.mrb[0].mxu0
        %2124 = vmatprep.mubr.f32.mxu0 %v1592
        %2125 = vmatmul.mubr.f32.gmra.mrb[0].mxu0 %v1591
        %v2126 = vpop.f32.mrb[0].mxu0
        %v2127 = vadd.f32 %v1902, %v2126
        %v2128 = vpop.f32.mrb[0].mxu0
        %2129 = vmatprep.mubr.f32.mxu0 %v1596
        %2130 = vmatmul.mubr.f32.gmra.mrb[0].mxu0 %v1595
        %v2131 = vpop.f32.mrb[0].mxu0
        %v2132 = vadd.f32 %v1907, %v2131
        %v2133 = vpop.f32.mrb[0].mxu0
        %2134 = vmatprep.mubr.f32.mxu0 %v1600
        %2135 = vmatmul.mubr.f32.gmra.mrb[0].mxu0 %v1599
        %v2136 = vpop.f32.mrb[0].mxu0
        %v2137 = vadd.f32 %v1912, %v2136
        %v2138 = vpop.f32.mrb[0].mxu0
        %2139 = vmatprep.mubr.f32.mxu0 %v1604
        %2140 = vmatmul.mubr.f32.gmra.mrb[0].mxu0 %v1603
        %v2141 = vpop.f32.mrb[0].mxu0
        %v2142 = vadd.f32 %v1917, %v2141
        %v2143 = vpop.f32.mrb[0].mxu0
        %2144 = vmatprep.mubr.f32.mxu0 %v1608
        %2145 = vmatmul.mubr.f32.gmra.mrb[0].mxu0 %v1607
        %v2146 = vpop.f32.mrb[0].mxu0
        %v2147 = vadd.f32 %v1922, %v2146
        %v2148 = vpop.f32.mrb[0].mxu0
        %2149 = vmatprep.mubr.f32.mxu0 %v1612
        %2150 = vmatmul.mubr.f32.gmra.mrb[0].mxu0 %v1611
        %v2151 = vpop.f32.mrb[0].mxu0
        %v2152 = vadd.f32 %v1927, %v2151
        %v2153 = vpop.f32.mrb[0].mxu0
        %2154 = vmatprep.mubr.f32.mxu0 %v1616
        %2155 = vmatmul.mubr.f32.gmra.mrb[0].mxu0 %v1615
        %v2156 = vpop.f32.mrb[0].mxu0
        %v2157 = vadd.f32 %v1932, %v2156
        %v2158 = vpop.f32.mrb[0].mxu0
        %2159 = vmatprep.mubr.f32.mxu0 %v1620
        %2160 = vmatmul.mubr.f32.gmra.mrb[0].mxu0 %v1619
        %v2161 = vpop.f32.mrb[0].mxu0
        %v2162 = vadd.f32 %v1937, %v2161
        %v2163 = vpop.f32.mrb[0].mxu0
        %2164 = vmatprep.mubr.f32.mxu0 %v1624
        %2165 = vmatmul.mubr.f32.gmra.mrb[0].mxu0 %v1623
        %v2166 = vpop.f32.mrb[0].mxu0
        %v2167 = vadd.f32 %v1942, %v2166
        %v2168 = vpop.f32.mrb[0].mxu0
        %2169 = vmatprep.mubr.f32.mxu0 %v1628
        %2170 = vmatmul.mubr.f32.gmra.mrb[0].mxu0 %v1627
        %v2171 = vpop.f32.mrb[0].mxu0
        %v2172 = vadd.f32 %v1947, %v2171
        %v2173 = vpop.f32.mrb[0].mxu0
        %2174 = vdwg.mxu0
        %v2175 = vadd.f32 %v1629, %v2017
        %v2176 = vadd.f32 %v1630, %v2022
        %v2177 = vadd.f32 %v1631, %v2027
        %v2178 = vadd.f32 %v1632, %v2032
        %v2179 = vadd.f32 %v1633, %v2037
        %v2180 = vadd.f32 %v1634, %v2042
        %v2181 = vadd.f32 %v1635, %v2047
        %v2182 = vadd.f32 %v1636, %v2052
        %v2183 = vadd.f32 %v1637, %v2057
        %v2184 = vadd.f32 %v1638, %v2062
        %v2185 = vadd.f32 %v1639, %v2067
        %v2186 = vadd.f32 %v1640, %v2072
        %v2187 = vadd.f32 %v1641, %v2077
        %v2188 = vadd.f32 %v1642, %v2082
        %v2189 = vadd.f32 %v1643, %v2087
        %v2190 = vadd.f32 %v1644, %v2092
        %v2191 = vadd.f32 %v1645, %v2097
        %v2192 = vadd.f32 %v1646, %v2102
        %v2193 = vadd.f32 %v1647, %v2107
        %v2194 = vadd.f32 %v1648, %v2112
        %v2195 = vadd.f32 %v1649, %v2117
        %v2196 = vadd.f32 %v1650, %v2122
        %v2197 = vadd.f32 %v1651, %v2127
        %v2198 = vadd.f32 %v1652, %v2132
        %v2199 = vadd.f32 %v1653, %v2137
        %v2200 = vadd.f32 %v1654, %v2142
        %v2201 = vadd.f32 %v1655, %v2147
        %v2202 = vadd.f32 %v1656, %v2152
        %v2203 = vadd.f32 %v1657, %v2157
        %v2204 = vadd.f32 %v1658, %v2162
        %v2205 = vadd.f32 %v1659, %v2167
        %v2206 = vadd.f32 %v1660, %v2172
        %2207 = vst [vmem:[#allocation2] sm:$0xff] %v2175
        %2208 = vst [vmem:[#allocation2 + $0x8] sm:$0xff] %v2176
        %2209 = vst [vmem:[#allocation2 + $0x10] sm:$0xff] %v2177
        %2210 = vst [vmem:[#allocation2 + $0x18] sm:$0xff] %v2178
        %2211 = vst [vmem:[#allocation2 + $0x20] sm:$0xff] %v2179
        %2212 = vst [vmem:[#allocation2 + $0x28] sm:$0xff] %v2180
        %2213 = vst [vmem:[#allocation2 + $0x30] sm:$0xff] %v2181
        %2214 = vst [vmem:[#allocation2 + $0x38] sm:$0xff] %v2182
        %2215 = vst [vmem:[#allocation2 + $0x40] sm:$0xff] %v2183
        %2216 = vst [vmem:[#allocation2 + $0x48] sm:$0xff] %v2184
        %2217 = vst [vmem:[#allocation2 + $0x50] sm:$0xff] %v2185
        %2218 = vst [vmem:[#allocation2 + $0x58] sm:$0xff] %v2186
        %2219 = vst [vmem:[#allocation2 + $0x60] sm:$0xff] %v2187
        %2220 = vst [vmem:[#allocation2 + $0x68] sm:$0xff] %v2188
        %2221 = vst [vmem:[#allocation2 + $0x70] sm:$0xff] %v2189
        %2222 = vst [vmem:[#allocation2 + $0x78] sm:$0xff] %v2190
        %2223 = vst [vmem:[#allocation2 + $0x80] sm:$0xff] %v2191
        %2224 = vst [vmem:[#allocation2 + $0x88] sm:$0xff] %v2192
        %2225 = vst [vmem:[#allocation2 + $0x90] sm:$0xff] %v2193
        %2226 = vst [vmem:[#allocation2 + $0x98] sm:$0xff] %v2194
        %2227 = vst [vmem:[#allocation2 + $0xa0] sm:$0xff] %v2195
        %2228 = vst [vmem:[#allocation2 + $0xa8] sm:$0xff] %v2196
        %2229 = vst [vmem:[#allocation2 + $0xb0] sm:$0xff] %v2197
        %2230 = vst [vmem:[#allocation2 + $0xb8] sm:$0xff] %v2198
        %2231 = vst [vmem:[#allocation2 + $0xc0] sm:$0xff] %v2199
        %2232 = vst [vmem:[#allocation2 + $0xc8] sm:$0xff] %v2200
        %2233 = vst [vmem:[#allocation2 + $0xd0] sm:$0xff] %v2201
        %2234 = vst [vmem:[#allocation2 + $0xd8] sm:$0xff] %v2202
        %2235 = vst [vmem:[#allocation2 + $0xe0] sm:$0xff] %v2203
        %2236 = vst [vmem:[#allocation2 + $0xe8] sm:$0xff] %v2204
        %2237 = vst [vmem:[#allocation2 + $0xf0] sm:$0xff] %v2205
        %2238 = vst [vmem:[#allocation2 + $0xf8] sm:$0xff] %v2206
        // Predicated region
        $region45: #{mlp_pallas.1} parent=39 // pred_check
          %p2239 = pneg %p321
        $region46: #{mlp_pallas.1} parent=39 // pred_check_branch
          %2241 = sbr.rel (%p2239) target = $region48
        $region47: #{mlp_pallas.1} parent=39 // pred_region
          %v2242 = vld [vmem:[#allocation2] sm:$0xff]
          %v2243 = vld [vmem:[#allocation2 + $0x8] sm:$0xff]
          %v2244 = vld [vmem:[#allocation2 + $0x10] sm:$0xff]
          %v2245 = vld [vmem:[#allocation2 + $0x18] sm:$0xff]
          %v2246 = vld [vmem:[#allocation2 + $0x20] sm:$0xff]
          %v2247 = vld [vmem:[#allocation2 + $0x28] sm:$0xff]
          %v2248 = vld [vmem:[#allocation2 + $0x30] sm:$0xff]
          %v2249 = vld [vmem:[#allocation2 + $0x38] sm:$0xff]
          %v2250 = vld [vmem:[#allocation2 + $0x40] sm:$0xff]
          %v2251 = vld [vmem:[#allocation2 + $0x48] sm:$0xff]
          %v2252 = vld [vmem:[#allocation2 + $0x50] sm:$0xff]
          %v2253 = vld [vmem:[#allocation2 + $0x58] sm:$0xff]
          %v2254 = vld [vmem:[#allocation2 + $0x60] sm:$0xff]
          %v2255 = vld [vmem:[#allocation2 + $0x68] sm:$0xff]
          %v2256 = vld [vmem:[#allocation2 + $0x70] sm:$0xff]
          %v2257 = vld [vmem:[#allocation2 + $0x78] sm:$0xff]
          %v2258 = vld [vmem:[#allocation2 + $0x80] sm:$0xff]
          %v2259 = vld [vmem:[#allocation2 + $0x88] sm:$0xff]
          %v2260 = vld [vmem:[#allocation2 + $0x90] sm:$0xff]
          %v2261 = vld [vmem:[#allocation2 + $0x98] sm:$0xff]
          %v2262 = vld [vmem:[#allocation2 + $0xa0] sm:$0xff]
          %v2263 = vld [vmem:[#allocation2 + $0xa8] sm:$0xff]
          %v2264 = vld [vmem:[#allocation2 + $0xb0] sm:$0xff]
          %v2265 = vld [vmem:[#allocation2 + $0xb8] sm:$0xff]
          %v2266 = vld [vmem:[#allocation2 + $0xc0] sm:$0xff]
          %v2267 = vld [vmem:[#allocation2 + $0xc8] sm:$0xff]
          %v2268 = vld [vmem:[#allocation2 + $0xd0] sm:$0xff]
          %v2269 = vld [vmem:[#allocation2 + $0xd8] sm:$0xff]
          %v2270 = vld [vmem:[#allocation2 + $0xe0] sm:$0xff]
          %v2271 = vld [vmem:[#allocation2 + $0xe8] sm:$0xff]
          %v2272 = vld [vmem:[#allocation2 + $0xf0] sm:$0xff]
          %v2273 = vld [vmem:[#allocation2 + $0xf8] sm:$0xff]
          %v2274 = vld [vmem:[%s4] sm:$0x1]
          %v2276 = vlaneseq
          %v2277 = vshrl.u32 %v2276, 7
          %v2278 = vsub.s32 0, %v2277
          %v2279 = vrot.slane %v2274, %v2278
          %v2281 = vadd.f32 %v2242, %v2279
          %v2282 = vadd.f32 %v2243, %v2279
          %v2283 = vadd.f32 %v2244, %v2279
          %v2284 = vadd.f32 %v2245, %v2279
          %v2285 = vadd.f32 %v2246, %v2279
          %v2286 = vadd.f32 %v2247, %v2279
          %v2287 = vadd.f32 %v2248, %v2279
          %v2288 = vadd.f32 %v2249, %v2279
          %v2289 = vadd.f32 %v2250, %v2279
          %v2290 = vadd.f32 %v2251, %v2279
          %v2291 = vadd.f32 %v2252, %v2279
          %v2292 = vadd.f32 %v2253, %v2279
          %v2293 = vadd.f32 %v2254, %v2279
          %v2294 = vadd.f32 %v2255, %v2279
          %v2295 = vadd.f32 %v2256, %v2279
          %v2296 = vadd.f32 %v2257, %v2279
          %v2297 = vadd.f32 %v2258, %v2279
          %v2298 = vadd.f32 %v2259, %v2279
          %v2299 = vadd.f32 %v2260, %v2279
          %v2300 = vadd.f32 %v2261, %v2279
          %v2301 = vadd.f32 %v2262, %v2279
          %v2302 = vadd.f32 %v2263, %v2279
          %v2303 = vadd.f32 %v2264, %v2279
          %v2304 = vadd.f32 %v2265, %v2279
          %v2305 = vadd.f32 %v2266, %v2279
          %v2306 = vadd.f32 %v2267, %v2279
          %v2307 = vadd.f32 %v2268, %v2279
          %v2308 = vadd.f32 %v2269, %v2279
          %v2309 = vadd.f32 %v2270, %v2279
          %v2310 = vadd.f32 %v2271, %v2279
          %v2311 = vadd.f32 %v2272, %v2279
          %v2312 = vadd.f32 %v2273, %v2279
          %2313 = vst [vmem:[%s284] sm:$0xff] %v2281
          %2314 = vst [vmem:[%s284 + $0x8] sm:$0xff] %v2282
          %2315 = vst [vmem:[%s284 + $0x10] sm:$0xff] %v2283
          %2316 = vst [vmem:[%s284 + $0x18] sm:$0xff] %v2284
          %2317 = vst [vmem:[%s284 + $0x20] sm:$0xff] %v2285
          %2318 = vst [vmem:[%s284 + $0x28] sm:$0xff] %v2286
          %2319 = vst [vmem:[%s284 + $0x30] sm:$0xff] %v2287
          %2320 = vst [vmem:[%s284 + $0x38] sm:$0xff] %v2288
          %2321 = vst [vmem:[%s284 + $0x40] sm:$0xff] %v2289
          %2322 = vst [vmem:[%s284 + $0x48] sm:$0xff] %v2290
          %2323 = vst [vmem:[%s284 + $0x50] sm:$0xff] %v2291
          %2324 = vst [vmem:[%s284 + $0x58] sm:$0xff] %v2292
          %2325 = vst [vmem:[%s284 + $0x60] sm:$0xff] %v2293
          %2326 = vst [vmem:[%s284 + $0x68] sm:$0xff] %v2294
          %2327 = vst [vmem:[%s284 + $0x70] sm:$0xff] %v2295
          %2328 = vst [vmem:[%s284 + $0x78] sm:$0xff] %v2296
          %2329 = vst [vmem:[%s284 + $0x80] sm:$0xff] %v2297
          %2330 = vst [vmem:[%s284 + $0x88] sm:$0xff] %v2298
          %2331 = vst [vmem:[%s284 + $0x90] sm:$0xff] %v2299
          %2332 = vst [vmem:[%s284 + $0x98] sm:$0xff] %v2300
          %2333 = vst [vmem:[%s284 + $0xa0] sm:$0xff] %v2301
          %2334 = vst [vmem:[%s284 + $0xa8] sm:$0xff] %v2302
          %2335 = vst [vmem:[%s284 + $0xb0] sm:$0xff] %v2303
          %2336 = vst [vmem:[%s284 + $0xb8] sm:$0xff] %v2304
          %2337 = vst [vmem:[%s284 + $0xc0] sm:$0xff] %v2305
          %2338 = vst [vmem:[%s284 + $0xc8] sm:$0xff] %v2306
          %2339 = vst [vmem:[%s284 + $0xd0] sm:$0xff] %v2307
          %2340 = vst [vmem:[%s284 + $0xd8] sm:$0xff] %v2308
          %2341 = vst [vmem:[%s284 + $0xe0] sm:$0xff] %v2309
          %2342 = vst [vmem:[%s284 + $0xe8] sm:$0xff] %v2310
          %2343 = vst [vmem:[%s284 + $0xf0] sm:$0xff] %v2311
          %2344 = vst [vmem:[%s284 + $0xf8] sm:$0xff] %v2312
        $region48: #{mlp_pallas.1} parent=39 // pred_fallthru
          _
        %s2345 = sand.u32 %s161, 1
        %s2346 = sand.u32 %s161, 1
        %s2347 = smul.addr %s2346, 256
        %s2348 = scalar_lea.vmem [#allocation3], %s2347
        // Predicated region
        $region49: #{mlp_pallas.1} parent=39 // pred_check
          %p2349 = pneg %p171
        $region50: #{mlp_pallas.1} parent=39 // pred_check_branch
          %2351 = sbr.rel (%p2349) target = $region52
        $region51: #{mlp_pallas.1} parent=39 // pred_region
          %s2352 = smul.u32 32, %s20
          %s2353 = ssub.s32 50, %s2352
          %p2354 = scmp.lt.s32.totalorder %s2353, 32
          %s2355 = scalar_select %p2354, %s2353, 32
          %s2356 = smul.u32 128, %s2355
          %p2357 = scmp.ne.s32.totalorder 0, %s2356
          %s2358 = smul.addr %s2352, 8
          %s2359 = scalar_lea.vmem %s5, %s2358
          // Predicated region
          $region53: #{mlp_pallas.1} parent=51 // pred_check
            %p2360 = pneg %p2357
          $region54: #{mlp_pallas.1} parent=51 // pred_check_branch
            %2362 = sbr.rel (%p2360) target = $region56
          $region55: #{mlp_pallas.1} parent=51 // pred_region
            // Predicated region
            $region57: #{mlp_pallas.1} parent=55 // pred_check
              _
            $region58: #{mlp_pallas.1} parent=55 // pred_check_branch
              %2364 = sbr.rel (0) target = $region60
            $region59: #{mlp_pallas.1} parent=55 // pred_region
              // Predicated region
              $region79: #{mlp_pallas.1} parent=59 // pred_check
                _
              $region80: #{mlp_pallas.1} parent=59 // pred_check_branch
                %2475 = sbr.rel (0) target = $region82
              $region81: #{mlp_pallas.1} parent=59 // pred_region
                %s2476 = sshrl.u32 %s2355, 5
                // While loop
                $region83: #{mlp_pallas.1} parent=81 // loop_pre_header
                  _
                $region84: #{mlp_pallas.1} parent=81 // loop_header
                  %s2478 = sphi 0, %s2480
                  %p2479 = scmp.ge.s32.totalorder %s2478, %s2476
                  %s2483 = sphi 0, %s2552
                  %s2484 = sphi %s2348, %s2555
                  %s2485 = sphi %s2359, %s2556
                $region85: #{mlp_pallas.1} parent=81 // loop_header_branch
                  %2482 = sbr.rel (%p2479) target = $region89
                $region86: #{mlp_pallas.1} parent=81 // loop_body
                  %v2486 = vld [vmem:[%s2484] sm:$0xff]
                  %2487 = vst [vmem:[%s2485] sm:$0xff] %v2486
                  %v2488 = vld [vmem:[%s2484 + $0x8] sm:$0xff]
                  %2489 = vst [vmem:[%s2485 + $0x8] sm:$0xff] %v2488
                  %v2490 = vld [vmem:[%s2484 + $0x10] sm:$0xff]
                  %2491 = vst [vmem:[%s2485 + $0x10] sm:$0xff] %v2490
                  %v2492 = vld [vmem:[%s2484 + $0x18] sm:$0xff]
                  %2493 = vst [vmem:[%s2485 + $0x18] sm:$0xff] %v2492
                  %v2494 = vld [vmem:[%s2484 + $0x20] sm:$0xff]
                  %2495 = vst [vmem:[%s2485 + $0x20] sm:$0xff] %v2494
                  %v2496 = vld [vmem:[%s2484 + $0x28] sm:$0xff]
                  %2497 = vst [vmem:[%s2485 + $0x28] sm:$0xff] %v2496
                  %v2498 = vld [vmem:[%s2484 + $0x30] sm:$0xff]
                  %2499 = vst [vmem:[%s2485 + $0x30] sm:$0xff] %v2498
                  %v2500 = vld [vmem:[%s2484 + $0x38] sm:$0xff]
                  %2501 = vst [vmem:[%s2485 + $0x38] sm:$0xff] %v2500
                  %v2502 = vld [vmem:[%s2484 + $0x40] sm:$0xff]
                  %2503 = vst [vmem:[%s2485 + $0x40] sm:$0xff] %v2502
                  %v2504 = vld [vmem:[%s2484 + $0x48] sm:$0xff]
                  %2505 = vst [vmem:[%s2485 + $0x48] sm:$0xff] %v2504
                  %v2506 = vld [vmem:[%s2484 + $0x50] sm:$0xff]
                  %2507 = vst [vmem:[%s2485 + $0x50] sm:$0xff] %v2506
                  %v2508 = vld [vmem:[%s2484 + $0x58] sm:$0xff]
                  %2509 = vst [vmem:[%s2485 + $0x58] sm:$0xff] %v2508
                  %v2510 = vld [vmem:[%s2484 + $0x60] sm:$0xff]
                  %2511 = vst [vmem:[%s2485 + $0x60] sm:$0xff] %v2510
                  %v2512 = vld [vmem:[%s2484 + $0x68] sm:$0xff]
                  %2513 = vst [vmem:[%s2485 + $0x68] sm:$0xff] %v2512
                  %v2514 = vld [vmem:[%s2484 + $0x70] sm:$0xff]
                  %2515 = vst [vmem:[%s2485 + $0x70] sm:$0xff] %v2514
                  %v2516 = vld [vmem:[%s2484 + $0x78] sm:$0xff]
                  %2517 = vst [vmem:[%s2485 + $0x78] sm:$0xff] %v2516
                  %v2518 = vld [vmem:[%s2484 + $0x80] sm:$0xff]
                  %2519 = vst [vmem:[%s2485 + $0x80] sm:$0xff] %v2518
                  %v2520 = vld [vmem:[%s2484 + $0x88] sm:$0xff]
                  %2521 = vst [vmem:[%s2485 + $0x88] sm:$0xff] %v2520
                  %v2522 = vld [vmem:[%s2484 + $0x90] sm:$0xff]
                  %2523 = vst [vmem:[%s2485 + $0x90] sm:$0xff] %v2522
                  %v2524 = vld [vmem:[%s2484 + $0x98] sm:$0xff]
                  %2525 = vst [vmem:[%s2485 + $0x98] sm:$0xff] %v2524
                  %v2526 = vld [vmem:[%s2484 + $0xa0] sm:$0xff]
                  %2527 = vst [vmem:[%s2485 + $0xa0] sm:$0xff] %v2526
                  %v2528 = vld [vmem:[%s2484 + $0xa8] sm:$0xff]
                  %2529 = vst [vmem:[%s2485 + $0xa8] sm:$0xff] %v2528
                  %v2530 = vld [vmem:[%s2484 + $0xb0] sm:$0xff]
                  %2531 = vst [vmem:[%s2485 + $0xb0] sm:$0xff] %v2530
                  %v2532 = vld [vmem:[%s2484 + $0xb8] sm:$0xff]
                  %2533 = vst [vmem:[%s2485 + $0xb8] sm:$0xff] %v2532
                  %v2534 = vld [vmem:[%s2484 + $0xc0] sm:$0xff]
                  %2535 = vst [vmem:[%s2485 + $0xc0] sm:$0xff] %v2534
                  %v2536 = vld [vmem:[%s2484 + $0xc8] sm:$0xff]
                  %2537 = vst [vmem:[%s2485 + $0xc8] sm:$0xff] %v2536
                  %v2538 = vld [vmem:[%s2484 + $0xd0] sm:$0xff]
                  %2539 = vst [vmem:[%s2485 + $0xd0] sm:$0xff] %v2538
                  %v2540 = vld [vmem:[%s2484 + $0xd8] sm:$0xff]
                  %2541 = vst [vmem:[%s2485 + $0xd8] sm:$0xff] %v2540
                  %v2542 = vld [vmem:[%s2484 + $0xe0] sm:$0xff]
                  %2543 = vst [vmem:[%s2485 + $0xe0] sm:$0xff] %v2542
                  %v2544 = vld [vmem:[%s2484 + $0xe8] sm:$0xff]
                  %2545 = vst [vmem:[%s2485 + $0xe8] sm:$0xff] %v2544
                  %v2546 = vld [vmem:[%s2484 + $0xf0] sm:$0xff]
                  %2547 = vst [vmem:[%s2485 + $0xf0] sm:$0xff] %v2546
                  %v2548 = vld [vmem:[%s2484 + $0xf8] sm:$0xff]
                  %2549 = vst [vmem:[%s2485 + $0xf8] sm:$0xff] %v2548
                  %s2550 = sadd.s32 1, %s2483
                  %p2551 = scmp.ge.s32.totalorder %s2550, %s2476
                  %s2552 = scalar_select %p2551, 0, %s2550
                  %s2553 = smul.u32 %s2552, 256
                  %s2554 = smul.u32 %s2552, 256
                  %s2555 = scalar_lea.vmem %s2348, %s2553 [#allocation3]
                  %s2556 = scalar_lea.vmem %s2359, %s2554
                $region87: #{mlp_pallas.1} parent=81 // loop_footer
                  %s2480 = sadd.s32 %s2478, 1
                $region88: #{mlp_pallas.1} parent=81 // loop_footer_branch
                  %2477 = sbr.rel target = $region84
                $region89: #{mlp_pallas.1} parent=81 // loop_exit
                  _
                %s2557 = sshrl.u32 %s2355, 5
                %s2558 = sand.u32 %s2355, 31
                %s2559 = smul.u32 %s2557, 32
                %s2560 = smul.u32 8, %s2559
                %s2561 = scalar_lea.vmem %s2348, %s2560 [#allocation3]
                %s2562 = smul.u32 8, %s2559
                %s2563 = scalar_lea.vmem %s2359, %s2562
                // While loop
                $region90: #{mlp_pallas.1} parent=81 // loop_pre_header
                  _
                $region91: #{mlp_pallas.1} parent=81 // loop_header
                  %s2565 = sphi 0, %s2567
                  %p2566 = scmp.ge.s32.totalorder %s2565, %s2558
                  %s2570 = sphi 0, %s2577
                  %s2571 = sphi %s2561, %s2580
                  %s2572 = sphi %s2563, %s2581
                $region92: #{mlp_pallas.1} parent=81 // loop_header_branch
                  %2569 = sbr.rel (%p2566) target = $region96
                $region93: #{mlp_pallas.1} parent=81 // loop_body
                  %v2573 = vld [vmem:[%s2571] sm:$0xff]
                  %2574 = vst [vmem:[%s2572] sm:$0xff] %v2573
                  %s2575 = sadd.s32 1, %s2570
                  %p2576 = scmp.ge.s32.totalorder %s2575, %s2558
                  %s2577 = scalar_select %p2576, 0, %s2575
                  %s2578 = smul.u32 %s2577, 8
                  %s2579 = smul.u32 %s2577, 8
                  %s2580 = scalar_lea.vmem %s2561, %s2578 [#allocation3]
                  %s2581 = scalar_lea.vmem %s2563, %s2579
                $region94: #{mlp_pallas.1} parent=81 // loop_footer
                  %s2567 = sadd.s32 %s2565, 1
                $region95: #{mlp_pallas.1} parent=81 // loop_footer_branch
                  %2564 = sbr.rel target = $region91
                $region96: #{mlp_pallas.1} parent=81 // loop_exit
                  _
              $region82: #{mlp_pallas.1} parent=59 // pred_fallthru
                _
              // Predicated region
              $region97: #{mlp_pallas.1} parent=59 // pred_check
                _
              $region98: #{mlp_pallas.1} parent=59 // pred_check_branch
                %2583 = sbr.rel target = $region100
              $region99: #{mlp_pallas.1} parent=59 // pred_region
                _
              $region100: #{mlp_pallas.1} parent=59 // pred_fallthru
                _
            $region60: #{mlp_pallas.1} parent=55 // pred_fallthru
              _
            // Predicated region
            $region61: #{mlp_pallas.1} parent=55 // pred_check
              _
            $region62: #{mlp_pallas.1} parent=55 // pred_check_branch
              %2366 = sbr.rel target = $region64
            $region63: #{mlp_pallas.1} parent=55 // pred_region
              %s2368 = sshrl.u32 %s2355, 5
              // While loop
              $region65: #{mlp_pallas.1} parent=63 // loop_pre_header
                _
              $region66: #{mlp_pallas.1} parent=63 // loop_header
                %s2370 = sphi 0, %s2372
                %p2371 = scmp.ge.s32.totalorder %s2370, %s2368
                %s2375 = sphi 0, %s2444
                %s2376 = sphi %s2348, %s2447
                %s2377 = sphi %s2359, %s2448
              $region67: #{mlp_pallas.1} parent=63 // loop_header_branch
                %2374 = sbr.rel (%p2371) target = $region71
              $region68: #{mlp_pallas.1} parent=63 // loop_body
                %v2378 = vld [vmem:[%s2376] sm:$0xff]
                %2379 = vst [vmem:[%s2377] sm:$0xff] %v2378
                %v2380 = vld [vmem:[%s2376 + $0x8] sm:$0xff]
                %2381 = vst [vmem:[%s2377 + $0x8] sm:$0xff] %v2380
                %v2382 = vld [vmem:[%s2376 + $0x10] sm:$0xff]
                %2383 = vst [vmem:[%s2377 + $0x10] sm:$0xff] %v2382
                %v2384 = vld [vmem:[%s2376 + $0x18] sm:$0xff]
                %2385 = vst [vmem:[%s2377 + $0x18] sm:$0xff] %v2384
                %v2386 = vld [vmem:[%s2376 + $0x20] sm:$0xff]
                %2387 = vst [vmem:[%s2377 + $0x20] sm:$0xff] %v2386
                %v2388 = vld [vmem:[%s2376 + $0x28] sm:$0xff]
                %2389 = vst [vmem:[%s2377 + $0x28] sm:$0xff] %v2388
                %v2390 = vld [vmem:[%s2376 + $0x30] sm:$0xff]
                %2391 = vst [vmem:[%s2377 + $0x30] sm:$0xff] %v2390
                %v2392 = vld [vmem:[%s2376 + $0x38] sm:$0xff]
                %2393 = vst [vmem:[%s2377 + $0x38] sm:$0xff] %v2392
                %v2394 = vld [vmem:[%s2376 + $0x40] sm:$0xff]
                %2395 = vst [vmem:[%s2377 + $0x40] sm:$0xff] %v2394
                %v2396 = vld [vmem:[%s2376 + $0x48] sm:$0xff]
                %2397 = vst [vmem:[%s2377 + $0x48] sm:$0xff] %v2396
                %v2398 = vld [vmem:[%s2376 + $0x50] sm:$0xff]
                %2399 = vst [vmem:[%s2377 + $0x50] sm:$0xff] %v2398
                %v2400 = vld [vmem:[%s2376 + $0x58] sm:$0xff]
                %2401 = vst [vmem:[%s2377 + $0x58] sm:$0xff] %v2400
                %v2402 = vld [vmem:[%s2376 + $0x60] sm:$0xff]
                %2403 = vst [vmem:[%s2377 + $0x60] sm:$0xff] %v2402
                %v2404 = vld [vmem:[%s2376 + $0x68] sm:$0xff]
                %2405 = vst [vmem:[%s2377 + $0x68] sm:$0xff] %v2404
                %v2406 = vld [vmem:[%s2376 + $0x70] sm:$0xff]
                %2407 = vst [vmem:[%s2377 + $0x70] sm:$0xff] %v2406
                %v2408 = vld [vmem:[%s2376 + $0x78] sm:$0xff]
                %2409 = vst [vmem:[%s2377 + $0x78] sm:$0xff] %v2408
                %v2410 = vld [vmem:[%s2376 + $0x80] sm:$0xff]
                %2411 = vst [vmem:[%s2377 + $0x80] sm:$0xff] %v2410
                %v2412 = vld [vmem:[%s2376 + $0x88] sm:$0xff]
                %2413 = vst [vmem:[%s2377 + $0x88] sm:$0xff] %v2412
                %v2414 = vld [vmem:[%s2376 + $0x90] sm:$0xff]
                %2415 = vst [vmem:[%s2377 + $0x90] sm:$0xff] %v2414
                %v2416 = vld [vmem:[%s2376 + $0x98] sm:$0xff]
                %2417 = vst [vmem:[%s2377 + $0x98] sm:$0xff] %v2416
                %v2418 = vld [vmem:[%s2376 + $0xa0] sm:$0xff]
                %2419 = vst [vmem:[%s2377 + $0xa0] sm:$0xff] %v2418
                %v2420 = vld [vmem:[%s2376 + $0xa8] sm:$0xff]
                %2421 = vst [vmem:[%s2377 + $0xa8] sm:$0xff] %v2420
                %v2422 = vld [vmem:[%s2376 + $0xb0] sm:$0xff]
                %2423 = vst [vmem:[%s2377 + $0xb0] sm:$0xff] %v2422
                %v2424 = vld [vmem:[%s2376 + $0xb8] sm:$0xff]
                %2425 = vst [vmem:[%s2377 + $0xb8] sm:$0xff] %v2424
                %v2426 = vld [vmem:[%s2376 + $0xc0] sm:$0xff]
                %2427 = vst [vmem:[%s2377 + $0xc0] sm:$0xff] %v2426
                %v2428 = vld [vmem:[%s2376 + $0xc8] sm:$0xff]
                %2429 = vst [vmem:[%s2377 + $0xc8] sm:$0xff] %v2428
                %v2430 = vld [vmem:[%s2376 + $0xd0] sm:$0xff]
                %2431 = vst [vmem:[%s2377 + $0xd0] sm:$0xff] %v2430
                %v2432 = vld [vmem:[%s2376 + $0xd8] sm:$0xff]
                %2433 = vst [vmem:[%s2377 + $0xd8] sm:$0xff] %v2432
                %v2434 = vld [vmem:[%s2376 + $0xe0] sm:$0xff]
                %2435 = vst [vmem:[%s2377 + $0xe0] sm:$0xff] %v2434
                %v2436 = vld [vmem:[%s2376 + $0xe8] sm:$0xff]
                %2437 = vst [vmem:[%s2377 + $0xe8] sm:$0xff] %v2436
                %v2438 = vld [vmem:[%s2376 + $0xf0] sm:$0xff]
                %2439 = vst [vmem:[%s2377 + $0xf0] sm:$0xff] %v2438
                %v2440 = vld [vmem:[%s2376 + $0xf8] sm:$0xff]
                %2441 = vst [vmem:[%s2377 + $0xf8] sm:$0xff] %v2440
                %s2442 = sadd.s32 1, %s2375
                %p2443 = scmp.ge.s32.totalorder %s2442, %s2368
                %s2444 = scalar_select %p2443, 0, %s2442
                %s2445 = smul.u32 %s2444, 256
                %s2446 = smul.u32 %s2444, 256
                %s2447 = scalar_lea.vmem %s2348, %s2445 [#allocation3]
                %s2448 = scalar_lea.vmem %s2359, %s2446
              $region69: #{mlp_pallas.1} parent=63 // loop_footer
                %s2372 = sadd.s32 %s2370, 1
              $region70: #{mlp_pallas.1} parent=63 // loop_footer_branch
                %2369 = sbr.rel target = $region66
              $region71: #{mlp_pallas.1} parent=63 // loop_exit
                _
              %s2449 = sshrl.u32 %s2355, 5
              %s2450 = sand.u32 %s2355, 31
              %s2451 = smul.u32 %s2449, 32
              %s2452 = smul.u32 8, %s2451
              %s2453 = scalar_lea.vmem %s2348, %s2452 [#allocation3]
              %s2454 = smul.u32 8, %s2451
              %s2455 = scalar_lea.vmem %s2359, %s2454
              // While loop
              $region72: #{mlp_pallas.1} parent=63 // loop_pre_header
                _
              $region73: #{mlp_pallas.1} parent=63 // loop_header
                %s2457 = sphi 0, %s2459
                %p2458 = scmp.ge.s32.totalorder %s2457, %s2450
                %s2462 = sphi 0, %s2469
                %s2463 = sphi %s2453, %s2472
                %s2464 = sphi %s2455, %s2473
              $region74: #{mlp_pallas.1} parent=63 // loop_header_branch
                %2461 = sbr.rel (%p2458) target = $region78
              $region75: #{mlp_pallas.1} parent=63 // loop_body
                %v2465 = vld [vmem:[%s2463] sm:$0xff]
                %2466 = vst [vmem:[%s2464] sm:$0xff] %v2465
                %s2467 = sadd.s32 1, %s2462
                %p2468 = scmp.ge.s32.totalorder %s2467, %s2450
                %s2469 = scalar_select %p2468, 0, %s2467
                %s2470 = smul.u32 %s2469, 8
                %s2471 = smul.u32 %s2469, 8
                %s2472 = scalar_lea.vmem %s2453, %s2470 [#allocation3]
                %s2473 = scalar_lea.vmem %s2455, %s2471
              $region76: #{mlp_pallas.1} parent=63 // loop_footer
                %s2459 = sadd.s32 %s2457, 1
              $region77: #{mlp_pallas.1} parent=63 // loop_footer_branch
                %2456 = sbr.rel target = $region73
              $region78: #{mlp_pallas.1} parent=63 // loop_exit
                _
            $region64: #{mlp_pallas.1} parent=55 // pred_fallthru
              _
          $region56: #{mlp_pallas.1} parent=51 // pred_fallthru
            _
          %2584 = vnop
        $region52: #{mlp_pallas.1} parent=39 // pred_fallthru
          _
      $region40: #{mlp_pallas.1} parent=5 // pred_fallthru
        _
      %p2585 = scmp.le.s32.totalorder 2, %s11
      // Predicated region
      $region101: #{mlp_pallas.1} parent=5 // pred_check
        %p2586 = pneg %p2585
      $region102: #{mlp_pallas.1} parent=5 // pred_check_branch
        %2588 = sbr.rel (%p2586) target = $region104
      $region103: #{mlp_pallas.1} parent=5 // pred_region
        %s2589 = ssub.s32 %s11, 2
        // Predicated region
        $region105: #{mlp_pallas.1} parent=103 // pred_check
          %p2590 = pneg %p177
        $region106: #{mlp_pallas.1} parent=103 // pred_check_branch
          %2592 = sbr.rel (%p2590) target = $region108
        $region107: #{mlp_pallas.1} parent=103 // pred_region
          %s2593 = sand.u32 %s162, 1
          %s2594 = sand.u32 %s162, 1
          %s2595 = smul.addr %s2594, 256
          %s2596 = scalar_lea.vmem [#allocation3], %s2595
        $region108: #{mlp_pallas.1} parent=103 // pred_fallthru
          _
      $region104: #{mlp_pallas.1} parent=5 // pred_fallthru
        _
    $region6: #{mlp_pallas.1} parent=1 // loop_footer
      %s15 = sadd.s32 1, %s11
    $region7: #{mlp_pallas.1} parent=1 // loop_footer_branch
      %10 = sbr.rel target = $region3
    $region8: #{mlp_pallas.1} parent=1 // loop_exit
      _

// kernel: mlp_pallas.1
$region0: #{mlp_pallas.1}
  #allocation0 [shape = 'u32[]', space=smem, size = 0x4, offset = 0x4, fixed_abs, tag = 'smem constant byte address 0x4 - core index']
  #allocation1 [shape = 'u32[144,128]{1,0:T(1,128)}', space=vmem, size = 0x12000, scoped, tag = 'internal scratch']
  #allocation2 [shape = 'f32[256,128]{1,0:T(8,128)}', space=vmem, size = 0x20000, scoped, tag = 'scratch operand']
  %s0 = inlined_call_operand.vmem [shape: f32[394,128], index: 0, kind: input, shape index: {}]
  %s1 = inlined_call_operand.vmem [shape: f32[128,512], index: 1, kind: input, shape index: {}]
  %s2 = inlined_call_operand.vmem [shape: f32[1,512], index: 2, kind: input, shape index: {}]
  %s3 = inlined_call_operand.vmem [shape: f32[512,128], index: 3, kind: input, shape index: {}]
  %s4 = inlined_call_operand.vmem [shape: f32[1,128], index: 4, kind: input, shape index: {}]
  %s5 = inlined_call_operand.vmem [shape: f32[394,128], index: 5, kind: output, shape index: {}]
  %s6 = sld [smem:[#allocation0]]
  $region109: #{mlp_pallas.1} parent=0
    _
  %s8 = ssub.s32 1, %s6
  %s9 = scalar_select 0, %s8, %s6
  $region1: #{mlp_pallas.1} parent=0
    #allocation3 [shape = 'u8[262144]{0}', space=vmem, size = 0x40000, scoped, tag = 'output window, operand 0']
    loop: start=0, step=1, limit=4
    $region2: #{mlp_pallas.1} parent=1 // loop_pre_header
      _
    $region3: #{mlp_pallas.1} parent=1 // loop_header
      %s11 = sphi 0, %s15
      %p12 = scmp.ge.s32.totalorder %s11, 4
      %s18 = sphi 0, %s30
      %s19 = sphi 0, %s26
      %s20 = sphi 0, %s18
      %s21 = sphi 0, %s19
      %s22 = sphi 0, %s20
      %s23 = sphi 0, %s21
      %s33 = sphi 0, %s35
      %s36 = sphi 0, %s33
      %s37 = sphi 0, %s36
      %s53 = sphi 0, %s37
      %s59 = sphi 0, %s61
      %s62 = sphi 0, %s59
      %s63 = sphi 0, %s62
      %s79 = sphi 0, %s63
      %s85 = sphi 0, %s87
      %s88 = sphi 0, %s85
      %s89 = sphi 0, %s88
      %s105 = sphi 0, %s89
      %s111 = sphi 0, %s113
      %s114 = sphi 0, %s111
      %s115 = sphi 0, %s114
      %s131 = sphi 0, %s115
      %s135 = sphi 0, %s135
      %s137 = sphi 0, %s135
      %s138 = sphi 0, %s137
      %s152 = sphi 0, %s138
      %s158 = sphi 0, %s160
      %s161 = sphi 0, %s158
      %s162 = sphi 0, %s161
      %s178 = sphi 0, %s162
    $region4: #{mlp_pallas.1} parent=1 // loop_header_branch
      %14 = sbr.rel (%p12) target = $region8
    $region5: #{mlp_pallas.1} parent=1 // loop_body
      %s16 = ssub.s32 %s11, 1
      %s17 = ssub.s32 %s11, 2
      %s24 = sadd.s32 1, %s19
      %p25 = scmp.ge.s32.totalorder %s24, 1
      %s26 = scalar_select %p25, 0, %s24
      %s27 = sadd.s32 1, %s18
      %s28 = scalar_select %p25, %s27, %s18
      %p29 = scmp.ge.s32.totalorder %s28, 2
      %s30 = scalar_select %p29, 0, %s28
      %s31 = ssub.s32 %s18, %s30
      %p32 = scmp.eq.s32.totalorder %s31, 0
      %s34 = sadd.s32 %s33, 1
      %s35 = scalar_select %p32, %s33, %s34
      %p38 = pneg %p32
      %p39 = scmp.eq.s32.totalorder %s11, 1
      %p40 = por %p38, %p39
      %p41 = scmp.ne.s32.totalorder %s33, %s36
      %p42 = scmp.eq.s32.totalorder %s11, 0
      %p43 = por %p41, %p42
      %p44 = scmp.ne.s32.totalorder %s33, %s36
      %p45 = scmp.eq.s32.totalorder %s16, 1
      %p46 = por %p44, %p45
      %p47 = scmp.ne.s32.totalorder %s36, %s37
      %p48 = scmp.eq.s32.totalorder %s16, 0
      %p49 = por %p47, %p48
      %p50 = scmp.ne.s32.totalorder %s36, %s37
      %p51 = scmp.eq.s32.totalorder %s17, 1
      %p52 = por %p50, %p51
      %p54 = scmp.ne.s32.totalorder %s37, %s53
      %p55 = scmp.eq.s32.totalorder %s17, 0
      %p56 = por %p54, %p55
      %s57 = ssub.s32 %s19, %s26
      %p58 = scmp.eq.s32.totalorder %s57, 0
      %s60 = sadd.s32 %s59, 1
      %s61 = scalar_select %p58, %s59, %s60
      %p64 = pneg %p58
      %p65 = scmp.eq.s32.totalorder %s11, 1
      %p66 = por %p64, %p65
      %p67 = scmp.ne.s32.totalorder %s59, %s62
      %p68 = scmp.eq.s32.totalorder %s11, 0
      %p69 = por %p67, %p68
      %p70 = scmp.ne.s32.totalorder %s59, %s62
      %p71 = scmp.eq.s32.totalorder %s16, 1
      %p72 = por %p70, %p71
      %p73 = scmp.ne.s32.totalorder %s62, %s63
      %p74 = scmp.eq.s32.totalorder %s16, 0
      %p75 = por %p73, %p74
      %p76 = scmp.ne.s32.totalorder %s62, %s63
      %p77 = scmp.eq.s32.totalorder %s17, 1
      %p78 = por %p76, %p77
      %p80 = scmp.ne.s32.totalorder %s63, %s79
      %p81 = scmp.eq.s32.totalorder %s17, 0
      %p82 = por %p80, %p81
      %s83 = ssub.s32 %s19, %s26
      %p84 = scmp.eq.s32.totalorder %s83, 0
      %s86 = sadd.s32 %s85, 1
      %s87 = scalar_select %p84, %s85, %s86
      %p90 = pneg %p84
      %p91 = scmp.eq.s32.totalorder %s11, 1
      %p92 = por %p90, %p91
      %p93 = scmp.ne.s32.totalorder %s85, %s88
      %p94 = scmp.eq.s32.totalorder %s11, 0
      %p95 = por %p93, %p94
      %p96 = scmp.ne.s32.totalorder %s85, %s88
      %p97 = scmp.eq.s32.totalorder %s16, 1
      %p98 = por %p96, %p97
      %p99 = scmp.ne.s32.totalorder %s88, %s89
      %p100 = scmp.eq.s32.totalorder %s16, 0
      %p101 = por %p99, %p100
      %p102 = scmp.ne.s32.totalorder %s88, %s89
      %p103 = scmp.eq.s32.totalorder %s17, 1
      %p104 = por %p102, %p103
      %p106 = scmp.ne.s32.totalorder %s89, %s105
      %p107 = scmp.eq.s32.totalorder %s17, 0
      %p108 = por %p106, %p107
      %s109 = ssub.s32 %s19, %s26
      %p110 = scmp.eq.s32.totalorder %s109, 0
      %s112 = sadd.s32 %s111, 1
      %s113 = scalar_select %p110, %s111, %s112
      %p116 = pneg %p110
      %p117 = scmp.eq.s32.totalorder %s11, 1
      %p118 = por %p116, %p117
      %p119 = scmp.ne.s32.totalorder %s111, %s114
      %p120 = scmp.eq.s32.totalorder %s11, 0
      %p121 = por %p119, %p120
      %p122 = scmp.ne.s32.totalorder %s111, %s114
      %p123 = scmp.eq.s32.totalorder %s16, 1
      %p124 = por %p122, %p123
      %p125 = scmp.ne.s32.totalorder %s114, %s115
      %p126 = scmp.eq.s32.totalorder %s16, 0
      %p127 = por %p125, %p126
      %p128 = scmp.ne.s32.totalorder %s114, %s115
      %p129 = scmp.eq.s32.totalorder %s17, 1
      %p130 = por %p128, %p129
      %p132 = scmp.ne.s32.totalorder %s115, %s131
      %p133 = scmp.eq.s32.totalorder %s17, 0
      %p134 = por %p132, %p133
      %s136 = sadd.s32 %s135, 1
      %p139 = scmp.eq.s32.totalorder %s11, 1
      %p140 = scmp.ne.s32.totalorder %s135, %s137
      %p141 = scmp.eq.s32.totalorder %s11, 0
      %p142 = por %p140, %p141
      %p143 = scmp.ne.s32.totalorder %s135, %s137
      %p144 = scmp.eq.s32.totalorder %s16, 1
      %p145 = por %p143, %p144
      %p146 = scmp.ne.s32.totalorder %s137, %s138
      %p147 = scmp.eq.s32.totalorder %s16, 0
      %p148 = por %p146, %p147
      %p149 = scmp.ne.s32.totalorder %s137, %s138
      %p150 = scmp.eq.s32.totalorder %s17, 1
      %p151 = por %p149, %p150
      %p153 = scmp.ne.s32.totalorder %s138, %s152
      %p154 = scmp.eq.s32.totalorder %s17, 0
      %p155 = por %p153, %p154
      %s156 = ssub.s32 %s18, %s30
      %p157 = scmp.eq.s32.totalorder %s156, 0
      %s159 = sadd.s32 %s158, 1
      %s160 = scalar_select %p157, %s158, %s159
      %p163 = pneg %p157
      %p164 = scmp.eq.s32.totalorder %s11, 1
      %p165 = por %p163, %p164
      %p166 = scmp.ne.s32.totalorder %s158, %s161
      %p167 = scmp.eq.s32.totalorder %s11, 0
      %p168 = por %p166, %p167
      %p169 = scmp.ne.s32.totalorder %s158, %s161
      %p170 = scmp.eq.s32.totalorder %s16, 1
      %p171 = por %p169, %p170
      %p172 = scmp.ne.s32.totalorder %s161, %s162
      %p173 = scmp.eq.s32.totalorder %s16, 0
      %p174 = por %p172, %p173
      %p175 = scmp.ne.s32.totalorder %s161, %s162
      %p176 = scmp.eq.s32.totalorder %s17, 1
      %p177 = por %p175, %p176
      %p179 = scmp.ne.s32.totalorder %s162, %s178
      %p180 = scmp.eq.s32.totalorder %s17, 0
      %p181 = por %p179, %p180
      %p182 = scmp.le.s32.totalorder 1, %s11
      %p183 = scmp.lt.s32.totalorder %s11, 3
      %p184 = pnand %p182, %p183
      %p185 = pneg %p184
      // Predicated region
      $region9: #{mlp_pallas.1} parent=5 // pred_check
        _
      $region10: #{mlp_pallas.1} parent=5 // pred_check_branch
        %187 = sbr.rel (%p184) target = $region12
      $region11: #{mlp_pallas.1} parent=5 // pred_region
        %s188 = ssub.s32 %s11, 1
        // Predicated region
        $region13: #{mlp_pallas.1} parent=11 // pred_check
          %p189 = pneg %p75
        $region14: #{mlp_pallas.1} parent=11 // pred_check_branch
          %191 = sbr.rel (%p189) target = $region16
        $region15: #{mlp_pallas.1} parent=11 // pred_region
          %s192 = smul.u32 4, %s21
          %p193 = scmp.lt.s32.totalorder %s192, 3
          %s194 = scalar_select %p193, %s192, 3
          %s195 = smul.addr %s194, 8
          %s196 = scalar_lea.vmem %s1, %s195
          %s197 = smul.u32 4, %s21
        $region16: #{mlp_pallas.1} parent=11 // pred_fallthru
          _
        // Predicated region
        $region17: #{mlp_pallas.1} parent=11 // pred_check
          %p198 = pneg %p101
        $region18: #{mlp_pallas.1} parent=11 // pred_check_branch
          %200 = sbr.rel (%p198) target = $region20
        $region19: #{mlp_pallas.1} parent=11 // pred_region
          %s201 = smul.u32 4, %s21
          %p202 = scmp.lt.s32.totalorder %s201, 3
          %s203 = scalar_select %p202, %s201, 3
          %s204 = scalar_lea.vmem %s2, %s203
          %s205 = smul.u32 4, %s21
        $region20: #{mlp_pallas.1} parent=11 // pred_fallthru
          _
        // Predicated region
        $region21: #{mlp_pallas.1} parent=11 // pred_check
          %p206 = pneg %p127
        $region22: #{mlp_pallas.1} parent=11 // pred_check_branch
          %208 = sbr.rel (%p206) target = $region24
        $region23: #{mlp_pallas.1} parent=11 // pred_region
          %s209 = smul.u32 64, %s21
          %p210 = scmp.lt.s32.totalorder %s209, 63
          %s211 = scalar_select %p210, %s209, 63
          %s212 = smul.addr %s211, 8
          %s213 = scalar_lea.vmem %s3, %s212
          %s214 = smul.u32 64, %s21
        $region24: #{mlp_pallas.1} parent=11 // pred_fallthru
          _
        // Predicated region
        $region25: #{mlp_pallas.1} parent=11 // pred_check
          %p215 = pneg %p148
        $region26: #{mlp_pallas.1} parent=11 // pred_check_branch
          %217 = sbr.rel (%p215) target = $region28
        $region27: #{mlp_pallas.1} parent=11 // pred_region
          _
        $region28: #{mlp_pallas.1} parent=11 // pred_fallthru
          _
      $region12: #{mlp_pallas.1} parent=5 // pred_fallthru
        _
      %p218 = scmp.lt.s32.totalorder %s11, 2
      // Predicated region
      $region29: #{mlp_pallas.1} parent=5 // pred_check
        %p219 = pneg %p218
      $region30: #{mlp_pallas.1} parent=5 // pred_check_branch
        %221 = sbr.rel (%p219) target = $region32
      $region31: #{mlp_pallas.1} parent=5 // pred_region
        // Predicated region
        $region33: #{mlp_pallas.1} parent=31 // pred_check
          %p222 = pneg %p43
        $region34: #{mlp_pallas.1} parent=31 // pred_check_branch
          %224 = sbr.rel (%p222) target = $region36
        $region35: #{mlp_pallas.1} parent=31 // pred_region
          %s225 = smul.u32 32, %s18
          %s226 = ssub.s32 50, %s225
          %p227 = scmp.lt.s32.totalorder %s226, 32
          %s228 = scalar_select %p227, %s226, 32
          %s229 = smul.u32 128, %s228
          %p230 = scmp.lt.s32.totalorder %s225, 49
          %s231 = scalar_select %p230, %s225, 49
          %s232 = smul.addr %s231, 8
          %s233 = scalar_lea.vmem %s0, %s232
          %s234 = smul.u32 32, %s18
          %s235 = ssub.s32 50, %s234
          %p236 = scmp.lt.s32.totalorder %s235, 32
          %s237 = scalar_select %p236, %s235, 32
          %s238 = smul.u32 128, %s237
        $region36: #{mlp_pallas.1} parent=31 // pred_fallthru
          _
      $region32: #{mlp_pallas.1} parent=5 // pred_fallthru
        _
      %p239 = scmp.le.s32.totalorder 1, %s11
      %p240 = scmp.lt.s32.totalorder %s11, 3
      %p241 = pnand %p239, %p240
      %p242 = pneg %p241
      // Predicated region
      $region37: #{mlp_pallas.1} parent=5 // pred_check
        _
      $region38: #{mlp_pallas.1} parent=5 // pred_check_branch
        %244 = sbr.rel (%p241) target = $region40
      $region39: #{mlp_pallas.1} parent=5 // pred_region
        %s245 = ssub.s32 %s11, 1
        %s246 = smul.u32 32, %s20
        %s247 = ssub.s32 50, %s246
        %p248 = scmp.lt.s32.totalorder %s247, 32
        %s249 = scalar_select %p248, %s247, 32
        %s250 = smul.u32 128, %s249
        %p251 = scmp.lt.s32.totalorder %s246, 49
        %s252 = scalar_select %p251, %s246, 49
        %s253 = smul.addr %s252, 8
        %s254 = scalar_lea.vmem %s0, %s253
        %p255 = pneg %p49
        %p256 = pneg %p46
        %s257 = smul.u32 4, %s21
        %p258 = scmp.lt.s32.totalorder %s257, 3
        %s259 = scalar_select %p258, %s257, 3
        %s260 = smul.addr %s259, 8
        %s261 = scalar_lea.vmem %s1, %s260
        %p262 = pneg %p75
        %p263 = pneg %p72
        %s264 = smul.u32 4, %s21
        %p265 = scmp.lt.s32.totalorder %s264, 3
        %s266 = scalar_select %p265, %s264, 3
        %s267 = scalar_lea.vmem %s2, %s266
        %p268 = pneg %p101
        %p269 = pneg %p98
        %s270 = smul.u32 64, %s21
        %p271 = scmp.lt.s32.totalorder %s270, 63
        %s272 = scalar_select %p271, %s270, 63
        %s273 = smul.addr %s272, 8
        %s274 = scalar_lea.vmem %s3, %s273
        %p275 = pneg %p127
        %p276 = pneg %p124
        %p277 = pneg %p148
        %p278 = pneg %p145
        %p279 = pneg %p174
        %p280 = pneg %p171
        %s281 = sand.u32 %s161, 1
        %s282 = sand.u32 %s161, 1
        %s283 = smul.addr %s282, 256
        %s284 = scalar_lea.vmem [#allocation3], %s283
        %s285 = smul.u32 32, %s20
        %s286 = ssub.s32 50, %s285
        %p287 = scmp.lt.s32.totalorder %s286, 32
        %s288 = scalar_select %p287, %s286, 32
        %s289 = smul.u32 128, %s288
        %p290 = scmp.lt.s32.totalorder %s285, 49
        %s291 = scalar_select %p290, %s285, 49
        %s292 = smul.addr %s291, 8
        %s293 = scalar_lea.vmem %s0, %s292
        %s294 = smul.u32 32, %s20
        %s295 = ssub.s32 50, %s294
        %p296 = scmp.lt.s32.totalorder %s295, 32
        %s297 = scalar_select %p296, %s295, 32
        %s298 = smul.u32 128, %s297
        %s299 = smul.u32 4, %s21
        %p300 = scmp.lt.s32.totalorder %s299, 3
        %s301 = scalar_select %p300, %s299, 3
        %s302 = smul.addr %s301, 8
        %s303 = scalar_lea.vmem %s1, %s302
        %s304 = smul.u32 4, %s21
        %s305 = smul.u32 4, %s21
        %p306 = scmp.lt.s32.totalorder %s305, 3
        %s307 = scalar_select %p306, %s305, 3
        %s308 = scalar_lea.vmem %s2, %s307
        %s309 = smul.u32 4, %s21
        %s310 = smul.u32 64, %s21
        %p311 = scmp.lt.s32.totalorder %s310, 63
        %s312 = scalar_select %p311, %s310, 63
        %s313 = smul.addr %s312, 8
        %s314 = scalar_lea.vmem %s3, %s313
        %s315 = smul.u32 64, %s21
        %s316 = smul.u32 32, %s20
        %s317 = ssub.s32 50, %s316
        %p318 = scmp.lt.s32.totalorder %s317, 32
        %s319 = scalar_select %p318, %s317, 32
        %s320 = smul.u32 128, %s319
        %p321 = scmp.eq.s32.totalorder %s21, 0
        // Predicated region
        $region41: #{mlp_pallas.1} parent=39 // pred_check
          %p322 = pneg %p321
        $region42: #{mlp_pallas.1} parent=39 // pred_check_branch
          %324 = sbr.rel (%p322) target = $region44
        $region43: #{mlp_pallas.1} parent=39 // pred_region
          %325 = vst [vmem:[#allocation2] sm:$0xff] 0.0
          %326 = vst [vmem:[#allocation2 + $0x8] sm:$0xff] 0.0
          %327 = vst [vmem:[#allocation2 + $0x10] sm:$0xff] 0.0
          %328 = vst [vmem:[#allocation2 + $0x18] sm:$0xff] 0.0
          %329 = vst [vmem:[#allocation2 + $0x20] sm:$0xff] 0.0
          %330 = vst [vmem:[#allocation2 + $0x28] sm:$0xff] 0.0
          %331 = vst [vmem:[#allocation2 + $0x30] sm:$0xff] 0.0
          %332 = vst [vmem:[#allocation2 + $0x38] sm:$0xff] 0.0
          %333 = vst [vmem:[#allocation2 + $0x40] sm:$0xff] 0.0
          %334 = vst [vmem:[#allocation2 + $0x48] sm:$0xff] 0.0
          %335 = vst [vmem:[#allocation2 + $0x50] sm:$0xff] 0.0
          %336 = vst [vmem:[#allocation2 + $0x58] sm:$0xff] 0.0
          %337 = vst [vmem:[#allocation2 + $0x60] sm:$0xff] 0.0
          %338 = vst [vmem:[#allocation2 + $0x68] sm:$0xff] 0.0
          %339 = vst [vmem:[#allocation2 + $0x70] sm:$0xff] 0.0
          %340 = vst [vmem:[#allocation2 + $0x78] sm:$0xff] 0.0
          %341 = vst [vmem:[#allocation2 + $0x80] sm:$0xff] 0.0
          %342 = vst [vmem:[#allocation2 + $0x88] sm:$0xff] 0.0
          %343 = vst [vmem:[#allocation2 + $0x90] sm:$0xff] 0.0
          %344 = vst [vmem:[#allocation2 + $0x98] sm:$0xff] 0.0
          %345 = vst [vmem:[#allocation2 + $0xa0] sm:$0xff] 0.0
          %346 = vst [vmem:[#allocation2 + $0xa8] sm:$0xff] 0.0
          %347 = vst [vmem:[#allocation2 + $0xb0] sm:$0xff] 0.0
          %348 = vst [vmem:[#allocation2 + $0xb8] sm:$0xff] 0.0
          %349 = vst [vmem:[#allocation2 + $0xc0] sm:$0xff] 0.0
          %350 = vst [vmem:[#allocation2 + $0xc8] sm:$0xff] 0.0
          %351 = vst [vmem:[#allocation2 + $0xd0] sm:$0xff] 0.0
          %352 = vst [vmem:[#allocation2 + $0xd8] sm:$0xff] 0.0
          %353 = vst [vmem:[#allocation2 + $0xe0] sm:$0xff] 0.0
          %354 = vst [vmem:[#allocation2 + $0xe8] sm:$0xff] 0.0
          %355 = vst [vmem:[#allocation2 + $0xf0] sm:$0xff] 0.0
          %356 = vst [vmem:[#allocation2 + $0xf8] sm:$0xff] 0.0
        $region44: #{mlp_pallas.1} parent=39 // pred_fallthru
          _
        %v357 = vld [vmem:[%s293] sm:$0xff]
        %v358 = vld [vmem:[%s293 + $0x8] sm:$0xff]
        %v359 = vld [vmem:[%s293 + $0x10] sm:$0xff]
        %v360 = vld [vmem:[%s293 + $0x18] sm:$0xff]
        %v361 = vld [vmem:[%s293 + $0x20] sm:$0xff]
        %v362 = vld [vmem:[%s293 + $0x28] sm:$0xff]
        %v363 = vld [vmem:[%s293 + $0x30] sm:$0xff]
        %v364 = vld [vmem:[%s293 + $0x38] sm:$0xff]
        %v365 = vld [vmem:[%s293 + $0x40] sm:$0xff]
        %v366 = vld [vmem:[%s293 + $0x48] sm:$0xff]
        %v367 = vld [vmem:[%s293 + $0x50] sm:$0xff]
        %v368 = vld [vmem:[%s293 + $0x58] sm:$0xff]
        %v369 = vld [vmem:[%s293 + $0x60] sm:$0xff]
        %v370 = vld [vmem:[%s293 + $0x68] sm:$0xff]
        %v371 = vld [vmem:[%s293 + $0x70] sm:$0xff]
        %v372 = vld [vmem:[%s293 + $0x78] sm:$0xff]
        %v373 = vld [vmem:[%s293 + $0x80] sm:$0xff]
        %v374 = vld [vmem:[%s293 + $0x88] sm:$0xff]
        %v375 = vld [vmem:[%s293 + $0x90] sm:$0xff]
        %v376 = vld [vmem:[%s293 + $0x98] sm:$0xff]
        %v377 = vld [vmem:[%s293 + $0xa0] sm:$0xff]
        %v378 = vld [vmem:[%s293 + $0xa8] sm:$0xff]
        %v379 = vld [vmem:[%s293 + $0xb0] sm:$0xff]
        %v380 = vld [vmem:[%s293 + $0xb8] sm:$0xff]
        %v381 = vld [vmem:[%s293 + $0xc0] sm:$0xff]
        %v382 = vld [vmem:[%s293 + $0xc8] sm:$0xff]
        %v383 = vld [vmem:[%s293 + $0xd0] sm:$0xff]
        %v384 = vld [vmem:[%s293 + $0xd8] sm:$0xff]
        %v385 = vld [vmem:[%s293 + $0xe0] sm:$0xff]
        %v386 = vld [vmem:[%s293 + $0xe8] sm:$0xff]
        %v387 = vld [vmem:[%s293 + $0xf0] sm:$0xff]
        %v388 = vld [vmem:[%s293 + $0xf8] sm:$0xff]
        %v389 = vld [vmem:[%s303] sm:$0xff]
        %v390 = vld [vmem:[%s303 + $0x8] sm:$0xff]
        %v391 = vld [vmem:[%s303 + $0x10] sm:$0xff]
        %v392 = vld [vmem:[%s303 + $0x18] sm:$0xff]
        %v393 = vld [vmem:[%s303 + $0x20] sm:$0xff]
        %v394 = vld [vmem:[%s303 + $0x28] sm:$0xff]
        %v395 = vld [vmem:[%s303 + $0x30] sm:$0xff]
        %v396 = vld [vmem:[%s303 + $0x38] sm:$0xff]
        %v397 = vld [vmem:[%s303 + $0x40] sm:$0xff]
        %v398 = vld [vmem:[%s303 + $0x48] sm:$0xff]
        %v399 = vld [vmem:[%s303 + $0x50] sm:$0xff]
        %v400 = vld [vmem:[%s303 + $0x58] sm:$0xff]
        %v401 = vld [vmem:[%s303 + $0x60] sm:$0xff]
        %v402 = vld [vmem:[%s303 + $0x68] sm:$0xff]
        %v403 = vld [vmem:[%s303 + $0x70] sm:$0xff]
        %v404 = vld [vmem:[%s303 + $0x78] sm:$0xff]
        %v405 = vld [vmem:[%s303 + $0x80] sm:$0xff]
        %v406 = vld [vmem:[%s303 + $0x88] sm:$0xff]
        %v407 = vld [vmem:[%s303 + $0x90] sm:$0xff]
        %v408 = vld [vmem:[%s303 + $0x98] sm:$0xff]
        %v409 = vld [vmem:[%s303 + $0xa0] sm:$0xff]
        %v410 = vld [vmem:[%s303 + $0xa8] sm:$0xff]
        %v411 = vld [vmem:[%s303 + $0xb0] sm:$0xff]
        %v412 = vld [vmem:[%s303 + $0xb8] sm:$0xff]
        %v413 = vld [vmem:[%s303 + $0xc0] sm:$0xff]
        %v414 = vld [vmem:[%s303 + $0xc8] sm:$0xff]
        %v415 = vld [vmem:[%s303 + $0xd0] sm:$0xff]
        %v416 = vld [vmem:[%s303 + $0xd8] sm:$0xff]
        %v417 = vld [vmem:[%s303 + $0xe0] sm:$0xff]
        %v418 = vld [vmem:[%s303 + $0xe8] sm:$0xff]
        %v419 = vld [vmem:[%s303 + $0xf0] sm:$0xff]
        %v420 = vld [vmem:[%s303 + $0xf8] sm:$0xff]
        %v421 = vld [vmem:[%s303 + $0x100] sm:$0xff]
        %v422 = vld [vmem:[%s303 + $0x108] sm:$0xff]
        %v423 = vld [vmem:[%s303 + $0x110] sm:$0xff]
        %v424 = vld [vmem:[%s303 + $0x118] sm:$0xff]
        %v425 = vld [vmem:[%s303 + $0x120] sm:$0xff]
        %v426 = vld [vmem:[%s303 + $0x128] sm:$0xff]
        %v427 = vld [vmem:[%s303 + $0x130] sm:$0xff]
        %v428 = vld [vmem:[%s303 + $0x138] sm:$0xff]
        %v429 = vld [vmem:[%s303 + $0x140] sm:$0xff]
        %v430 = vld [vmem:[%s303 + $0x148] sm:$0xff]
        %v431 = vld [vmem:[%s303 + $0x150] sm:$0xff]
        %v432 = vld [vmem:[%s303 + $0x158] sm:$0xff]
        %v433 = vld [vmem:[%s303 + $0x160] sm:$0xff]
        %v434 = vld [vmem:[%s303 + $0x168] sm:$0xff]
        %v435 = vld [vmem:[%s303 + $0x170] sm:$0xff]
        %v436 = vld [vmem:[%s303 + $0x178] sm:$0xff]
        %v437 = vld [vmem:[%s303 + $0x180] sm:$0xff]
        %v438 = vld [vmem:[%s303 + $0x188] sm:$0xff]
        %v439 = vld [vmem:[%s303 + $0x190] sm:$0xff]
        %v440 = vld [vmem:[%s303 + $0x198] sm:$0xff]
        %v441 = vld [vmem:[%s303 + $0x1a0] sm:$0xff]
        %v442 = vld [vmem:[%s303 + $0x1a8] sm:$0xff]
        %v443 = vld [vmem:[%s303 + $0x1b0] sm:$0xff]
        %v444 = vld [vmem:[%s303 + $0x1b8] sm:$0xff]
        %v445 = vld [vmem:[%s303 + $0x1c0] sm:$0xff]
        %v446 = vld [vmem:[%s303 + $0x1c8] sm:$0xff]
        %v447 = vld [vmem:[%s303 + $0x1d0] sm:$0xff]
        %v448 = vld [vmem:[%s303 + $0x1d8] sm:$0xff]
        %v449 = vld [vmem:[%s303 + $0x1e0] sm:$0xff]
        %v450 = vld [vmem:[%s303 + $0x1e8] sm:$0xff]
        %v451 = vld [vmem:[%s303 + $0x1f0] sm:$0xff]
        %v452 = vld [vmem:[%s303 + $0x1f8] sm:$0xff]
        %v453 = vld [vmem:[%s308] sm:$0xf]
        %v455 = vlaneseq
        %v456 = vshrl.u32 %v455, 7
        %v457 = vsub.s32 0, %v456
        %v458 = vrot.slane %v453, %v457
        %v459 = vlaneseq
        %v460 = vshrl.u32 %v459, 7
        %v461 = vsub.s32 1, %v460
        %v462 = vrot.slane %v453, %v461
        %v463 = vlaneseq
        %v464 = vshrl.u32 %v463, 7
        %v465 = vsub.s32 2, %v464
        %v466 = vrot.slane %v453, %v465
        %v467 = vlaneseq
        %v468 = vshrl.u32 %v467, 7
        %v469 = vsub.s32 3, %v468
        %v470 = vrot.slane %v453, %v469
        %475 = vmatprep.subr.mxu0 %v390
        %476 = vmatpush1.msra.mxu0 %v389
        %477 = vmatprep.subr.mxu0 %v394
        %478 = vmatpush1.msra.mxu0 %v393
        %479 = vmatprep.subr.mxu0 %v398
        %480 = vmatpush1.msra.mxu0 %v397
        %481 = vmatprep.subr.mxu0 %v402
        %482 = vmatpush1.msra.mxu0 %v401
        %483 = vmatprep.subr.mxu0 %v406
        %484 = vmatpush1.msra.mxu0 %v405
        %485 = vmatprep.subr.mxu0 %v410
        %486 = vmatpush1.msra.mxu0 %v409
        %487 = vmatprep.subr.mxu0 %v414
        %488 = vmatpush1.msra.mxu0 %v413
        %489 = vmatprep.subr.mxu0 %v418
        %490 = vmatpush1.msra.mxu0 %v417
        %491 = vmatprep.subr.mxu0 %v422
        %492 = vmatpush1.msra.mxu0 %v421
        %493 = vmatprep.subr.mxu0 %v426
        %494 = vmatpush1.msra.mxu0 %v425
        %495 = vmatprep.subr.mxu0 %v430
        %496 = vmatpush1.msra.mxu0 %v429
        %497 = vmatprep.subr.mxu0 %v434
        %498 = vmatpush1.msra.mxu0 %v433
        %499 = vmatprep.subr.mxu0 %v438
        %500 = vmatpush1.msra.mxu0 %v437
        %501 = vmatprep.subr.mxu0 %v442
        %502 = vmatpush1.msra.mxu0 %v441
        %503 = vmatprep.subr.mxu0 %v446
        %504 = vmatpush1.msra.mxu0 %v445
        %505 = vmatprep.subr.mxu0 %v450
        %506 = vmatpush1.msra.mxu0 %v449
        %507 = vmatprep.subr.mxu0 0.0
        %508 = vmatpush1.msra.mxu0 0.0
        %509 = vmatprep.subr.mxu0 0.0
        %510 = vmatpush1.msra.mxu0 0.0
        %511 = vmatprep.subr.mxu0 0.0
        %512 = vmatpush1.msra.mxu0 0.0
        %513 = vmatprep.subr.mxu0 0.0
        %514 = vmatpush1.msra.mxu0 0.0
        %515 = vmatprep.subr.mxu0 0.0
        %516 = vmatpush1.msra.mxu0 0.0
        %517 = vmatprep.subr.mxu0 0.0
        %518 = vmatpush1.msra.mxu0 0.0
        %519 = vmatprep.subr.mxu0 0.0
        %520 = vmatpush1.msra.mxu0 0.0
        %521 = vmatprep.subr.mxu0 0.0
        %522 = vmatpush1.msra.mxu0 0.0
        %523 = vmatprep.subr.mxu0 0.0
        %524 = vmatpush1.msra.mxu0 0.0
        %525 = vmatprep.subr.mxu0 0.0
        %526 = vmatpush1.msra.mxu0 0.0
        %527 = vmatprep.subr.mxu0 0.0
        %528 = vmatpush1.msra.mxu0 0.0
        %529 = vmatprep.subr.mxu0 0.0
        %530 = vmatpush1.msra.mxu0 0.0
        %531 = vmatprep.subr.mxu0 0.0
        %532 = vmatpush1.msra.mxu0 0.0
        %533 = vmatprep.subr.mxu0 0.0
        %534 = vmatpush1.msra.mxu0 0.0
        %535 = vmatprep.subr.mxu0 0.0
        %536 = vmatpush1.msra.mxu0 0.0
        %537 = vmatprep.subr.mxu0 0.0
        %538 = vmatpush1.msra.mxu0 0.0
        %539 = vmatprep.mubr.f32.mxu0 0.0
        %540 = vmatmul.mubr.f32.gmra.mrb[0].mxu0 %v357
        %v541 = vpop.f32.mrb[0].mxu0
        %v542 = vadd.f32 %v458, %v541
        %v543 = vpop.f32.mrb[0].mxu0
        %v544 = vadd.f32 %v462, %v543
        %545 = vmatprep.mubr.f32.mxu0 0.0
        %546 = vmatmul.mubr.f32.gmra.mrb[0].mxu0 %v358
        %v547 = vpop.f32.mrb[0].mxu0
        %v548 = vadd.f32 %v458, %v547
        %v549 = vpop.f32.mrb[0].mxu0
        %v550 = vadd.f32 %v462, %v549
        %551 = vmatprep.mubr.f32.mxu0 0.0
        %552 = vmatmul.mubr.f32.gmra.mrb[0].mxu0 %v359
        %v553 = vpop.f32.mrb[0].mxu0
        %v554 = vadd.f32 %v458, %v553
        %v555 = vpop.f32.mrb[0].mxu0
        %v556 = vadd.f32 %v462, %v555
        %557 = vmatprep.mubr.f32.mxu0 0.0
        %558 = vmatmul.mubr.f32.gmra.mrb[0].mxu0 %v360
        %v559 = vpop.f32.mrb[0].mxu0
        %v560 = vadd.f32 %v458, %v559
        %v561 = vpop.f32.mrb[0].mxu0
        %v562 = vadd.f32 %v462, %v561
        %563 = vmatprep.mubr.f32.mxu0 0.0
        %564 = vmatmul.mubr.f32.gmra.mrb[0].mxu0 %v361
        %v565 = vpop.f32.mrb[0].mxu0
        %v566 = vadd.f32 %v458, %v565
        %v567 = vpop.f32.mrb[0].mxu0
        %v568 = vadd.f32 %v462, %v567
        %569 = vmatprep.mubr.f32.mxu0 0.0
        %570 = vmatmul.mubr.f32.gmra.mrb[0].mxu0 %v362
        %v571 = vpop.f32.mrb[0].mxu0
        %v572 = vadd.f32 %v458, %v571
        %v573 = vpop.f32.mrb[0].mxu0
        %v574 = vadd.f32 %v462, %v573
        %575 = vmatprep.mubr.f32.mxu0 0.0
        %576 = vmatmul.mubr.f32.gmra.mrb[0].mxu0 %v363
        %v577 = vpop.f32.mrb[0].mxu0
        %v578 = vadd.f32 %v458, %v577
        %v579 = vpop.f32.mrb[0].mxu0
        %v580 = vadd.f32 %v462, %v579
        %581 = vmatprep.mubr.f32.mxu0 0.0
        %582 = vmatmul.mubr.f32.gmra.mrb[0].mxu0 %v364
        %v583 = vpop.f32.mrb[0].mxu0
        %v584 = vadd.f32 %v458, %v583
        %v585 = vpop.f32.mrb[0].mxu0
        %v586 = vadd.f32 %v462, %v585
        %587 = vmatprep.mubr.f32.mxu0 0.0
        %588 = vmatmul.mubr.f32.gmra.mrb[0].mxu0 %v365
        %v589 = vpop.f32.mrb[0].mxu0
        %v590 = vadd.f32 %v458, %v589
        %v591 = vpop.f32.mrb[0].mxu0
        %v592 = vadd.f32 %v462, %v591
        %593 = vmatprep.mubr.f32.mxu0 0.0
        %594 = vmatmul.mubr.f32.gmra.mrb[0].mxu0 %v366
        %v595 = vpop.f32.mrb[0].mxu0
        %v596 = vadd.f32 %v458, %v595
        %v597 = vpop.f32.mrb[0].mxu0
        %v598 = vadd.f32 %v462, %v597
        %599 = vmatprep.mubr.f32.mxu0 0.0
        %600 = vmatmul.mubr.f32.gmra.mrb[0].mxu0 %v367
        %v601 = vpop.f32.mrb[0].mxu0
        %v602 = vadd.f32 %v458, %v601
        %v603 = vpop.f32.mrb[0].mxu0
        %v604 = vadd.f32 %v462, %v603
        %605 = vmatprep.mubr.f32.mxu0 0.0
        %606 = vmatmul.mubr.f32.gmra.mrb[0].mxu0 %v368
        %v607 = vpop.f32.mrb[0].mxu0
        %v608 = vadd.f32 %v458, %v607
        %v609 = vpop.f32.mrb[0].mxu0
        %v610 = vadd.f32 %v462, %v609
        %611 = vmatprep.mubr.f32.mxu0 0.0
        %612 = vmatmul.mubr.f32.gmra.mrb[0].mxu0 %v369
        %v613 = vpop.f32.mrb[0].mxu0
        %v614 = vadd.f32 %v458, %v613
        %v615 = vpop.f32.mrb[0].mxu0
        %v616 = vadd.f32 %v462, %v615
        %617 = vmatprep.mubr.f32.mxu0 0.0
        %618 = vmatmul.mubr.f32.gmra.mrb[0].mxu0 %v370
        %v619 = vpop.f32.mrb[0].mxu0
        %v620 = vadd.f32 %v458, %v619
        %v621 = vpop.f32.mrb[0].mxu0
        %v622 = vadd.f32 %v462, %v621
        %623 = vmatprep.mubr.f32.mxu0 0.0
        %624 = vmatmul.mubr.f32.gmra.mrb[0].mxu0 %v371
        %v625 = vpop.f32.mrb[0].mxu0
        %v626 = vadd.f32 %v458, %v625
        %v627 = vpop.f32.mrb[0].mxu0
        %v628 = vadd.f32 %v462, %v627
        %629 = vmatprep.mubr.f32.mxu0 0.0
        %630 = vmatmul.mubr.f32.gmra.mrb[0].mxu0 %v372
        %v631 = vpop.f32.mrb[0].mxu0
        %v632 = vadd.f32 %v458, %v631
        %v633 = vpop.f32.mrb[0].mxu0
        %v634 = vadd.f32 %v462, %v633
        %635 = vmatprep.mubr.f32.mxu0 0.0
        %636 = vmatmul.mubr.f32.gmra.mrb[0].mxu0 %v373
        %v637 = vpop.f32.mrb[0].mxu0
        %v638 = vadd.f32 %v458, %v637
        %v639 = vpop.f32.mrb[0].mxu0
        %v640 = vadd.f32 %v462, %v639
        %641 = vmatprep.mubr.f32.mxu0 0.0
        %642 = vmatmul.mubr.f32.gmra.mrb[0].mxu0 %v374
        %v643 = vpop.f32.mrb[0].mxu0
        %v644 = vadd.f32 %v458, %v643
        %v645 = vpop.f32.mrb[0].mxu0
        %v646 = vadd.f32 %v462, %v645
        %647 = vmatprep.mubr.f32.mxu0 0.0
        %648 = vmatmul.mubr.f32.gmra.mrb[0].mxu0 %v375
        %v649 = vpop.f32.mrb[0].mxu0
        %v650 = vadd.f32 %v458, %v649
        %v651 = vpop.f32.mrb[0].mxu0
        %v652 = vadd.f32 %v462, %v651
        %653 = vmatprep.mubr.f32.mxu0 0.0
        %654 = vmatmul.mubr.f32.gmra.mrb[0].mxu0 %v376
        %v655 = vpop.f32.mrb[0].mxu0
        %v656 = vadd.f32 %v458, %v655
        %v657 = vpop.f32.mrb[0].mxu0
        %v658 = vadd.f32 %v462, %v657
        %659 = vmatprep.mubr.f32.mxu0 0.0
        %660 = vmatmul.mubr.f32.gmra.mrb[0].mxu0 %v377
        %v661 = vpop.f32.mrb[0].mxu0
        %v662 = vadd.f32 %v458, %v661
        %v663 = vpop.f32.mrb[0].mxu0
        %v664 = vadd.f32 %v462, %v663
        %665 = vmatprep.mubr.f32.mxu0 0.0
        %666 = vmatmul.mubr.f32.gmra.mrb[0].mxu0 %v378
        %v667 = vpop.f32.mrb[0].mxu0
        %v668 = vadd.f32 %v458, %v667
        %v669 = vpop.f32.mrb[0].mxu0
        %v670 = vadd.f32 %v462, %v669
        %671 = vmatprep.mubr.f32.mxu0 0.0
        %672 = vmatmul.mubr.f32.gmra.mrb[0].mxu0 %v379
        %v673 = vpop.f32.mrb[0].mxu0
        %v674 = vadd.f32 %v458, %v673
        %v675 = vpop.f32.mrb[0].mxu0
        %v676 = vadd.f32 %v462, %v675
        %677 = vmatprep.mubr.f32.mxu0 0.0
        %678 = vmatmul.mubr.f32.gmra.mrb[0].mxu0 %v380
        %v679 = vpop.f32.mrb[0].mxu0
        %v680 = vadd.f32 %v458, %v679
        %v681 = vpop.f32.mrb[0].mxu0
        %v682 = vadd.f32 %v462, %v681
        %683 = vmatprep.mubr.f32.mxu0 0.0
        %684 = vmatmul.mubr.f32.gmra.mrb[0].mxu0 %v381
        %v685 = vpop.f32.mrb[0].mxu0
        %v686 = vadd.f32 %v458, %v685
        %v687 = vpop.f32.mrb[0].mxu0
        %v688 = vadd.f32 %v462, %v687
        %689 = vmatprep.mubr.f32.mxu0 0.0
        %690 = vmatmul.mubr.f32.gmra.mrb[0].mxu0 %v382
        %v691 = vpop.f32.mrb[0].mxu0
        %v692 = vadd.f32 %v458, %v691
        %v693 = vpop.f32.mrb[0].mxu0
        %v694 = vadd.f32 %v462, %v693
        %695 = vmatprep.mubr.f32.mxu0 0.0
        %696 = vmatmul.mubr.f32.gmra.mrb[0].mxu0 %v383
        %v697 = vpop.f32.mrb[0].mxu0
        %v698 = vadd.f32 %v458, %v697
        %v699 = vpop.f32.mrb[0].mxu0
        %v700 = vadd.f32 %v462, %v699
        %701 = vmatprep.mubr.f32.mxu0 0.0
        %702 = vmatmul.mubr.f32.gmra.mrb[0].mxu0 %v384
        %v703 = vpop.f32.mrb[0].mxu0
        %v704 = vadd.f32 %v458, %v703
        %v705 = vpop.f32.mrb[0].mxu0
        %v706 = vadd.f32 %v462, %v705
        %707 = vmatprep.mubr.f32.mxu0 0.0
        %708 = vmatmul.mubr.f32.gmra.mrb[0].mxu0 %v385
        %v709 = vpop.f32.mrb[0].mxu0
        %v710 = vadd.f32 %v458, %v709
        %v711 = vpop.f32.mrb[0].mxu0
        %v712 = vadd.f32 %v462, %v711
        %713 = vmatprep.mubr.f32.mxu0 0.0
        %714 = vmatmul.mubr.f32.gmra.mrb[0].mxu0 %v386
        %v715 = vpop.f32.mrb[0].mxu0
        %v716 = vadd.f32 %v458, %v715
        %v717 = vpop.f32.mrb[0].mxu0
        %v718 = vadd.f32 %v462, %v717
        %719 = vmatprep.mubr.f32.mxu0 0.0
        %720 = vmatmul.mubr.f32.gmra.mrb[0].mxu0 %v387
        %v721 = vpop.f32.mrb[0].mxu0
        %v722 = vadd.f32 %v458, %v721
        %v723 = vpop.f32.mrb[0].mxu0
        %v724 = vadd.f32 %v462, %v723
        %725 = vmatprep.mubr.f32.mxu0 0.0
        %726 = vmatmul.mubr.f32.gmra.mrb[0].mxu0 %v388
        %v727 = vpop.f32.mrb[0].mxu0
        %v728 = vadd.f32 %v458, %v727
        %v729 = vpop.f32.mrb[0].mxu0
        %v730 = vadd.f32 %v462, %v729
        %731 = vdwg.mxu0
        %732 = vmatprep.subr.mxu0 %v392
        %733 = vmatpush1.msra.mxu0 %v391
        %734 = vmatprep.subr.mxu0 %v396
        %735 = vmatpush1.msra.mxu0 %v395
        %736 = vmatprep.subr.mxu0 %v400
        %737 = vmatpush1.msra.mxu0 %v399
        %738 = vmatprep.subr.mxu0 %v404
        %739 = vmatpush1.msra.mxu0 %v403
        %740 = vmatprep.subr.mxu0 %v408
        %741 = vmatpush1.msra.mxu0 %v407
        %742 = vmatprep.subr.mxu0 %v412
        %743 = vmatpush1.msra.mxu0 %v411
        %744 = vmatprep.subr.mxu0 %v416
        %745 = vmatpush1.msra.mxu0 %v415
        %746 = vmatprep.subr.mxu0 %v420
        %747 = vmatpush1.msra.mxu0 %v419
        %748 = vmatprep.subr.mxu0 %v424
        %749 = vmatpush1.msra.mxu0 %v423
        %750 = vmatprep.subr.mxu0 %v428
        %751 = vmatpush1.msra.mxu0 %v427
        %752 = vmatprep.subr.mxu0 %v432
        %753 = vmatpush1.msra.mxu0 %v431
        %754 = vmatprep.subr.mxu0 %v436
        %755 = vmatpush1.msra.mxu0 %v435
        %756 = vmatprep.subr.mxu0 %v440
        %757 = vmatpush1.msra.mxu0 %v439
        %758 = vmatprep.subr.mxu0 %v444
        %759 = vmatpush1.msra.mxu0 %v443
        %760 = vmatprep.subr.mxu0 %v448
        %761 = vmatpush1.msra.mxu0 %v447
        %762 = vmatprep.subr.mxu0 %v452
        %763 = vmatpush1.msra.mxu0 %v451
        %764 = vmatprep.subr.mxu0 0.0
        %765 = vmatpush1.msra.mxu0 0.0
        %766 = vmatprep.subr.mxu0 0.0
        %767 = vmatpush1.msra.mxu0 0.0
        %768 = vmatprep.subr.mxu0 0.0
        %769 = vmatpush1.msra.mxu0 0.0
        %770 = vmatprep.subr.mxu0 0.0
        %771 = vmatpush1.msra.mxu0 0.0
        %772 = vmatprep.subr.mxu0 0.0
        %773 = vmatpush1.msra.mxu0 0.0
        %774 = vmatprep.subr.mxu0 0.0
        %775 = vmatpush1.msra.mxu0 0.0
        %776 = vmatprep.subr.mxu0 0.0
        %777 = vmatpush1.msra.mxu0 0.0
        %778 = vmatprep.subr.mxu0 0.0
        %779 = vmatpush1.msra.mxu0 0.0
        %780 = vmatprep.subr.mxu0 0.0
        %781 = vmatpush1.msra.mxu0 0.0
        %782 = vmatprep.subr.mxu0 0.0
        %783 = vmatpush1.msra.mxu0 0.0
        %784 = vmatprep.subr.mxu0 0.0
        %785 = vmatpush1.msra.mxu0 0.0
        %786 = vmatprep.subr.mxu0 0.0
        %787 = vmatpush1.msra.mxu0 0.0
        %788 = vmatprep.subr.mxu0 0.0
        %789 = vmatpush1.msra.mxu0 0.0
        %790 = vmatprep.subr.mxu0 0.0
        %791 = vmatpush1.msra.mxu0 0.0
        %792 = vmatprep.subr.mxu0 0.0
        %793 = vmatpush1.msra.mxu0 0.0
        %794 = vmatprep.subr.mxu0 0.0
        %795 = vmatpush1.msra.mxu0 0.0
        %796 = vmatprep.mubr.f32.mxu0 0.0
        %797 = vmatmul.mubr.f32.gmra.mrb[0].mxu0 %v357
        %v798 = vpop.f32.mrb[0].mxu0
        %v799 = vadd.f32 %v466, %v798
        %v800 = vpop.f32.mrb[0].mxu0
        %v801 = vadd.f32 %v470, %v800
        %802 = vmatprep.mubr.f32.mxu0 0.0
        %803 = vmatmul.mubr.f32.gmra.mrb[0].mxu0 %v358
        %v804 = vpop.f32.mrb[0].mxu0
        %v805 = vadd.f32 %v466, %v804
        %v806 = vpop.f32.mrb[0].mxu0
        %v807 = vadd.f32 %v470, %v806
        %808 = vmatprep.mubr.f32.mxu0 0.0
        %809 = vmatmul.mubr.f32.gmra.mrb[0].mxu0 %v359
        %v810 = vpop.f32.mrb[0].mxu0
        %v811 = vadd.f32 %v466, %v810
        %v812 = vpop.f32.mrb[0].mxu0
        %v813 = vadd.f32 %v470, %v812
        %814 = vmatprep.mubr.f32.mxu0 0.0
        %815 = vmatmul.mubr.f32.gmra.mrb[0].mxu0 %v360
        %v816 = vpop.f32.mrb[0].mxu0
        %v817 = vadd.f32 %v466, %v816
        %v818 = vpop.f32.mrb[0].mxu0
        %v819 = vadd.f32 %v470, %v818
        %820 = vmatprep.mubr.f32.mxu0 0.0
        %821 = vmatmul.mubr.f32.gmra.mrb[0].mxu0 %v361
        %v822 = vpop.f32.mrb[0].mxu0
        %v823 = vadd.f32 %v466, %v822
        %v824 = vpop.f32.mrb[0].mxu0
        %v825 = vadd.f32 %v470, %v824
        %826 = vmatprep.mubr.f32.mxu0 0.0
        %827 = vmatmul.mubr.f32.gmra.mrb[0].mxu0 %v362
        %v828 = vpop.f32.mrb[0].mxu0
        %v829 = vadd.f32 %v466, %v828
        %v830 = vpop.f32.mrb[0].mxu0
        %v831 = vadd.f32 %v470, %v830
        %832 = vmatprep.mubr.f32.mxu0 0.0
        %833 = vmatmul.mubr.f32.gmra.mrb[0].mxu0 %v363
        %v834 = vpop.f32.mrb[0].mxu0
        %v835 = vadd.f32 %v466, %v834
        %v836 = vpop.f32.mrb[0].mxu0
        %v837 = vadd.f32 %v470, %v836
        %838 = vmatprep.mubr.f32.mxu0 0.0
        %839 = vmatmul.mubr.f32.gmra.mrb[0].mxu0 %v364
        %v840 = vpop.f32.mrb[0].mxu0
        %v841 = vadd.f32 %v466, %v840
        %v842 = vpop.f32.mrb[0].mxu0
        %v843 = vadd.f32 %v470, %v842
        %844 = vmatprep.mubr.f32.mxu0 0.0
        %845 = vmatmul.mubr.f32.gmra.mrb[0].mxu0 %v365
        %v846 = vpop.f32.mrb[0].mxu0
        %v847 = vadd.f32 %v466, %v846
        %v848 = vpop.f32.mrb[0].mxu0
        %v849 = vadd.f32 %v470, %v848
        %850 = vmatprep.mubr.f32.mxu0 0.0
        %851 = vmatmul.mubr.f32.gmra.mrb[0].mxu0 %v366
        %v852 = vpop.f32.mrb[0].mxu0
        %v853 = vadd.f32 %v466, %v852
        %v854 = vpop.f32.mrb[0].mxu0
        %v855 = vadd.f32 %v470, %v854
        %856 = vmatprep.mubr.f32.mxu0 0.0
        %857 = vmatmul.mubr.f32.gmra.mrb[0].mxu0 %v367
        %v858 = vpop.f32.mrb[0].mxu0
        %v859 = vadd.f32 %v466, %v858
        %v860 = vpop.f32.mrb[0].mxu0
        %v861 = vadd.f32 %v470, %v860
        %862 = vmatprep.mubr.f32.mxu0 0.0
        %863 = vmatmul.mubr.f32.gmra.mrb[0].mxu0 %v368
        %v864 = vpop.f32.mrb[0].mxu0
        %v865 = vadd.f32 %v466, %v864
        %v866 = vpop.f32.mrb[0].mxu0
        %v867 = vadd.f32 %v470, %v866
        %868 = vmatprep.mubr.f32.mxu0 0.0
        %869 = vmatmul.mubr.f32.gmra.mrb[0].mxu0 %v369
        %v870 = vpop.f32.mrb[0].mxu0
        %v871 = vadd.f32 %v466, %v870
        %v872 = vpop.f32.mrb[0].mxu0
        %v873 = vadd.f32 %v470, %v872
        %874 = vmatprep.mubr.f32.mxu0 0.0
        %875 = vmatmul.mubr.f32.gmra.mrb[0].mxu0 %v370
        %v876 = vpop.f32.mrb[0].mxu0
        %v877 = vadd.f32 %v466, %v876
        %v878 = vpop.f32.mrb[0].mxu0
        %v879 = vadd.f32 %v470, %v878
        %880 = vmatprep.mubr.f32.mxu0 0.0
        %881 = vmatmul.mubr.f32.gmra.mrb[0].mxu0 %v371
        %v882 = vpop.f32.mrb[0].mxu0
        %v883 = vadd.f32 %v466, %v882
        %v884 = vpop.f32.mrb[0].mxu0
        %v885 = vadd.f32 %v470, %v884
        %886 = vmatprep.mubr.f32.mxu0 0.0
        %887 = vmatmul.mubr.f32.gmra.mrb[0].mxu0 %v372
        %v888 = vpop.f32.mrb[0].mxu0
        %v889 = vadd.f32 %v466, %v888
        %v890 = vpop.f32.mrb[0].mxu0
        %v891 = vadd.f32 %v470, %v890
        %892 = vmatprep.mubr.f32.mxu0 0.0
        %893 = vmatmul.mubr.f32.gmra.mrb[0].mxu0 %v373
        %v894 = vpop.f32.mrb[0].mxu0
        %v895 = vadd.f32 %v466, %v894
        %v896 = vpop.f32.mrb[0].mxu0
        %v897 = vadd.f32 %v470, %v896
        %898 = vmatprep.mubr.f32.mxu0 0.0
        %899 = vmatmul.mubr.f32.gmra.mrb[0].mxu0 %v374
        %v900 = vpop.f32.mrb[0].mxu0
        %v901 = vadd.f32 %v466, %v900
        %v902 = vpop.f32.mrb[0].mxu0
        %v903 = vadd.f32 %v470, %v902
        %904 = vmatprep.mubr.f32.mxu0 0.0
        %905 = vmatmul.mubr.f32.gmra.mrb[0].mxu0 %v375
        %v906 = vpop.f32.mrb[0].mxu0
        %v907 = vadd.f32 %v466, %v906
        %v908 = vpop.f32.mrb[0].mxu0
        %v909 = vadd.f32 %v470, %v908
        %910 = vmatprep.mubr.f32.mxu0 0.0
        %911 = vmatmul.mubr.f32.gmra.mrb[0].mxu0 %v376
        %v912 = vpop.f32.mrb[0].mxu0
        %v913 = vadd.f32 %v466, %v912
        %v914 = vpop.f32.mrb[0].mxu0
        %v915 = vadd.f32 %v470, %v914
        %916 = vmatprep.mubr.f32.mxu0 0.0
        %917 = vmatmul.mubr.f32.gmra.mrb[0].mxu0 %v377
        %v918 = vpop.f32.mrb[0].mxu0
        %v919 = vadd.f32 %v466, %v918
        %v920 = vpop.f32.mrb[0].mxu0
        %v921 = vadd.f32 %v470, %v920
        %922 = vmatprep.mubr.f32.mxu0 0.0
        %923 = vmatmul.mubr.f32.gmra.mrb[0].mxu0 %v378
        %v924 = vpop.f32.mrb[0].mxu0
        %v925 = vadd.f32 %v466, %v924
        %v926 = vpop.f32.mrb[0].mxu0
        %v927 = vadd.f32 %v470, %v926
        %928 = vmatprep.mubr.f32.mxu0 0.0
        %929 = vmatmul.mubr.f32.gmra.mrb[0].mxu0 %v379
        %v930 = vpop.f32.mrb[0].mxu0
        %v931 = vadd.f32 %v466, %v930
        %v932 = vpop.f32.mrb[0].mxu0
        %v933 = vadd.f32 %v470, %v932
        %934 = vmatprep.mubr.f32.mxu0 0.0
        %935 = vmatmul.mubr.f32.gmra.mrb[0].mxu0 %v380
        %v936 = vpop.f32.mrb[0].mxu0
        %v937 = vadd.f32 %v466, %v936
        %v938 = vpop.f32.mrb[0].mxu0
        %v939 = vadd.f32 %v470, %v938
        %940 = vmatprep.mubr.f32.mxu0 0.0
        %941 = vmatmul.mubr.f32.gmra.mrb[0].mxu0 %v381
        %v942 = vpop.f32.mrb[0].mxu0
        %v943 = vadd.f32 %v466, %v942
        %v944 = vpop.f32.mrb[0].mxu0
        %v945 = vadd.f32 %v470, %v944
        %946 = vmatprep.mubr.f32.mxu0 0.0
        %947 = vmatmul.mubr.f32.gmra.mrb[0].mxu0 %v382
        %v948 = vpop.f32.mrb[0].mxu0
        %v949 = vadd.f32 %v466, %v948
        %v950 = vpop.f32.mrb[0].mxu0
        %v951 = vadd.f32 %v470, %v950
        %952 = vmatprep.mubr.f32.mxu0 0.0
        %953 = vmatmul.mubr.f32.gmra.mrb[0].mxu0 %v383
        %v954 = vpop.f32.mrb[0].mxu0
        %v955 = vadd.f32 %v466, %v954
        %v956 = vpop.f32.mrb[0].mxu0
        %v957 = vadd.f32 %v470, %v956
        %958 = vmatprep.mubr.f32.mxu0 0.0
        %959 = vmatmul.mubr.f32.gmra.mrb[0].mxu0 %v384
        %v960 = vpop.f32.mrb[0].mxu0
        %v961 = vadd.f32 %v466, %v960
        %v962 = vpop.f32.mrb[0].mxu0
        %v963 = vadd.f32 %v470, %v962
        %964 = vmatprep.mubr.f32.mxu0 0.0
        %965 = vmatmul.mubr.f32.gmra.mrb[0].mxu0 %v385
        %v966 = vpop.f32.mrb[0].mxu0
        %v967 = vadd.f32 %v466, %v966
        %v968 = vpop.f32.mrb[0].mxu0
        %v969 = vadd.f32 %v470, %v968
        %970 = vmatprep.mubr.f32.mxu0 0.0
        %971 = vmatmul.mubr.f32.gmra.mrb[0].mxu0 %v386
        %v972 = vpop.f32.mrb[0].mxu0
        %v973 = vadd.f32 %v466, %v972
        %v974 = vpop.f32.mrb[0].mxu0
        %v975 = vadd.f32 %v470, %v974
        %976 = vmatprep.mubr.f32.mxu0 0.0
        %977 = vmatmul.mubr.f32.gmra.mrb[0].mxu0 %v387
        %v978 = vpop.f32.mrb[0].mxu0
        %v979 = vadd.f32 %v466, %v978
        %v980 = vpop.f32.mrb[0].mxu0
        %v981 = vadd.f32 %v470, %v980
        %982 = vmatprep.mubr.f32.mxu0 0.0
        %983 = vmatmul.mubr.f32.gmra.mrb[0].mxu0 %v388
        %v984 = vpop.f32.mrb[0].mxu0
        %v985 = vadd.f32 %v466, %v984
        %v986 = vpop.f32.mrb[0].mxu0
        %v987 = vadd.f32 %v470, %v986
        %988 = vdwg.mxu0
        %v989 = vmul.f32 %v542, 0.5
        %v990 = vmul.f32 %v544, 0.5
        %v991 = vmul.f32 %v799, 0.5
        %v992 = vmul.f32 %v801, 0.5
        %v993 = vmul.f32 %v548, 0.5
        %v994 = vmul.f32 %v550, 0.5
        %v995 = vmul.f32 %v805, 0.5
        %v996 = vmul.f32 %v807, 0.5
        %v997 = vmul.f32 %v554, 0.5
        %v998 = vmul.f32 %v556, 0.5
        %v999 = vmul.f32 %v811, 0.5
        %v1000 = vmul.f32 %v813, 0.5
        %v1001 = vmul.f32 %v560, 0.5
        %v1002 = vmul.f32 %v562, 0.5
        %v1003 = vmul.f32 %v817, 0.5
        %v1004 = vmul.f32 %v819, 0.5
        %v1005 = vmul.f32 %v566, 0.5
        %v1006 = vmul.f32 %v568, 0.5
        %v1007 = vmul.f32 %v823, 0.5
        %v1008 = vmul.f32 %v825, 0.5
        %v1009 = vmul.f32 %v572, 0.5
        %v1010 = vmul.f32 %v574, 0.5
        %v1011 = vmul.f32 %v829, 0.5
        %v1012 = vmul.f32 %v831, 0.5
        %v1013 = vmul.f32 %v578, 0.5
        %v1014 = vmul.f32 %v580, 0.5
        %v1015 = vmul.f32 %v835, 0.5
        %v1016 = vmul.f32 %v837, 0.5
        %v1017 = vmul.f32 %v584, 0.5
        %v1018 = vmul.f32 %v586, 0.5
        %v1019 = vmul.f32 %v841, 0.5
        %v1020 = vmul.f32 %v843, 0.5
        %v1021 = vmul.f32 %v590, 0.5
        %v1022 = vmul.f32 %v592, 0.5
        %v1023 = vmul.f32 %v847, 0.5
        %v1024 = vmul.f32 %v849, 0.5
        %v1025 = vmul.f32 %v596, 0.5
        %v1026 = vmul.f32 %v598, 0.5
        %v1027 = vmul.f32 %v853, 0.5
        %v1028 = vmul.f32 %v855, 0.5
        %v1029 = vmul.f32 %v602, 0.5
        %v1030 = vmul.f32 %v604, 0.5
        %v1031 = vmul.f32 %v859, 0.5
        %v1032 = vmul.f32 %v861, 0.5
        %v1033 = vmul.f32 %v608, 0.5
        %v1034 = vmul.f32 %v610, 0.5
        %v1035 = vmul.f32 %v865, 0.5
        %v1036 = vmul.f32 %v867, 0.5
        %v1037 = vmul.f32 %v614, 0.5
        %v1038 = vmul.f32 %v616, 0.5
        %v1039 = vmul.f32 %v871, 0.5
        %v1040 = vmul.f32 %v873, 0.5
        %v1041 = vmul.f32 %v620, 0.5
        %v1042 = vmul.f32 %v622, 0.5
        %v1043 = vmul.f32 %v877, 0.5
        %v1044 = vmul.f32 %v879, 0.5
        %v1045 = vmul.f32 %v626, 0.5
        %v1046 = vmul.f32 %v628, 0.5
        %v1047 = vmul.f32 %v883, 0.5
        %v1048 = vmul.f32 %v885, 0.5
        %v1049 = vmul.f32 %v632, 0.5
        %v1050 = vmul.f32 %v634, 0.5
        %v1051 = vmul.f32 %v889, 0.5
        %v1052 = vmul.f32 %v891, 0.5
        %v1053 = vmul.f32 %v638, 0.5
        %v1054 = vmul.f32 %v640, 0.5
        %v1055 = vmul.f32 %v895, 0.5
        %v1056 = vmul.f32 %v897, 0.5
        %v1057 = vmul.f32 %v644, 0.5
        %v1058 = vmul.f32 %v646, 0.5
        %v1059 = vmul.f32 %v901, 0.5
        %v1060 = vmul.f32 %v903, 0.5
        %v1061 = vmul.f32 %v650, 0.5
        %v1062 = vmul.f32 %v652, 0.5
        %v1063 = vmul.f32 %v907, 0.5
        %v1064 = vmul.f32 %v909, 0.5
        %v1065 = vmul.f32 %v656, 0.5
        %v1066 = vmul.f32 %v658, 0.5
        %v1067 = vmul.f32 %v913, 0.5
        %v1068 = vmul.f32 %v915, 0.5
        %v1069 = vmul.f32 %v662, 0.5
        %v1070 = vmul.f32 %v664, 0.5
        %v1071 = vmul.f32 %v919, 0.5
        %v1072 = vmul.f32 %v921, 0.5
        %v1073 = vmul.f32 %v668, 0.5
        %v1074 = vmul.f32 %v670, 0.5
        %v1075 = vmul.f32 %v925, 0.5
        %v1076 = vmul.f32 %v927, 0.5
        %v1077 = vmul.f32 %v674, 0.5
        %v1078 = vmul.f32 %v676, 0.5
        %v1079 = vmul.f32 %v931, 0.5
        %v1080 = vmul.f32 %v933, 0.5
        %v1081 = vmul.f32 %v680, 0.5
        %v1082 = vmul.f32 %v682, 0.5
        %v1083 = vmul.f32 %v937, 0.5
        %v1084 = vmul.f32 %v939, 0.5
        %v1085 = vmul.f32 %v686, 0.5
        %v1086 = vmul.f32 %v688, 0.5
        %v1087 = vmul.f32 %v943, 0.5
        %v1088 = vmul.f32 %v945, 0.5
        %v1089 = vmul.f32 %v692, 0.5
        %v1090 = vmul.f32 %v694, 0.5
        %v1091 = vmul.f32 %v949, 0.5
        %v1092 = vmul.f32 %v951, 0.5
        %v1093 = vmul.f32 %v698, 0.5
        %v1094 = vmul.f32 %v700, 0.5
        %v1095 = vmul.f32 %v955, 0.5
        %v1096 = vmul.f32 %v957, 0.5
        %v1097 = vmul.f32 %v704, 0.5
        %v1098 = vmul.f32 %v706, 0.5
        %v1099 = vmul.f32 %v961, 0.5
        %v1100 = vmul.f32 %v963, 0.5
        %v1101 = vmul.f32 %v710, 0.5
        %v1102 = vmul.f32 %v712, 0.5
        %v1103 = vmul.f32 %v967, 0.5
        %v1104 = vmul.f32 %v969, 0.5
        %v1105 = vmul.f32 %v716, 0.5
        %v1106 = vmul.f32 %v718, 0.5
        %v1107 = vmul.f32 %v973, 0.5
        %v1108 = vmul.f32 %v975, 0.5
        %v1109 = vmul.f32 %v722, 0.5
        %v1110 = vmul.f32 %v724, 0.5
        %v1111 = vmul.f32 %v979, 0.5
        %v1112 = vmul.f32 %v981, 0.5
        %v1113 = vmul.f32 %v728, 0.5
        %v1114 = vmul.f32 %v730, 0.5
        %v1115 = vmul.f32 %v985, 0.5
        %v1116 = vmul.f32 %v987, 0.5
        %v1117 = vmul.f32 %v542, 0.70710677
        %v1118 = vmul.f32 %v544, 0.70710677
        %v1119 = vmul.f32 %v799, 0.70710677
        %v1120 = vmul.f32 %v801, 0.70710677
        %v1121 = vmul.f32 %v548, 0.70710677
        %v1122 = vmul.f32 %v550, 0.70710677
        %v1123 = vmul.f32 %v805, 0.70710677
        %v1124 = vmul.f32 %v807, 0.70710677
        %v1125 = vmul.f32 %v554, 0.70710677
        %v1126 = vmul.f32 %v556, 0.70710677
        %v1127 = vmul.f32 %v811, 0.70710677
        %v1128 = vmul.f32 %v813, 0.70710677
        %v1129 = vmul.f32 %v560, 0.70710677
        %v1130 = vmul.f32 %v562, 0.70710677
        %v1131 = vmul.f32 %v817, 0.70710677
        %v1132 = vmul.f32 %v819, 0.70710677
        %v1133 = vmul.f32 %v566, 0.70710677
        %v1134 = vmul.f32 %v568, 0.70710677
        %v1135 = vmul.f32 %v823, 0.70710677
        %v1136 = vmul.f32 %v825, 0.70710677
        %v1137 = vmul.f32 %v572, 0.70710677
        %v1138 = vmul.f32 %v574, 0.70710677
        %v1139 = vmul.f32 %v829, 0.70710677
        %v1140 = vmul.f32 %v831, 0.70710677
        %v1141 = vmul.f32 %v578, 0.70710677
        %v1142 = vmul.f32 %v580, 0.70710677
        %v1143 = vmul.f32 %v835, 0.70710677
        %v1144 = vmul.f32 %v837, 0.70710677
        %v1145 = vmul.f32 %v584, 0.70710677
        %v1146 = vmul.f32 %v586, 0.70710677
        %v1147 = vmul.f32 %v841, 0.70710677
        %v1148 = vmul.f32 %v843, 0.70710677
        %v1149 = vmul.f32 %v590, 0.70710677
        %v1150 = vmul.f32 %v592, 0.70710677
        %v1151 = vmul.f32 %v847, 0.70710677
        %v1152 = vmul.f32 %v849, 0.70710677
        %v1153 = vmul.f32 %v596, 0.70710677
        %v1154 = vmul.f32 %v598, 0.70710677
        %v1155 = vmul.f32 %v853, 0.70710677
        %v1156 = vmul.f32 %v855, 0.70710677
        %v1157 = vmul.f32 %v602, 0.70710677
        %v1158 = vmul.f32 %v604, 0.70710677
        %v1159 = vmul.f32 %v859, 0.70710677
        %v1160 = vmul.f32 %v861, 0.70710677
        %v1161 = vmul.f32 %v608, 0.70710677
        %v1162 = vmul.f32 %v610, 0.70710677
        %v1163 = vmul.f32 %v865, 0.70710677
        %v1164 = vmul.f32 %v867, 0.70710677
        %v1165 = vmul.f32 %v614, 0.70710677
        %v1166 = vmul.f32 %v616, 0.70710677
        %v1167 = vmul.f32 %v871, 0.70710677
        %v1168 = vmul.f32 %v873, 0.70710677
        %v1169 = vmul.f32 %v620, 0.70710677
        %v1170 = vmul.f32 %v622, 0.70710677
        %v1171 = vmul.f32 %v877, 0.70710677
        %v1172 = vmul.f32 %v879, 0.70710677
        %v1173 = vmul.f32 %v626, 0.70710677
        %v1174 = vmul.f32 %v628, 0.70710677
        %v1175 = vmul.f32 %v883, 0.70710677
        %v1176 = vmul.f32 %v885, 0.70710677
        %v1177 = vmul.f32 %v632, 0.70710677
        %v1178 = vmul.f32 %v634, 0.70710677
        %v1179 = vmul.f32 %v889, 0.70710677
        %v1180 = vmul.f32 %v891, 0.70710677
        %v1181 = vmul.f32 %v638, 0.70710677
        %v1182 = vmul.f32 %v640, 0.70710677
        %v1183 = vmul.f32 %v895, 0.70710677
        %v1184 = vmul.f32 %v897, 0.70710677
        %v1185 = vmul.f32 %v644, 0.70710677
        %v1186 = vmul.f32 %v646, 0.70710677
        %v1187 = vmul.f32 %v901, 0.70710677
        %v1188 = vmul.f32 %v903, 0.70710677
        %v1189 = vmul.f32 %v650, 0.70710677
        %v1190 = vmul.f32 %v652, 0.70710677
        %v1191 = vmul.f32 %v907, 0.70710677
        %v1192 = vmul.f32 %v909, 0.70710677
        %v1193 = vmul.f32 %v656, 0.70710677
        %v1194 = vmul.f32 %v658, 0.70710677
        %v1195 = vmul.f32 %v913, 0.70710677
        %v1196 = vmul.f32 %v915, 0.70710677
        %v1197 = vmul.f32 %v662, 0.70710677
        %v1198 = vmul.f32 %v664, 0.70710677
        %v1199 = vmul.f32 %v919, 0.70710677
        %v1200 = vmul.f32 %v921, 0.70710677
        %v1201 = vmul.f32 %v668, 0.70710677
        %v1202 = vmul.f32 %v670, 0.70710677
        %v1203 = vmul.f32 %v925, 0.70710677
        %v1204 = vmul.f32 %v927, 0.70710677
        %v1205 = vmul.f32 %v674, 0.70710677
        %v1206 = vmul.f32 %v676, 0.70710677
        %v1207 = vmul.f32 %v931, 0.70710677
        %v1208 = vmul.f32 %v933, 0.70710677
        %v1209 = vmul.f32 %v680, 0.70710677
        %v1210 = vmul.f32 %v682, 0.70710677
        %v1211 = vmul.f32 %v937, 0.70710677
        %v1212 = vmul.f32 %v939, 0.70710677
        %v1213 = vmul.f32 %v686, 0.70710677
        %v1214 = vmul.f32 %v688, 0.70710677
        %v1215 = vmul.f32 %v943, 0.70710677
        %v1216 = vmul.f32 %v945, 0.70710677
        %v1217 = vmul.f32 %v692, 0.70710677
        %v1218 = vmul.f32 %v694, 0.70710677
        %v1219 = vmul.f32 %v949, 0.70710677
        %v1220 = vmul.f32 %v951, 0.70710677
        %v1221 = vmul.f32 %v698, 0.70710677
        %v1222 = vmul.f32 %v700, 0.70710677
        %v1223 = vmul.f32 %v955, 0.70710677
        %v1224 = vmul.f32 %v957, 0.70710677
        %v1225 = vmul.f32 %v704, 0.70710677
        %v1226 = vmul.f32 %v706, 0.70710677
        %v1227 = vmul.f32 %v961, 0.70710677
        %v1228 = vmul.f32 %v963, 0.70710677
        %v1229 = vmul.f32 %v710, 0.70710677
        %v1230 = vmul.f32 %v712, 0.70710677
        %v1231 = vmul.f32 %v967, 0.70710677
        %v1232 = vmul.f32 %v969, 0.70710677
        %v1233 = vmul.f32 %v716, 0.70710677
        %v1234 = vmul.f32 %v718, 0.70710677
        %v1235 = vmul.f32 %v973, 0.70710677
        %v1236 = vmul.f32 %v975, 0.70710677
        %v1237 = vmul.f32 %v722, 0.70710677
        %v1238 = vmul.f32 %v724, 0.70710677
        %v1239 = vmul.f32 %v979, 0.70710677
        %v1240 = vmul.f32 %v981, 0.70710677
        %v1241 = vmul.f32 %v728, 0.70710677
        %v1242 = vmul.f32 %v730, 0.70710677
        %v1243 = vmul.f32 %v985, 0.70710677
        %v1244 = vmul.f32 %v987, 0.70710677
        %v1245 = verf.f32.pop %v1117
        %v1246 = verf.f32.pop %v1118
        %v1247 = verf.f32.pop %v1119
        %v1248 = verf.f32.pop %v1120
        %v1249 = verf.f32.pop %v1121
        %v1250 = verf.f32.pop %v1122
        %v1251 = verf.f32.pop %v1123
        %v1252 = verf.f32.pop %v1124
        %v1253 = verf.f32.pop %v1125
        %v1254 = verf.f32.pop %v1126
        %v1255 = verf.f32.pop %v1127
        %v1256 = verf.f32.pop %v1128
        %v1257 = verf.f32.pop %v1129
        %v1258 = verf.f32.pop %v1130
        %v1259 = verf.f32.pop %v1131
        %v1260 = verf.f32.pop %v1132
        %v1261 = verf.f32.pop %v1133
        %v1262 = verf.f32.pop %v1134
        %v1263 = verf.f32.pop %v1135
        %v1264 = verf.f32.pop %v1136
        %v1265 = verf.f32.pop %v1137
        %v1266 = verf.f32.pop %v1138
        %v1267 = verf.f32.pop %v1139
        %v1268 = verf.f32.pop %v1140
        %v1269 = verf.f32.pop %v1141
        %v1270 = verf.f32.pop %v1142
        %v1271 = verf.f32.pop %v1143
        %v1272 = verf.f32.pop %v1144
        %v1273 = verf.f32.pop %v1145
        %v1274 = verf.f32.pop %v1146
        %v1275 = verf.f32.pop %v1147
        %v1276 = verf.f32.pop %v1148
        %v1277 = verf.f32.pop %v1149
        %v1278 = verf.f32.pop %v1150
        %v1279 = verf.f32.pop %v1151
        %v1280 = verf.f32.pop %v1152
        %v1281 = verf.f32.pop %v1153
        %v1282 = verf.f32.pop %v1154
        %v1283 = verf.f32.pop %v1155
        %v1284 = verf.f32.pop %v1156
        %v1285 = verf.f32.pop %v1157
        %v1286 = verf.f32.pop %v1158
        %v1287 = verf.f32.pop %v1159
        %v1288 = verf.f32.pop %v1160
        %v1289 = verf.f32.pop %v1161
        %v1290 = verf.f32.pop %v1162
        %v1291 = verf.f32.pop %v1163
        %v1292 = verf.f32.pop %v1164
        %v1293 = verf.f32.pop %v1165
        %v1294 = verf.f32.pop %v1166
        %v1295 = verf.f32.pop %v1167
        %v1296 = verf.f32.pop %v1168
        %v1297 = verf.f32.pop %v1169
        %v1298 = verf.f32.pop %v1170
        %v1299 = verf.f32.pop %v1171
        %v1300 = verf.f32.pop %v1172
        %v1301 = verf.f32.pop %v1173
        %v1302 = verf.f32.pop %v1174
        %v1303 = verf.f32.pop %v1175
        %v1304 = verf.f32.pop %v1176
        %v1305 = verf.f32.pop %v1177
        %v1306 = verf.f32.pop %v1178
        %v1307 = verf.f32.pop %v1179
        %v1308 = verf.f32.pop %v1180
        %v1309 = verf.f32.pop %v1181
        %v1310 = verf.f32.pop %v1182
        %v1311 = verf.f32.pop %v1183
        %v1312 = verf.f32.pop %v1184
        %v1313 = verf.f32.pop %v1185
        %v1314 = verf.f32.pop %v1186
        %v1315 = verf.f32.pop %v1187
        %v1316 = verf.f32.pop %v1188
        %v1317 = verf.f32.pop %v1189
        %v1318 = verf.f32.pop %v1190
        %v1319 = verf.f32.pop %v1191
        %v1320 = verf.f32.pop %v1192
        %v1321 = verf.f32.pop %v1193
        %v1322 = verf.f32.pop %v1194
        %v1323 = verf.f32.pop %v1195
        %v1324 = verf.f32.pop %v1196
        %v1325 = verf.f32.pop %v1197
        %v1326 = verf.f32.pop %v1198
        %v1327 = verf.f32.pop %v1199
        %v1328 = verf.f32.pop %v1200
        %v1329 = verf.f32.pop %v1201
        %v1330 = verf.f32.pop %v1202
        %v1331 = verf.f32.pop %v1203
        %v1332 = verf.f32.pop %v1204
        %v1333 = verf.f32.pop %v1205
        %v1334 = verf.f32.pop %v1206
        %v1335 = verf.f32.pop %v1207
        %v1336 = verf.f32.pop %v1208
        %v1337 = verf.f32.pop %v1209
        %v1338 = verf.f32.pop %v1210
        %v1339 = verf.f32.pop %v1211
        %v1340 = verf.f32.pop %v1212
        %v1341 = verf.f32.pop %v1213
        %v1342 = verf.f32.pop %v1214
        %v1343 = verf.f32.pop %v1215
        %v1344 = verf.f32.pop %v1216
        %v1345 = verf.f32.pop %v1217
        %v1346 = verf.f32.pop %v1218
        %v1347 = verf.f32.pop %v1219
        %v1348 = verf.f32.pop %v1220
        %v1349 = verf.f32.pop %v1221
        %v1350 = verf.f32.pop %v1222
        %v1351 = verf.f32.pop %v1223
        %v1352 = verf.f32.pop %v1224
        %v1353 = verf.f32.pop %v1225
        %v1354 = verf.f32.pop %v1226
        %v1355 = verf.f32.pop %v1227
        %v1356 = verf.f32.pop %v1228
        %v1357 = verf.f32.pop %v1229
        %v1358 = verf.f32.pop %v1230
        %v1359 = verf.f32.pop %v1231
        %v1360 = verf.f32.pop %v1232
        %v1361 = verf.f32.pop %v1233
        %v1362 = verf.f32.pop %v1234
        %v1363 = verf.f32.pop %v1235
        %v1364 = verf.f32.pop %v1236
        %v1365 = verf.f32.pop %v1237
        %v1366 = verf.f32.pop %v1238
        %v1367 = verf.f32.pop %v1239
        %v1368 = verf.f32.pop %v1240
        %v1369 = verf.f32.pop %v1241
        %v1370 = verf.f32.pop %v1242
        %v1371 = verf.f32.pop %v1243
        %v1372 = verf.f32.pop %v1244
        %v1373 = vadd.f32 %v1245, 1.0
        %v1374 = vadd.f32 %v1246, 1.0
        %v1375 = vadd.f32 %v1247, 1.0
        %v1376 = vadd.f32 %v1248, 1.0
        %v1377 = vadd.f32 %v1249, 1.0
        %v1378 = vadd.f32 %v1250, 1.0
        %v1379 = vadd.f32 %v1251, 1.0
        %v1380 = vadd.f32 %v1252, 1.0
        %v1381 = vadd.f32 %v1253, 1.0
        %v1382 = vadd.f32 %v1254, 1.0
        %v1383 = vadd.f32 %v1255, 1.0
        %v1384 = vadd.f32 %v1256, 1.0
        %v1385 = vadd.f32 %v1257, 1.0
        %v1386 = vadd.f32 %v1258, 1.0
        %v1387 = vadd.f32 %v1259, 1.0
        %v1388 = vadd.f32 %v1260, 1.0
        %v1389 = vadd.f32 %v1261, 1.0
        %v1390 = vadd.f32 %v1262, 1.0
        %v1391 = vadd.f32 %v1263, 1.0
        %v1392 = vadd.f32 %v1264, 1.0
        %v1393 = vadd.f32 %v1265, 1.0
        %v1394 = vadd.f32 %v1266, 1.0
        %v1395 = vadd.f32 %v1267, 1.0
        %v1396 = vadd.f32 %v1268, 1.0
        %v1397 = vadd.f32 %v1269, 1.0
        %v1398 = vadd.f32 %v1270, 1.0
        %v1399 = vadd.f32 %v1271, 1.0
        %v1400 = vadd.f32 %v1272, 1.0
        %v1401 = vadd.f32 %v1273, 1.0
        %v1402 = vadd.f32 %v1274, 1.0
        %v1403 = vadd.f32 %v1275, 1.0
        %v1404 = vadd.f32 %v1276, 1.0
        %v1405 = vadd.f32 %v1277, 1.0
        %v1406 = vadd.f32 %v1278, 1.0
        %v1407 = vadd.f32 %v1279, 1.0
        %v1408 = vadd.f32 %v1280, 1.0
        %v1409 = vadd.f32 %v1281, 1.0
        %v1410 = vadd.f32 %v1282, 1.0
        %v1411 = vadd.f32 %v1283, 1.0
        %v1412 = vadd.f32 %v1284, 1.0
        %v1413 = vadd.f32 %v1285, 1.0
        %v1414 = vadd.f32 %v1286, 1.0
        %v1415 = vadd.f32 %v1287, 1.0
        %v1416 = vadd.f32 %v1288, 1.0
        %v1417 = vadd.f32 %v1289, 1.0
        %v1418 = vadd.f32 %v1290, 1.0
        %v1419 = vadd.f32 %v1291, 1.0
        %v1420 = vadd.f32 %v1292, 1.0
        %v1421 = vadd.f32 %v1293, 1.0
        %v1422 = vadd.f32 %v1294, 1.0
        %v1423 = vadd.f32 %v1295, 1.0
        %v1424 = vadd.f32 %v1296, 1.0
        %v1425 = vadd.f32 %v1297, 1.0
        %v1426 = vadd.f32 %v1298, 1.0
        %v1427 = vadd.f32 %v1299, 1.0
        %v1428 = vadd.f32 %v1300, 1.0
        %v1429 = vadd.f32 %v1301, 1.0
        %v1430 = vadd.f32 %v1302, 1.0
        %v1431 = vadd.f32 %v1303, 1.0
        %v1432 = vadd.f32 %v1304, 1.0
        %v1433 = vadd.f32 %v1305, 1.0
        %v1434 = vadd.f32 %v1306, 1.0
        %v1435 = vadd.f32 %v1307, 1.0
        %v1436 = vadd.f32 %v1308, 1.0
        %v1437 = vadd.f32 %v1309, 1.0
        %v1438 = vadd.f32 %v1310, 1.0
        %v1439 = vadd.f32 %v1311, 1.0
        %v1440 = vadd.f32 %v1312, 1.0
        %v1441 = vadd.f32 %v1313, 1.0
        %v1442 = vadd.f32 %v1314, 1.0
        %v1443 = vadd.f32 %v1315, 1.0
        %v1444 = vadd.f32 %v1316, 1.0
        %v1445 = vadd.f32 %v1317, 1.0
        %v1446 = vadd.f32 %v1318, 1.0
        %v1447 = vadd.f32 %v1319, 1.0
        %v1448 = vadd.f32 %v1320, 1.0
        %v1449 = vadd.f32 %v1321, 1.0
        %v1450 = vadd.f32 %v1322, 1.0
        %v1451 = vadd.f32 %v1323, 1.0
        %v1452 = vadd.f32 %v1324, 1.0
        %v1453 = vadd.f32 %v1325, 1.0
        %v1454 = vadd.f32 %v1326, 1.0
        %v1455 = vadd.f32 %v1327, 1.0
        %v1456 = vadd.f32 %v1328, 1.0
        %v1457 = vadd.f32 %v1329, 1.0
        %v1458 = vadd.f32 %v1330, 1.0
        %v1459 = vadd.f32 %v1331, 1.0
        %v1460 = vadd.f32 %v1332, 1.0
        %v1461 = vadd.f32 %v1333, 1.0
        %v1462 = vadd.f32 %v1334, 1.0
        %v1463 = vadd.f32 %v1335, 1.0
        %v1464 = vadd.f32 %v1336, 1.0
        %v1465 = vadd.f32 %v1337, 1.0
        %v1466 = vadd.f32 %v1338, 1.0
        %v1467 = vadd.f32 %v1339, 1.0
        %v1468 = vadd.f32 %v1340, 1.0
        %v1469 = vadd.f32 %v1341, 1.0
        %v1470 = vadd.f32 %v1342, 1.0
        %v1471 = vadd.f32 %v1343, 1.0
        %v1472 = vadd.f32 %v1344, 1.0
        %v1473 = vadd.f32 %v1345, 1.0
        %v1474 = vadd.f32 %v1346, 1.0
        %v1475 = vadd.f32 %v1347, 1.0
        %v1476 = vadd.f32 %v1348, 1.0
        %v1477 = vadd.f32 %v1349, 1.0
        %v1478 = vadd.f32 %v1350, 1.0
        %v1479 = vadd.f32 %v1351, 1.0
        %v1480 = vadd.f32 %v1352, 1.0
        %v1481 = vadd.f32 %v1353, 1.0
        %v1482 = vadd.f32 %v1354, 1.0
        %v1483 = vadd.f32 %v1355, 1.0
        %v1484 = vadd.f32 %v1356, 1.0
        %v1485 = vadd.f32 %v1357, 1.0
        %v1486 = vadd.f32 %v1358, 1.0
        %v1487 = vadd.f32 %v1359, 1.0
        %v1488 = vadd.f32 %v1360, 1.0
        %v1489 = vadd.f32 %v1361, 1.0
        %v1490 = vadd.f32 %v1362, 1.0
        %v1491 = vadd.f32 %v1363, 1.0
        %v1492 = vadd.f32 %v1364, 1.0
        %v1493 = vadd.f32 %v1365, 1.0
        %v1494 = vadd.f32 %v1366, 1.0
        %v1495 = vadd.f32 %v1367, 1.0
        %v1496 = vadd.f32 %v1368, 1.0
        %v1497 = vadd.f32 %v1369, 1.0
        %v1498 = vadd.f32 %v1370, 1.0
        %v1499 = vadd.f32 %v1371, 1.0
        %v1500 = vadd.f32 %v1372, 1.0
        %v1501 = vmul.f32 %v989, %v1373
        %v1502 = vmul.f32 %v990, %v1374
        %v1503 = vmul.f32 %v991, %v1375
        %v1504 = vmul.f32 %v992, %v1376
        %v1505 = vmul.f32 %v993, %v1377
        %v1506 = vmul.f32 %v994, %v1378
        %v1507 = vmul.f32 %v995, %v1379
        %v1508 = vmul.f32 %v996, %v1380
        %v1509 = vmul.f32 %v997, %v1381
        %v1510 = vmul.f32 %v998, %v1382
        %v1511 = vmul.f32 %v999, %v1383
        %v1512 = vmul.f32 %v1000, %v1384
        %v1513 = vmul.f32 %v1001, %v1385
        %v1514 = vmul.f32 %v1002, %v1386
        %v1515 = vmul.f32 %v1003, %v1387
        %v1516 = vmul.f32 %v1004, %v1388
        %v1517 = vmul.f32 %v1005, %v1389
        %v1518 = vmul.f32 %v1006, %v1390
        %v1519 = vmul.f32 %v1007, %v1391
        %v1520 = vmul.f32 %v1008, %v1392
        %v1521 = vmul.f32 %v1009, %v1393
        %v1522 = vmul.f32 %v1010, %v1394
        %v1523 = vmul.f32 %v1011, %v1395
        %v1524 = vmul.f32 %v1012, %v1396
        %v1525 = vmul.f32 %v1013, %v1397
        %v1526 = vmul.f32 %v1014, %v1398
        %v1527 = vmul.f32 %v1015, %v1399
        %v1528 = vmul.f32 %v1016, %v1400
        %v1529 = vmul.f32 %v1017, %v1401
        %v1530 = vmul.f32 %v1018, %v1402
        %v1531 = vmul.f32 %v1019, %v1403
        %v1532 = vmul.f32 %v1020, %v1404
        %v1533 = vmul.f32 %v1021, %v1405
        %v1534 = vmul.f32 %v1022, %v1406
        %v1535 = vmul.f32 %v1023, %v1407
        %v1536 = vmul.f32 %v1024, %v1408
        %v1537 = vmul.f32 %v1025, %v1409
        %v1538 = vmul.f32 %v1026, %v1410
        %v1539 = vmul.f32 %v1027, %v1411
        %v1540 = vmul.f32 %v1028, %v1412
        %v1541 = vmul.f32 %v1029, %v1413
        %v1542 = vmul.f32 %v1030, %v1414
        %v1543 = vmul.f32 %v1031, %v1415
        %v1544 = vmul.f32 %v1032, %v1416
        %v1545 = vmul.f32 %v1033, %v1417
        %v1546 = vmul.f32 %v1034, %v1418
        %v1547 = vmul.f32 %v1035, %v1419
        %v1548 = vmul.f32 %v1036, %v1420
        %v1549 = vmul.f32 %v1037, %v1421
        %v1550 = vmul.f32 %v1038, %v1422
        %v1551 = vmul.f32 %v1039, %v1423
        %v1552 = vmul.f32 %v1040, %v1424
        %v1553 = vmul.f32 %v1041, %v1425
        %v1554 = vmul.f32 %v1042, %v1426
        %v1555 = vmul.f32 %v1043, %v1427
        %v1556 = vmul.f32 %v1044, %v1428
        %v1557 = vmul.f32 %v1045, %v1429
        %v1558 = vmul.f32 %v1046, %v1430
        %v1559 = vmul.f32 %v1047, %v1431
        %v1560 = vmul.f32 %v1048, %v1432
        %v1561 = vmul.f32 %v1049, %v1433
        %v1562 = vmul.f32 %v1050, %v1434
        %v1563 = vmul.f32 %v1051, %v1435
        %v1564 = vmul.f32 %v1052, %v1436
        %v1565 = vmul.f32 %v1053, %v1437
        %v1566 = vmul.f32 %v1054, %v1438
        %v1567 = vmul.f32 %v1055, %v1439
        %v1568 = vmul.f32 %v1056, %v1440
        %v1569 = vmul.f32 %v1057, %v1441
        %v1570 = vmul.f32 %v1058, %v1442
        %v1571 = vmul.f32 %v1059, %v1443
        %v1572 = vmul.f32 %v1060, %v1444
        %v1573 = vmul.f32 %v1061, %v1445
        %v1574 = vmul.f32 %v1062, %v1446
        %v1575 = vmul.f32 %v1063, %v1447
        %v1576 = vmul.f32 %v1064, %v1448
        %v1577 = vmul.f32 %v1065, %v1449
        %v1578 = vmul.f32 %v1066, %v1450
        %v1579 = vmul.f32 %v1067, %v1451
        %v1580 = vmul.f32 %v1068, %v1452
        %v1581 = vmul.f32 %v1069, %v1453
        %v1582 = vmul.f32 %v1070, %v1454
        %v1583 = vmul.f32 %v1071, %v1455
        %v1584 = vmul.f32 %v1072, %v1456
        %v1585 = vmul.f32 %v1073, %v1457
        %v1586 = vmul.f32 %v1074, %v1458
        %v1587 = vmul.f32 %v1075, %v1459
        %v1588 = vmul.f32 %v1076, %v1460
        %v1589 = vmul.f32 %v1077, %v1461
        %v1590 = vmul.f32 %v1078, %v1462
        %v1591 = vmul.f32 %v1079, %v1463
        %v1592 = vmul.f32 %v1080, %v1464
        %v1593 = vmul.f32 %v1081, %v1465
        %v1594 = vmul.f32 %v1082, %v1466
        %v1595 = vmul.f32 %v1083, %v1467
        %v1596 = vmul.f32 %v1084, %v1468
        %v1597 = vmul.f32 %v1085, %v1469
        %v1598 = vmul.f32 %v1086, %v1470
        %v1599 = vmul.f32 %v1087, %v1471
        %v1600 = vmul.f32 %v1088, %v1472
        %v1601 = vmul.f32 %v1089, %v1473
        %v1602 = vmul.f32 %v1090, %v1474
        %v1603 = vmul.f32 %v1091, %v1475
        %v1604 = vmul.f32 %v1092, %v1476
        %v1605 = vmul.f32 %v1093, %v1477
        %v1606 = vmul.f32 %v1094, %v1478
        %v1607 = vmul.f32 %v1095, %v1479
        %v1608 = vmul.f32 %v1096, %v1480
        %v1609 = vmul.f32 %v1097, %v1481
        %v1610 = vmul.f32 %v1098, %v1482
        %v1611 = vmul.f32 %v1099, %v1483
        %v1612 = vmul.f32 %v1100, %v1484
        %v1613 = vmul.f32 %v1101, %v1485
        %v1614 = vmul.f32 %v1102, %v1486
        %v1615 = vmul.f32 %v1103, %v1487
        %v1616 = vmul.f32 %v1104, %v1488
        %v1617 = vmul.f32 %v1105, %v1489
        %v1618 = vmul.f32 %v1106, %v1490
        %v1619 = vmul.f32 %v1107, %v1491
        %v1620 = vmul.f32 %v1108, %v1492
        %v1621 = vmul.f32 %v1109, %v1493
        %v1622 = vmul.f32 %v1110, %v1494
        %v1623 = vmul.f32 %v1111, %v1495
        %v1624 = vmul.f32 %v1112, %v1496
        %v1625 = vmul.f32 %v1113, %v1497
        %v1626 = vmul.f32 %v1114, %v1498
        %v1627 = vmul.f32 %v1115, %v1499
        %v1628 = vmul.f32 %v1116, %v1500
        %v1629 = vld [vmem:[#allocation2] sm:$0xff]
        %v1630 = vld [vmem:[#allocation2 + $0x8] sm:$0xff]
        %v1631 = vld [vmem:[#allocation2 + $0x10] sm:$0xff]
        %v1632 = vld [vmem:[#allocation2 + $0x18] sm:$0xff]
        %v1633 = vld [vmem:[#allocation2 + $0x20] sm:$0xff]
        %v1634 = vld [vmem:[#allocation2 + $0x28] sm:$0xff]
        %v1635 = vld [vmem:[#allocation2 + $0x30] sm:$0xff]
        %v1636 = vld [vmem:[#allocation2 + $0x38] sm:$0xff]
        %v1637 = vld [vmem:[#allocation2 + $0x40] sm:$0xff]
        %v1638 = vld [vmem:[#allocation2 + $0x48] sm:$0xff]
        %v1639 = vld [vmem:[#allocation2 + $0x50] sm:$0xff]
        %v1640 = vld [vmem:[#allocation2 + $0x58] sm:$0xff]
        %v1641 = vld [vmem:[#allocation2 + $0x60] sm:$0xff]
        %v1642 = vld [vmem:[#allocation2 + $0x68] sm:$0xff]
        %v1643 = vld [vmem:[#allocation2 + $0x70] sm:$0xff]
        %v1644 = vld [vmem:[#allocation2 + $0x78] sm:$0xff]
        %v1645 = vld [vmem:[#allocation2 + $0x80] sm:$0xff]
        %v1646 = vld [vmem:[#allocation2 + $0x88] sm:$0xff]
        %v1647 = vld [vmem:[#allocation2 + $0x90] sm:$0xff]
        %v1648 = vld [vmem:[#allocation2 + $0x98] sm:$0xff]
        %v1649 = vld [vmem:[#allocation2 + $0xa0] sm:$0xff]
        %v1650 = vld [vmem:[#allocation2 + $0xa8] sm:$0xff]
        %v1651 = vld [vmem:[#allocation2 + $0xb0] sm:$0xff]
        %v1652 = vld [vmem:[#allocation2 + $0xb8] sm:$0xff]
        %v1653 = vld [vmem:[#allocation2 + $0xc0] sm:$0xff]
        %v1654 = vld [vmem:[#allocation2 + $0xc8] sm:$0xff]
        %v1655 = vld [vmem:[#allocation2 + $0xd0] sm:$0xff]
        %v1656 = vld [vmem:[#allocation2 + $0xd8] sm:$0xff]
        %v1657 = vld [vmem:[#allocation2 + $0xe0] sm:$0xff]
        %v1658 = vld [vmem:[#allocation2 + $0xe8] sm:$0xff]
        %v1659 = vld [vmem:[#allocation2 + $0xf0] sm:$0xff]
        %v1660 = vld [vmem:[#allocation2 + $0xf8] sm:$0xff]
        %v1661 = vld [vmem:[%s314] sm:$0xff]
        %v1662 = vld [vmem:[%s314 + $0x8] sm:$0xff]
        %v1663 = vld [vmem:[%s314 + $0x10] sm:$0xff]
        %v1664 = vld [vmem:[%s314 + $0x18] sm:$0xff]
        %v1665 = vld [vmem:[%s314 + $0x20] sm:$0xff]
        %v1666 = vld [vmem:[%s314 + $0x28] sm:$0xff]
        %v1667 = vld [vmem:[%s314 + $0x30] sm:$0xff]
        %v1668 = vld [vmem:[%s314 + $0x38] sm:$0xff]
        %v1669 = vld [vmem:[%s314 + $0x40] sm:$0xff]
        %v1670 = vld [vmem:[%s314 + $0x48] sm:$0xff]
        %v1671 = vld [vmem:[%s314 + $0x50] sm:$0xff]
        %v1672 = vld [vmem:[%s314 + $0x58] sm:$0xff]
        %v1673 = vld [vmem:[%s314 + $0x60] sm:$0xff]
        %v1674 = vld [vmem:[%s314 + $0x68] sm:$0xff]
        %v1675 = vld [vmem:[%s314 + $0x70] sm:$0xff]
        %v1676 = vld [vmem:[%s314 + $0x78] sm:$0xff]
        %v1677 = vld [vmem:[%s314 + $0x80] sm:$0xff]
        %v1678 = vld [vmem:[%s314 + $0x88] sm:$0xff]
        %v1679 = vld [vmem:[%s314 + $0x90] sm:$0xff]
        %v1680 = vld [vmem:[%s314 + $0x98] sm:$0xff]
        %v1681 = vld [vmem:[%s314 + $0xa0] sm:$0xff]
        %v1682 = vld [vmem:[%s314 + $0xa8] sm:$0xff]
        %v1683 = vld [vmem:[%s314 + $0xb0] sm:$0xff]
        %v1684 = vld [vmem:[%s314 + $0xb8] sm:$0xff]
        %v1685 = vld [vmem:[%s314 + $0xc0] sm:$0xff]
        %v1686 = vld [vmem:[%s314 + $0xc8] sm:$0xff]
        %v1687 = vld [vmem:[%s314 + $0xd0] sm:$0xff]
        %v1688 = vld [vmem:[%s314 + $0xd8] sm:$0xff]
        %v1689 = vld [vmem:[%s314 + $0xe0] sm:$0xff]
        %v1690 = vld [vmem:[%s314 + $0xe8] sm:$0xff]
        %v1691 = vld [vmem:[%s314 + $0xf0] sm:$0xff]
        %v1692 = vld [vmem:[%s314 + $0xf8] sm:$0xff]
        %v1693 = vld [vmem:[%s314 + $0x100] sm:$0xff]
        %v1694 = vld [vmem:[%s314 + $0x108] sm:$0xff]
        %v1695 = vld [vmem:[%s314 + $0x110] sm:$0xff]
        %v1696 = vld [vmem:[%s314 + $0x118] sm:$0xff]
        %v1697 = vld [vmem:[%s314 + $0x120] sm:$0xff]
        %v1698 = vld [vmem:[%s314 + $0x128] sm:$0xff]
        %v1699 = vld [vmem:[%s314 + $0x130] sm:$0xff]
        %v1700 = vld [vmem:[%s314 + $0x138] sm:$0xff]
        %v1701 = vld [vmem:[%s314 + $0x140] sm:$0xff]
        %v1702 = vld [vmem:[%s314 + $0x148] sm:$0xff]
        %v1703 = vld [vmem:[%s314 + $0x150] sm:$0xff]
        %v1704 = vld [vmem:[%s314 + $0x158] sm:$0xff]
        %v1705 = vld [vmem:[%s314 + $0x160] sm:$0xff]
        %v1706 = vld [vmem:[%s314 + $0x168] sm:$0xff]
        %v1707 = vld [vmem:[%s314 + $0x170] sm:$0xff]
        %v1708 = vld [vmem:[%s314 + $0x178] sm:$0xff]
        %v1709 = vld [vmem:[%s314 + $0x180] sm:$0xff]
        %v1710 = vld [vmem:[%s314 + $0x188] sm:$0xff]
        %v1711 = vld [vmem:[%s314 + $0x190] sm:$0xff]
        %v1712 = vld [vmem:[%s314 + $0x198] sm:$0xff]
        %v1713 = vld [vmem:[%s314 + $0x1a0] sm:$0xff]
        %v1714 = vld [vmem:[%s314 + $0x1a8] sm:$0xff]
        %v1715 = vld [vmem:[%s314 + $0x1b0] sm:$0xff]
        %v1716 = vld [vmem:[%s314 + $0x1b8] sm:$0xff]
        %v1717 = vld [vmem:[%s314 + $0x1c0] sm:$0xff]
        %v1718 = vld [vmem:[%s314 + $0x1c8] sm:$0xff]
        %v1719 = vld [vmem:[%s314 + $0x1d0] sm:$0xff]
        %v1720 = vld [vmem:[%s314 + $0x1d8] sm:$0xff]
        %v1721 = vld [vmem:[%s314 + $0x1e0] sm:$0xff]
        %v1722 = vld [vmem:[%s314 + $0x1e8] sm:$0xff]
        %v1723 = vld [vmem:[%s314 + $0x1f0] sm:$0xff]
        %v1724 = vld [vmem:[%s314 + $0x1f8] sm:$0xff]
        %1725 = vmatprep.subr.mxu0 0.0
        %1726 = vmatpush1.msra.mxu0 %v1661
        %1727 = vmatprep.subr.mxu0 0.0
        %1728 = vmatpush1.msra.mxu0 %v1662
        %1729 = vmatprep.subr.mxu0 0.0
        %1730 = vmatpush1.msra.mxu0 %v1663
        %1731 = vmatprep.subr.mxu0 0.0
        %1732 = vmatpush1.msra.mxu0 %v1664
        %1733 = vmatprep.subr.mxu0 0.0
        %1734 = vmatpush1.msra.mxu0 %v1665
        %1735 = vmatprep.subr.mxu0 0.0
        %1736 = vmatpush1.msra.mxu0 %v1666
        %1737 = vmatprep.subr.mxu0 0.0
        %1738 = vmatpush1.msra.mxu0 %v1667
        %1739 = vmatprep.subr.mxu0 0.0
        %1740 = vmatpush1.msra.mxu0 %v1668
        %1741 = vmatprep.subr.mxu0 0.0
        %1742 = vmatpush1.msra.mxu0 %v1669
        %1743 = vmatprep.subr.mxu0 0.0
        %1744 = vmatpush1.msra.mxu0 %v1670
        %1745 = vmatprep.subr.mxu0 0.0
        %1746 = vmatpush1.msra.mxu0 %v1671
        %1747 = vmatprep.subr.mxu0 0.0
        %1748 = vmatpush1.msra.mxu0 %v1672
        %1749 = vmatprep.subr.mxu0 0.0
        %1750 = vmatpush1.msra.mxu0 %v1673
        %1751 = vmatprep.subr.mxu0 0.0
        %1752 = vmatpush1.msra.mxu0 %v1674
        %1753 = vmatprep.subr.mxu0 0.0
        %1754 = vmatpush1.msra.mxu0 %v1675
        %1755 = vmatprep.subr.mxu0 0.0
        %1756 = vmatpush1.msra.mxu0 %v1676
        %1757 = vmatprep.subr.mxu0 0.0
        %1758 = vmatpush1.msra.mxu0 %v1677
        %1759 = vmatprep.subr.mxu0 0.0
        %1760 = vmatpush1.msra.mxu0 %v1678
        %1761 = vmatprep.subr.mxu0 0.0
        %1762 = vmatpush1.msra.mxu0 %v1679
        %1763 = vmatprep.subr.mxu0 0.0
        %1764 = vmatpush1.msra.mxu0 %v1680
        %1765 = vmatprep.subr.mxu0 0.0
        %1766 = vmatpush1.msra.mxu0 %v1681
        %1767 = vmatprep.subr.mxu0 0.0
        %1768 = vmatpush1.msra.mxu0 %v1682
        %1769 = vmatprep.subr.mxu0 0.0
        %1770 = vmatpush1.msra.mxu0 %v1683
        %1771 = vmatprep.subr.mxu0 0.0
        %1772 = vmatpush1.msra.mxu0 %v1684
        %1773 = vmatprep.subr.mxu0 0.0
        %1774 = vmatpush1.msra.mxu0 %v1685
        %1775 = vmatprep.subr.mxu0 0.0
        %1776 = vmatpush1.msra.mxu0 %v1686
        %1777 = vmatprep.subr.mxu0 0.0
        %1778 = vmatpush1.msra.mxu0 %v1687
        %1779 = vmatprep.subr.mxu0 0.0
        %1780 = vmatpush1.msra.mxu0 %v1688
        %1781 = vmatprep.subr.mxu0 0.0
        %1782 = vmatpush1.msra.mxu0 %v1689
        %1783 = vmatprep.subr.mxu0 0.0
        %1784 = vmatpush1.msra.mxu0 %v1690
        %1785 = vmatprep.subr.mxu0 0.0
        %1786 = vmatpush1.msra.mxu0 %v1691
        %1787 = vmatprep.subr.mxu0 0.0
        %1788 = vmatpush1.msra.mxu0 %v1692
        %1789 = vmatprep.mubr.f32.mxu0 %v1502
        %1790 = vmatmul.mubr.f32.gmra.mrb[0].mxu0 %v1501
        %v1791 = vpop.f32.mrb[0].mxu0
        %v1792 = vadd.f32 0.0, %v1791
        %v1793 = vpop.f32.mrb[0].mxu0
        %1794 = vmatprep.mubr.f32.mxu0 %v1506
        %1795 = vmatmul.mubr.f32.gmra.mrb[0].mxu0 %v1505
        %v1796 = vpop.f32.mrb[0].mxu0
        %v1797 = vadd.f32 0.0, %v1796
        %v1798 = vpop.f32.mrb[0].mxu0
        %1799 = vmatprep.mubr.f32.mxu0 %v1510
        %1800 = vmatmul.mubr.f32.gmra.mrb[0].mxu0 %v1509
        %v1801 = vpop.f32.mrb[0].mxu0
        %v1802 = vadd.f32 0.0, %v1801
        %v1803 = vpop.f32.mrb[0].mxu0
        %1804 = vmatprep.mubr.f32.mxu0 %v1514
        %1805 = vmatmul.mubr.f32.gmra.mrb[0].mxu0 %v1513
        %v1806 = vpop.f32.mrb[0].mxu0
        %v1807 = vadd.f32 0.0, %v1806
        %v1808 = vpop.f32.mrb[0].mxu0
        %1809 = vmatprep.mubr.f32.mxu0 %v1518
        %1810 = vmatmul.mubr.f32.gmra.mrb[0].mxu0 %v1517
        %v1811 = vpop.f32.mrb[0].mxu0
        %v1812 = vadd.f32 0.0, %v1811
        %v1813 = vpop.f32.mrb[0].mxu0
        %1814 = vmatprep.mubr.f32.mxu0 %v1522
        %1815 = vmatmul.mubr.f32.gmra.mrb[0].mxu0 %v1521
        %v1816 = vpop.f32.mrb[0].mxu0
        %v1817 = vadd.f32 0.0, %v1816
        %v1818 = vpop.f32.mrb[0].mxu0
        %1819 = vmatprep.mubr.f32.mxu0 %v1526
        %1820 = vmatmul.mubr.f32.gmra.mrb[0].mxu0 %v1525
        %v1821 = vpop.f32.mrb[0].mxu0
        %v1822 = vadd.f32 0.0, %v1821
        %v1823 = vpop.f32.mrb[0].mxu0
        %1824 = vmatprep.mubr.f32.mxu0 %v1530
        %1825 = vmatmul.mubr.f32.gmra.mrb[0].mxu0 %v1529
        %v1826 = vpop.f32.mrb[0].mxu0
        %v1827 = vadd.f32 0.0, %v1826
        %v1828 = vpop.f32.mrb[0].mxu0
        %1829 = vmatprep.mubr.f32.mxu0 %v1534
        %1830 = vmatmul.mubr.f32.gmra.mrb[0].mxu0 %v1533
        %v1831 = vpop.f32.mrb[0].mxu0
        %v1832 = vadd.f32 0.0, %v1831
        %v1833 = vpop.f32.mrb[0].mxu0
        %1834 = vmatprep.mubr.f32.mxu0 %v1538
        %1835 = vmatmul.mubr.f32.gmra.mrb[0].mxu0 %v1537
        %v1836 = vpop.f32.mrb[0].mxu0
        %v1837 = vadd.f32 0.0, %v1836
        %v1838 = vpop.f32.mrb[0].mxu0
        %1839 = vmatprep.mubr.f32.mxu0 %v1542
        %1840 = vmatmul.mubr.f32.gmra.mrb[0].mxu0 %v1541
        %v1841 = vpop.f32.mrb[0].mxu0
        %v1842 = vadd.f32 0.0, %v1841
        %v1843 = vpop.f32.mrb[0].mxu0
        %1844 = vmatprep.mubr.f32.mxu0 %v1546
        %1845 = vmatmul.mubr.f32.gmra.mrb[0].mxu0 %v1545
        %v1846 = vpop.f32.mrb[0].mxu0
        %v1847 = vadd.f32 0.0, %v1846
        %v1848 = vpop.f32.mrb[0].mxu0
        %1849 = vmatprep.mubr.f32.mxu0 %v1550
        %1850 = vmatmul.mubr.f32.gmra.mrb[0].mxu0 %v1549
        %v1851 = vpop.f32.mrb[0].mxu0
        %v1852 = vadd.f32 0.0, %v1851
        %v1853 = vpop.f32.mrb[0].mxu0
        %1854 = vmatprep.mubr.f32.mxu0 %v1554
        %1855 = vmatmul.mubr.f32.gmra.mrb[0].mxu0 %v1553
        %v1856 = vpop.f32.mrb[0].mxu0
        %v1857 = vadd.f32 0.0, %v1856
        %v1858 = vpop.f32.mrb[0].mxu0
        %1859 = vmatprep.mubr.f32.mxu0 %v1558
        %1860 = vmatmul.mubr.f32.gmra.mrb[0].mxu0 %v1557
        %v1861 = vpop.f32.mrb[0].mxu0
        %v1862 = vadd.f32 0.0, %v1861
        %v1863 = vpop.f32.mrb[0].mxu0
        %1864 = vmatprep.mubr.f32.mxu0 %v1562
        %1865 = vmatmul.mubr.f32.gmra.mrb[0].mxu0 %v1561
        %v1866 = vpop.f32.mrb[0].mxu0
        %v1867 = vadd.f32 0.0, %v1866
        %v1868 = vpop.f32.mrb[0].mxu0
        %1869 = vmatprep.mubr.f32.mxu0 %v1566
        %1870 = vmatmul.mubr.f32.gmra.mrb[0].mxu0 %v1565
        %v1871 = vpop.f32.mrb[0].mxu0
        %v1872 = vadd.f32 0.0, %v1871
        %v1873 = vpop.f32.mrb[0].mxu0
        %1874 = vmatprep.mubr.f32.mxu0 %v1570
        %1875 = vmatmul.mubr.f32.gmra.mrb[0].mxu0 %v1569
        %v1876 = vpop.f32.mrb[0].mxu0
        %v1877 = vadd.f32 0.0, %v1876
        %v1878 = vpop.f32.mrb[0].mxu0
        %1879 = vmatprep.mubr.f32.mxu0 %v1574
        %1880 = vmatmul.mubr.f32.gmra.mrb[0].mxu0 %v1573
        %v1881 = vpop.f32.mrb[0].mxu0
        %v1882 = vadd.f32 0.0, %v1881
        %v1883 = vpop.f32.mrb[0].mxu0
        %1884 = vmatprep.mubr.f32.mxu0 %v1578
        %1885 = vmatmul.mubr.f32.gmra.mrb[0].mxu0 %v1577
        %v1886 = vpop.f32.mrb[0].mxu0
        %v1887 = vadd.f32 0.0, %v1886
        %v1888 = vpop.f32.mrb[0].mxu0
        %1889 = vmatprep.mubr.f32.mxu0 %v1582
        %1890 = vmatmul.mubr.f32.gmra.mrb[0].mxu0 %v1581
        %v1891 = vpop.f32.mrb[0].mxu0
        %v1892 = vadd.f32 0.0, %v1891
        %v1893 = vpop.f32.mrb[0].mxu0
        %1894 = vmatprep.mubr.f32.mxu0 %v1586
        %1895 = vmatmul.mubr.f32.gmra.mrb[0].mxu0 %v1585
        %v1896 = vpop.f32.mrb[0].mxu0
        %v1897 = vadd.f32 0.0, %v1896
        %v1898 = vpop.f32.mrb[0].mxu0
        %1899 = vmatprep.mubr.f32.mxu0 %v1590
        %1900 = vmatmul.mubr.f32.gmra.mrb[0].mxu0 %v1589
        %v1901 = vpop.f32.mrb[0].mxu0
        %v1902 = vadd.f32 0.0, %v1901
        %v1903 = vpop.f32.mrb[0].mxu0
        %1904 = vmatprep.mubr.f32.mxu0 %v1594
        %1905 = vmatmul.mubr.f32.gmra.mrb[0].mxu0 %v1593
        %v1906 = vpop.f32.mrb[0].mxu0
        %v1907 = vadd.f32 0.0, %v1906
        %v1908 = vpop.f32.mrb[0].mxu0
        %1909 = vmatprep.mubr.f32.mxu0 %v1598
        %1910 = vmatmul.mubr.f32.gmra.mrb[0].mxu0 %v1597
        %v1911 = vpop.f32.mrb[0].mxu0
        %v1912 = vadd.f32 0.0, %v1911
        %v1913 = vpop.f32.mrb[0].mxu0
        %1914 = vmatprep.mubr.f32.mxu0 %v1602
        %1915 = vmatmul.mubr.f32.gmra.mrb[0].mxu0 %v1601
        %v1916 = vpop.f32.mrb[0].mxu0
        %v1917 = vadd.f32 0.0, %v1916
        %v1918 = vpop.f32.mrb[0].mxu0
        %1919 = vmatprep.mubr.f32.mxu0 %v1606
        %1920 = vmatmul.mubr.f32.gmra.mrb[0].mxu0 %v1605
        %v1921 = vpop.f32.mrb[0].mxu0
        %v1922 = vadd.f32 0.0, %v1921
        %v1923 = vpop.f32.mrb[0].mxu0
        %1924 = vmatprep.mubr.f32.mxu0 %v1610
        %1925 = vmatmul.mubr.f32.gmra.mrb[0].mxu0 %v1609
        %v1926 = vpop.f32.mrb[0].mxu0
        %v1927 = vadd.f32 0.0, %v1926
        %v1928 = vpop.f32.mrb[0].mxu0
        %1929 = vmatprep.mubr.f32.mxu0 %v1614
        %1930 = vmatmul.mubr.f32.gmra.mrb[0].mxu0 %v1613
        %v1931 = vpop.f32.mrb[0].mxu0
        %v1932 = vadd.f32 0.0, %v1931
        %v1933 = vpop.f32.mrb[0].mxu0
        %1934 = vmatprep.mubr.f32.mxu0 %v1618
        %1935 = vmatmul.mubr.f32.gmra.mrb[0].mxu0 %v1617
        %v1936 = vpop.f32.mrb[0].mxu0
        %v1937 = vadd.f32 0.0, %v1936
        %v1938 = vpop.f32.mrb[0].mxu0
        %1939 = vmatprep.mubr.f32.mxu0 %v1622
        %1940 = vmatmul.mubr.f32.gmra.mrb[0].mxu0 %v1621
        %v1941 = vpop.f32.mrb[0].mxu0
        %v1942 = vadd.f32 0.0, %v1941
        %v1943 = vpop.f32.mrb[0].mxu0
        %1944 = vmatprep.mubr.f32.mxu0 %v1626
        %1945 = vmatmul.mubr.f32.gmra.mrb[0].mxu0 %v1625
        %v1946 = vpop.f32.mrb[0].mxu0
        %v1947 = vadd.f32 0.0, %v1946
        %v1948 = vpop.f32.mrb[0].mxu0
        %1949 = vdwg.mxu0
        %1950 = vmatprep.subr.mxu0 0.0
        %1951 = vmatpush1.msra.mxu0 %v1693
        %1952 = vmatprep.subr.mxu0 0.0
        %1953 = vmatpush1.msra.mxu0 %v1694
        %1954 = vmatprep.subr.mxu0 0.0
        %1955 = vmatpush1.msra.mxu0 %v1695
        %1956 = vmatprep.subr.mxu0 0.0
        %1957 = vmatpush1.msra.mxu0 %v1696
        %1958 = vmatprep.subr.mxu0 0.0
        %1959 = vmatpush1.msra.mxu0 %v1697
        %1960 = vmatprep.subr.mxu0 0.0
        %1961 = vmatpush1.msra.mxu0 %v1698
        %1962 = vmatprep.subr.mxu0 0.0
        %1963 = vmatpush1.msra.mxu0 %v1699
        %1964 = vmatprep.subr.mxu0 0.0
        %1965 = vmatpush1.msra.mxu0 %v1700
        %1966 = vmatprep.subr.mxu0 0.0
        %1967 = vmatpush1.msra.mxu0 %v1701
        %1968 = vmatprep.subr.mxu0 0.0
        %1969 = vmatpush1.msra.mxu0 %v1702
        %1970 = vmatprep.subr.mxu0 0.0
        %1971 = vmatpush1.msra.mxu0 %v1703
        %1972 = vmatprep.subr.mxu0 0.0
        %1973 = vmatpush1.msra.mxu0 %v1704
        %1974 = vmatprep.subr.mxu0 0.0
        %1975 = vmatpush1.msra.mxu0 %v1705
        %1976 = vmatprep.subr.mxu0 0.0
        %1977 = vmatpush1.msra.mxu0 %v1706
        %1978 = vmatprep.subr.mxu0 0.0
        %1979 = vmatpush1.msra.mxu0 %v1707
        %1980 = vmatprep.subr.mxu0 0.0
        %1981 = vmatpush1.msra.mxu0 %v1708
        %1982 = vmatprep.subr.mxu0 0.0
        %1983 = vmatpush1.msra.mxu0 %v1709
        %1984 = vmatprep.subr.mxu0 0.0
        %1985 = vmatpush1.msra.mxu0 %v1710
        %1986 = vmatprep.subr.mxu0 0.0
        %1987 = vmatpush1.msra.mxu0 %v1711
        %1988 = vmatprep.subr.mxu0 0.0
        %1989 = vmatpush1.msra.mxu0 %v1712
        %1990 = vmatprep.subr.mxu0 0.0
        %1991 = vmatpush1.msra.mxu0 %v1713
        %1992 = vmatprep.subr.mxu0 0.0
        %1993 = vmatpush1.msra.mxu0 %v1714
        %1994 = vmatprep.subr.mxu0 0.0
        %1995 = vmatpush1.msra.mxu0 %v1715
        %1996 = vmatprep.subr.mxu0 0.0
        %1997 = vmatpush1.msra.mxu0 %v1716
        %1998 = vmatprep.subr.mxu0 0.0
        %1999 = vmatpush1.msra.mxu0 %v1717
        %2000 = vmatprep.subr.mxu0 0.0
        %2001 = vmatpush1.msra.mxu0 %v1718
        %2002 = vmatprep.subr.mxu0 0.0
        %2003 = vmatpush1.msra.mxu0 %v1719
        %2004 = vmatprep.subr.mxu0 0.0
        %2005 = vmatpush1.msra.mxu0 %v1720
        %2006 = vmatprep.subr.mxu0 0.0
        %2007 = vmatpush1.msra.mxu0 %v1721
        %2008 = vmatprep.subr.mxu0 0.0
        %2009 = vmatpush1.msra.mxu0 %v1722
        %2010 = vmatprep.subr.mxu0 0.0
        %2011 = vmatpush1.msra.mxu0 %v1723
        %2012 = vmatprep.subr.mxu0 0.0
        %2013 = vmatpush1.msra.mxu0 %v1724
        %2014 = vmatprep.mubr.f32.mxu0 %v1504
        %2015 = vmatmul.mubr.f32.gmra.mrb[0].mxu0 %v1503
        %v2016 = vpop.f32.mrb[0].mxu0
        %v2017 = vadd.f32 %v1792, %v2016
        %v2018 = vpop.f32.mrb[0].mxu0
        %2019 = vmatprep.mubr.f32.mxu0 %v1508
        %2020 = vmatmul.mubr.f32.gmra.mrb[0].mxu0 %v1507
        %v2021 = vpop.f32.mrb[0].mxu0
        %v2022 = vadd.f32 %v1797, %v2021
        %v2023 = vpop.f32.mrb[0].mxu0
        %2024 = vmatprep.mubr.f32.mxu0 %v1512
        %2025 = vmatmul.mubr.f32.gmra.mrb[0].mxu0 %v1511
        %v2026 = vpop.f32.mrb[0].mxu0
        %v2027 = vadd.f32 %v1802, %v2026
        %v2028 = vpop.f32.mrb[0].mxu0
        %2029 = vmatprep.mubr.f32.mxu0 %v1516
        %2030 = vmatmul.mubr.f32.gmra.mrb[0].mxu0 %v1515
        %v2031 = vpop.f32.mrb[0].mxu0
        %v2032 = vadd.f32 %v1807, %v2031
        %v2033 = vpop.f32.mrb[0].mxu0
        %2034 = vmatprep.mubr.f32.mxu0 %v1520
        %2035 = vmatmul.mubr.f32.gmra.mrb[0].mxu0 %v1519
        %v2036 = vpop.f32.mrb[0].mxu0
        %v2037 = vadd.f32 %v1812, %v2036
        %v2038 = vpop.f32.mrb[0].mxu0
        %2039 = vmatprep.mubr.f32.mxu0 %v1524
        %2040 = vmatmul.mubr.f32.gmra.mrb[0].mxu0 %v1523
        %v2041 = vpop.f32.mrb[0].mxu0
        %v2042 = vadd.f32 %v1817, %v2041
        %v2043 = vpop.f32.mrb[0].mxu0
        %2044 = vmatprep.mubr.f32.mxu0 %v1528
        %2045 = vmatmul.mubr.f32.gmra.mrb[0].mxu0 %v1527
        %v2046 = vpop.f32.mrb[0].mxu0
        %v2047 = vadd.f32 %v1822, %v2046
        %v2048 = vpop.f32.mrb[0].mxu0
        %2049 = vmatprep.mubr.f32.mxu0 %v1532
        %2050 = vmatmul.mubr.f32.gmra.mrb[0].mxu0 %v1531
        %v2051 = vpop.f32.mrb[0].mxu0
        %v2052 = vadd.f32 %v1827, %v2051
        %v2053 = vpop.f32.mrb[0].mxu0
        %2054 = vmatprep.mubr.f32.mxu0 %v1536
        %2055 = vmatmul.mubr.f32.gmra.mrb[0].mxu0 %v1535
        %v2056 = vpop.f32.mrb[0].mxu0
        %v2057 = vadd.f32 %v1832, %v2056
        %v2058 = vpop.f32.mrb[0].mxu0
        %2059 = vmatprep.mubr.f32.mxu0 %v1540
        %2060 = vmatmul.mubr.f32.gmra.mrb[0].mxu0 %v1539
        %v2061 = vpop.f32.mrb[0].mxu0
        %v2062 = vadd.f32 %v1837, %v2061
        %v2063 = vpop.f32.mrb[0].mxu0
        %2064 = vmatprep.mubr.f32.mxu0 %v1544
        %2065 = vmatmul.mubr.f32.gmra.mrb[0].mxu0 %v1543
        %v2066 = vpop.f32.mrb[0].mxu0
        %v2067 = vadd.f32 %v1842, %v2066
        %v2068 = vpop.f32.mrb[0].mxu0
        %2069 = vmatprep.mubr.f32.mxu0 %v1548
        %2070 = vmatmul.mubr.f32.gmra.mrb[0].mxu0 %v1547
        %v2071 = vpop.f32.mrb[0].mxu0
        %v2072 = vadd.f32 %v1847, %v2071
        %v2073 = vpop.f32.mrb[0].mxu0
        %2074 = vmatprep.mubr.f32.mxu0 %v1552
        %2075 = vmatmul.mubr.f32.gmra.mrb[0].mxu0 %v1551
        %v2076 = vpop.f32.mrb[0].mxu0
        %v2077 = vadd.f32 %v1852, %v2076
        %v2078 = vpop.f32.mrb[0].mxu0
        %2079 = vmatprep.mubr.f32.mxu0 %v1556
        %2080 = vmatmul.mubr.f32.gmra.mrb[0].mxu0 %v1555
        %v2081 = vpop.f32.mrb[0].mxu0
        %v2082 = vadd.f32 %v1857, %v2081
        %v2083 = vpop.f32.mrb[0].mxu0
        %2084 = vmatprep.mubr.f32.mxu0 %v1560
        %2085 = vmatmul.mubr.f32.gmra.mrb[0].mxu0 %v1559
        %v2086 = vpop.f32.mrb[0].mxu0
        %v2087 = vadd.f32 %v1862, %v2086
        %v2088 = vpop.f32.mrb[0].mxu0
        %2089 = vmatprep.mubr.f32.mxu0 %v1564
        %2090 = vmatmul.mubr.f32.gmra.mrb[0].mxu0 %v1563
        %v2091 = vpop.f32.mrb[0].mxu0
        %v2092 = vadd.f32 %v1867, %v2091
        %v2093 = vpop.f32.mrb[0].mxu0
        %2094 = vmatprep.mubr.f32.mxu0 %v1568
        %2095 = vmatmul.mubr.f32.gmra.mrb[0].mxu0 %v1567
        %v2096 = vpop.f32.mrb[0].mxu0
        %v2097 = vadd.f32 %v1872, %v2096
        %v2098 = vpop.f32.mrb[0].mxu0
        %2099 = vmatprep.mubr.f32.mxu0 %v1572
        %2100 = vmatmul.mubr.f32.gmra.mrb[0].mxu0 %v1571
        %v2101 = vpop.f32.mrb[0].mxu0
        %v2102 = vadd.f32 %v1877, %v2101
        %v2103 = vpop.f32.mrb[0].mxu0
        %2104 = vmatprep.mubr.f32.mxu0 %v1576
        %2105 = vmatmul.mubr.f32.gmra.mrb[0].mxu0 %v1575
        %v2106 = vpop.f32.mrb[0].mxu0
        %v2107 = vadd.f32 %v1882, %v2106
        %v2108 = vpop.f32.mrb[0].mxu0
        %2109 = vmatprep.mubr.f32.mxu0 %v1580
        %2110 = vmatmul.mubr.f32.gmra.mrb[0].mxu0 %v1579
        %v2111 = vpop.f32.mrb[0].mxu0
        %v2112 = vadd.f32 %v1887, %v2111
        %v2113 = vpop.f32.mrb[0].mxu0
        %2114 = vmatprep.mubr.f32.mxu0 %v1584
        %2115 = vmatmul.mubr.f32.gmra.mrb[0].mxu0 %v1583
        %v2116 = vpop.f32.mrb[0].mxu0
        %v2117 = vadd.f32 %v1892, %v2116
        %v2118 = vpop.f32.mrb[0].mxu0
        %2119 = vmatprep.mubr.f32.mxu0 %v1588
        %2120 = vmatmul.mubr.f32.gmra.mrb[0].mxu0 %v1587
        %v2121 = vpop.f32.mrb[0].mxu0
        %v2122 = vadd.f32 %v1897, %v2121
        %v2123 = vpop.f32.mrb[0].mxu0
        %2124 = vmatprep.mubr.f32.mxu0 %v1592
        %2125 = vmatmul.mubr.f32.gmra.mrb[0].mxu0 %v1591
        %v2126 = vpop.f32.mrb[0].mxu0
        %v2127 = vadd.f32 %v1902, %v2126
        %v2128 = vpop.f32.mrb[0].mxu0
        %2129 = vmatprep.mubr.f32.mxu0 %v1596
        %2130 = vmatmul.mubr.f32.gmra.mrb[0].mxu0 %v1595
        %v2131 = vpop.f32.mrb[0].mxu0
        %v2132 = vadd.f32 %v1907, %v2131
        %v2133 = vpop.f32.mrb[0].mxu0
        %2134 = vmatprep.mubr.f32.mxu0 %v1600
        %2135 = vmatmul.mubr.f32.gmra.mrb[0].mxu0 %v1599
        %v2136 = vpop.f32.mrb[0].mxu0
        %v2137 = vadd.f32 %v1912, %v2136
        %v2138 = vpop.f32.mrb[0].mxu0
        %2139 = vmatprep.mubr.f32.mxu0 %v1604
        %2140 = vmatmul.mubr.f32.gmra.mrb[0].mxu0 %v1603
        %v2141 = vpop.f32.mrb[0].mxu0
        %v2142 = vadd.f32 %v1917, %v2141
        %v2143 = vpop.f32.mrb[0].mxu0
        %2144 = vmatprep.mubr.f32.mxu0 %v1608
        %2145 = vmatmul.mubr.f32.gmra.mrb[0].mxu0 %v1607
        %v2146 = vpop.f32.mrb[0].mxu0
        %v2147 = vadd.f32 %v1922, %v2146
        %v2148 = vpop.f32.mrb[0].mxu0
        %2149 = vmatprep.mubr.f32.mxu0 %v1612
        %2150 = vmatmul.mubr.f32.gmra.mrb[0].mxu0 %v1611
        %v2151 = vpop.f32.mrb[0].mxu0
        %v2152 = vadd.f32 %v1927, %v2151
        %v2153 = vpop.f32.mrb[0].mxu0
        %2154 = vmatprep.mubr.f32.mxu0 %v1616
        %2155 = vmatmul.mubr.f32.gmra.mrb[0].mxu0 %v1615
        %v2156 = vpop.f32.mrb[0].mxu0
        %v2157 = vadd.f32 %v1932, %v2156
        %v2158 = vpop.f32.mrb[0].mxu0
        %2159 = vmatprep.mubr.f32.mxu0 %v1620
        %2160 = vmatmul.mubr.f32.gmra.mrb[0].mxu0 %v1619
        %v2161 = vpop.f32.mrb[0].mxu0
        %v2162 = vadd.f32 %v1937, %v2161
        %v2163 = vpop.f32.mrb[0].mxu0
        %2164 = vmatprep.mubr.f32.mxu0 %v1624
        %2165 = vmatmul.mubr.f32.gmra.mrb[0].mxu0 %v1623
        %v2166 = vpop.f32.mrb[0].mxu0
        %v2167 = vadd.f32 %v1942, %v2166
        %v2168 = vpop.f32.mrb[0].mxu0
        %2169 = vmatprep.mubr.f32.mxu0 %v1628
        %2170 = vmatmul.mubr.f32.gmra.mrb[0].mxu0 %v1627
        %v2171 = vpop.f32.mrb[0].mxu0
        %v2172 = vadd.f32 %v1947, %v2171
        %v2173 = vpop.f32.mrb[0].mxu0
        %2174 = vdwg.mxu0
        %v2175 = vadd.f32 %v1629, %v2017
        %v2176 = vadd.f32 %v1630, %v2022
        %v2177 = vadd.f32 %v1631, %v2027
        %v2178 = vadd.f32 %v1632, %v2032
        %v2179 = vadd.f32 %v1633, %v2037
        %v2180 = vadd.f32 %v1634, %v2042
        %v2181 = vadd.f32 %v1635, %v2047
        %v2182 = vadd.f32 %v1636, %v2052
        %v2183 = vadd.f32 %v1637, %v2057
        %v2184 = vadd.f32 %v1638, %v2062
        %v2185 = vadd.f32 %v1639, %v2067
        %v2186 = vadd.f32 %v1640, %v2072
        %v2187 = vadd.f32 %v1641, %v2077
        %v2188 = vadd.f32 %v1642, %v2082
        %v2189 = vadd.f32 %v1643, %v2087
        %v2190 = vadd.f32 %v1644, %v2092
        %v2191 = vadd.f32 %v1645, %v2097
        %v2192 = vadd.f32 %v1646, %v2102
        %v2193 = vadd.f32 %v1647, %v2107
        %v2194 = vadd.f32 %v1648, %v2112
        %v2195 = vadd.f32 %v1649, %v2117
        %v2196 = vadd.f32 %v1650, %v2122
        %v2197 = vadd.f32 %v1651, %v2127
        %v2198 = vadd.f32 %v1652, %v2132
        %v2199 = vadd.f32 %v1653, %v2137
        %v2200 = vadd.f32 %v1654, %v2142
        %v2201 = vadd.f32 %v1655, %v2147
        %v2202 = vadd.f32 %v1656, %v2152
        %v2203 = vadd.f32 %v1657, %v2157
        %v2204 = vadd.f32 %v1658, %v2162
        %v2205 = vadd.f32 %v1659, %v2167
        %v2206 = vadd.f32 %v1660, %v2172
        %2207 = vst [vmem:[#allocation2] sm:$0xff] %v2175
        %2208 = vst [vmem:[#allocation2 + $0x8] sm:$0xff] %v2176
        %2209 = vst [vmem:[#allocation2 + $0x10] sm:$0xff] %v2177
        %2210 = vst [vmem:[#allocation2 + $0x18] sm:$0xff] %v2178
        %2211 = vst [vmem:[#allocation2 + $0x20] sm:$0xff] %v2179
        %2212 = vst [vmem:[#allocation2 + $0x28] sm:$0xff] %v2180
        %2213 = vst [vmem:[#allocation2 + $0x30] sm:$0xff] %v2181
        %2214 = vst [vmem:[#allocation2 + $0x38] sm:$0xff] %v2182
        %2215 = vst [vmem:[#allocation2 + $0x40] sm:$0xff] %v2183
        %2216 = vst [vmem:[#allocation2 + $0x48] sm:$0xff] %v2184
        %2217 = vst [vmem:[#allocation2 + $0x50] sm:$0xff] %v2185
        %2218 = vst [vmem:[#allocation2 + $0x58] sm:$0xff] %v2186
        %2219 = vst [vmem:[#allocation2 + $0x60] sm:$0xff] %v2187
        %2220 = vst [vmem:[#allocation2 + $0x68] sm:$0xff] %v2188
        %2221 = vst [vmem:[#allocation2 + $0x70] sm:$0xff] %v2189
        %2222 = vst [vmem:[#allocation2 + $0x78] sm:$0xff] %v2190
        %2223 = vst [vmem:[#allocation2 + $0x80] sm:$0xff] %v2191
        %2224 = vst [vmem:[#allocation2 + $0x88] sm:$0xff] %v2192
        %2225 = vst [vmem:[#allocation2 + $0x90] sm:$0xff] %v2193
        %2226 = vst [vmem:[#allocation2 + $0x98] sm:$0xff] %v2194
        %2227 = vst [vmem:[#allocation2 + $0xa0] sm:$0xff] %v2195
        %2228 = vst [vmem:[#allocation2 + $0xa8] sm:$0xff] %v2196
        %2229 = vst [vmem:[#allocation2 + $0xb0] sm:$0xff] %v2197
        %2230 = vst [vmem:[#allocation2 + $0xb8] sm:$0xff] %v2198
        %2231 = vst [vmem:[#allocation2 + $0xc0] sm:$0xff] %v2199
        %2232 = vst [vmem:[#allocation2 + $0xc8] sm:$0xff] %v2200
        %2233 = vst [vmem:[#allocation2 + $0xd0] sm:$0xff] %v2201
        %2234 = vst [vmem:[#allocation2 + $0xd8] sm:$0xff] %v2202
        %2235 = vst [vmem:[#allocation2 + $0xe0] sm:$0xff] %v2203
        %2236 = vst [vmem:[#allocation2 + $0xe8] sm:$0xff] %v2204
        %2237 = vst [vmem:[#allocation2 + $0xf0] sm:$0xff] %v2205
        %2238 = vst [vmem:[#allocation2 + $0xf8] sm:$0xff] %v2206
        // Predicated region
        $region45: #{mlp_pallas.1} parent=39 // pred_check
          %p2239 = pneg %p321
        $region46: #{mlp_pallas.1} parent=39 // pred_check_branch
          %2241 = sbr.rel (%p2239) target = $region48
        $region47: #{mlp_pallas.1} parent=39 // pred_region
          %v2242 = vld [vmem:[#allocation2] sm:$0xff]
          %v2243 = vld [vmem:[#allocation2 + $0x8] sm:$0xff]
          %v2244 = vld [vmem:[#allocation2 + $0x10] sm:$0xff]
          %v2245 = vld [vmem:[#allocation2 + $0x18] sm:$0xff]
          %v2246 = vld [vmem:[#allocation2 + $0x20] sm:$0xff]
          %v2247 = vld [vmem:[#allocation2 + $0x28] sm:$0xff]
          %v2248 = vld [vmem:[#allocation2 + $0x30] sm:$0xff]
          %v2249 = vld [vmem:[#allocation2 + $0x38] sm:$0xff]
          %v2250 = vld [vmem:[#allocation2 + $0x40] sm:$0xff]
          %v2251 = vld [vmem:[#allocation2 + $0x48] sm:$0xff]
          %v2252 = vld [vmem:[#allocation2 + $0x50] sm:$0xff]
          %v2253 = vld [vmem:[#allocation2 + $0x58] sm:$0xff]
          %v2254 = vld [vmem:[#allocation2 + $0x60] sm:$0xff]
          %v2255 = vld [vmem:[#allocation2 + $0x68] sm:$0xff]
          %v2256 = vld [vmem:[#allocation2 + $0x70] sm:$0xff]
          %v2257 = vld [vmem:[#allocation2 + $0x78] sm:$0xff]
          %v2258 = vld [vmem:[#allocation2 + $0x80] sm:$0xff]
          %v2259 = vld [vmem:[#allocation2 + $0x88] sm:$0xff]
          %v2260 = vld [vmem:[#allocation2 + $0x90] sm:$0xff]
          %v2261 = vld [vmem:[#allocation2 + $0x98] sm:$0xff]
          %v2262 = vld [vmem:[#allocation2 + $0xa0] sm:$0xff]
          %v2263 = vld [vmem:[#allocation2 + $0xa8] sm:$0xff]
          %v2264 = vld [vmem:[#allocation2 + $0xb0] sm:$0xff]
          %v2265 = vld [vmem:[#allocation2 + $0xb8] sm:$0xff]
          %v2266 = vld [vmem:[#allocation2 + $0xc0] sm:$0xff]
          %v2267 = vld [vmem:[#allocation2 + $0xc8] sm:$0xff]
          %v2268 = vld [vmem:[#allocation2 + $0xd0] sm:$0xff]
          %v2269 = vld [vmem:[#allocation2 + $0xd8] sm:$0xff]
          %v2270 = vld [vmem:[#allocation2 + $0xe0] sm:$0xff]
          %v2271 = vld [vmem:[#allocation2 + $0xe8] sm:$0xff]
          %v2272 = vld [vmem:[#allocation2 + $0xf0] sm:$0xff]
          %v2273 = vld [vmem:[#allocation2 + $0xf8] sm:$0xff]
          %v2274 = vld [vmem:[%s4] sm:$0x1]
          %v2276 = vlaneseq
          %v2277 = vshrl.u32 %v2276, 7
          %v2278 = vsub.s32 0, %v2277
          %v2279 = vrot.slane %v2274, %v2278
          %v2281 = vadd.f32 %v2242, %v2279
          %v2282 = vadd.f32 %v2243, %v2279
          %v2283 = vadd.f32 %v2244, %v2279
          %v2284 = vadd.f32 %v2245, %v2279
          %v2285 = vadd.f32 %v2246, %v2279
          %v2286 = vadd.f32 %v2247, %v2279
          %v2287 = vadd.f32 %v2248, %v2279
          %v2288 = vadd.f32 %v2249, %v2279
          %v2289 = vadd.f32 %v2250, %v2279
          %v2290 = vadd.f32 %v2251, %v2279
          %v2291 = vadd.f32 %v2252, %v2279
          %v2292 = vadd.f32 %v2253, %v2279
          %v2293 = vadd.f32 %v2254, %v2279
          %v2294 = vadd.f32 %v2255, %v2279
          %v2295 = vadd.f32 %v2256, %v2279
          %v2296 = vadd.f32 %v2257, %v2279
          %v2297 = vadd.f32 %v2258, %v2279
          %v2298 = vadd.f32 %v2259, %v2279
          %v2299 = vadd.f32 %v2260, %v2279
          %v2300 = vadd.f32 %v2261, %v2279
          %v2301 = vadd.f32 %v2262, %v2279
          %v2302 = vadd.f32 %v2263, %v2279
          %v2303 = vadd.f32 %v2264, %v2279
          %v2304 = vadd.f32 %v2265, %v2279
          %v2305 = vadd.f32 %v2266, %v2279
          %v2306 = vadd.f32 %v2267, %v2279
          %v2307 = vadd.f32 %v2268, %v2279
          %v2308 = vadd.f32 %v2269, %v2279
          %v2309 = vadd.f32 %v2270, %v2279
          %v2310 = vadd.f32 %v2271, %v2279
          %v2311 = vadd.f32 %v2272, %v2279
          %v2312 = vadd.f32 %v2273, %v2279
          %2313 = vst [vmem:[%s284] sm:$0xff] %v2281
          %2314 = vst [vmem:[%s284 + $0x8] sm:$0xff] %v2282
          %2315 = vst [vmem:[%s284 + $0x10] sm:$0xff] %v2283
          %2316 = vst [vmem:[%s284 + $0x18] sm:$0xff] %v2284
          %2317 = vst [vmem:[%s284 + $0x20] sm:$0xff] %v2285
          %2318 = vst [vmem:[%s284 + $0x28] sm:$0xff] %v2286
          %2319 = vst [vmem:[%s284 + $0x30] sm:$0xff] %v2287
          %2320 = vst [vmem:[%s284 + $0x38] sm:$0xff] %v2288
          %2321 = vst [vmem:[%s284 + $0x40] sm:$0xff] %v2289
          %2322 = vst [vmem:[%s284 + $0x48] sm:$0xff] %v2290
          %2323 = vst [vmem:[%s284 + $0x50] sm:$0xff] %v2291
          %2324 = vst [vmem:[%s284 + $0x58] sm:$0xff] %v2292
          %2325 = vst [vmem:[%s284 + $0x60] sm:$0xff] %v2293
          %2326 = vst [vmem:[%s284 + $0x68] sm:$0xff] %v2294
          %2327 = vst [vmem:[%s284 + $0x70] sm:$0xff] %v2295
          %2328 = vst [vmem:[%s284 + $0x78] sm:$0xff] %v2296
          %2329 = vst [vmem:[%s284 + $0x80] sm:$0xff] %v2297
          %2330 = vst [vmem:[%s284 + $0x88] sm:$0xff] %v2298
          %2331 = vst [vmem:[%s284 + $0x90] sm:$0xff] %v2299
          %2332 = vst [vmem:[%s284 + $0x98] sm:$0xff] %v2300
          %2333 = vst [vmem:[%s284 + $0xa0] sm:$0xff] %v2301
          %2334 = vst [vmem:[%s284 + $0xa8] sm:$0xff] %v2302
          %2335 = vst [vmem:[%s284 + $0xb0] sm:$0xff] %v2303
          %2336 = vst [vmem:[%s284 + $0xb8] sm:$0xff] %v2304
          %2337 = vst [vmem:[%s284 + $0xc0] sm:$0xff] %v2305
          %2338 = vst [vmem:[%s284 + $0xc8] sm:$0xff] %v2306
          %2339 = vst [vmem:[%s284 + $0xd0] sm:$0xff] %v2307
          %2340 = vst [vmem:[%s284 + $0xd8] sm:$0xff] %v2308
          %2341 = vst [vmem:[%s284 + $0xe0] sm:$0xff] %v2309
          %2342 = vst [vmem:[%s284 + $0xe8] sm:$0xff] %v2310
          %2343 = vst [vmem:[%s284 + $0xf0] sm:$0xff] %v2311
          %2344 = vst [vmem:[%s284 + $0xf8] sm:$0xff] %v2312
        $region48: #{mlp_pallas.1} parent=39 // pred_fallthru
          _
        %s2345 = sand.u32 %s161, 1
        %s2346 = sand.u32 %s161, 1
        %s2347 = smul.addr %s2346, 256
        %s2348 = scalar_lea.vmem [#allocation3], %s2347
        // Predicated region
        $region49: #{mlp_pallas.1} parent=39 // pred_check
          %p2349 = pneg %p171
        $region50: #{mlp_pallas.1} parent=39 // pred_check_branch
          %2351 = sbr.rel (%p2349) target = $region52
        $region51: #{mlp_pallas.1} parent=39 // pred_region
          %s2352 = smul.u32 32, %s20
          %s2353 = ssub.s32 50, %s2352
          %p2354 = scmp.lt.s32.totalorder %s2353, 32
          %s2355 = scalar_select %p2354, %s2353, 32
          %s2356 = smul.u32 128, %s2355
          %p2357 = scmp.ne.s32.totalorder 0, %s2356
          %s2358 = smul.addr %s2352, 8
          %s2359 = scalar_lea.vmem %s5, %s2358
          // Predicated region
          $region53: #{mlp_pallas.1} parent=51 // pred_check
            %p2360 = pneg %p2357
          $region54: #{mlp_pallas.1} parent=51 // pred_check_branch
            %2362 = sbr.rel (%p2360) target = $region56
          $region55: #{mlp_pallas.1} parent=51 // pred_region
            // Predicated region
            $region57: #{mlp_pallas.1} parent=55 // pred_check
              _
            $region58: #{mlp_pallas.1} parent=55 // pred_check_branch
              %2364 = sbr.rel (0) target = $region60
            $region59: #{mlp_pallas.1} parent=55 // pred_region
              // Predicated region
              $region79: #{mlp_pallas.1} parent=59 // pred_check
                _
              $region80: #{mlp_pallas.1} parent=59 // pred_check_branch
                %2475 = sbr.rel (0) target = $region82
              $region81: #{mlp_pallas.1} parent=59 // pred_region
                %s2476 = sshrl.u32 %s2355, 5
                // While loop
                $region83: #{mlp_pallas.1} parent=81 // loop_pre_header
                  _
                $region84: #{mlp_pallas.1} parent=81 // loop_header
                  %s2478 = sphi 0, %s2480
                  %p2479 = scmp.ge.s32.totalorder %s2478, %s2476
                  %s2483 = sphi 0, %s2552
                  %s2484 = sphi %s2348, %s2555
                  %s2485 = sphi %s2359, %s2556
                $region85: #{mlp_pallas.1} parent=81 // loop_header_branch
                  %2482 = sbr.rel (%p2479) target = $region89
                $region86: #{mlp_pallas.1} parent=81 // loop_body
                  %v2486 = vld [vmem:[%s2484] sm:$0xff]
                  %2487 = vst [vmem:[%s2485] sm:$0xff] %v2486
                  %v2488 = vld [vmem:[%s2484 + $0x8] sm:$0xff]
                  %2489 = vst [vmem:[%s2485 + $0x8] sm:$0xff] %v2488
                  %v2490 = vld [vmem:[%s2484 + $0x10] sm:$0xff]
                  %2491 = vst [vmem:[%s2485 + $0x10] sm:$0xff] %v2490
                  %v2492 = vld [vmem:[%s2484 + $0x18] sm:$0xff]
                  %2493 = vst [vmem:[%s2485 + $0x18] sm:$0xff] %v2492
                  %v2494 = vld [vmem:[%s2484 + $0x20] sm:$0xff]
                  %2495 = vst [vmem:[%s2485 + $0x20] sm:$0xff] %v2494
                  %v2496 = vld [vmem:[%s2484 + $0x28] sm:$0xff]
                  %2497 = vst [vmem:[%s2485 + $0x28] sm:$0xff] %v2496
                  %v2498 = vld [vmem:[%s2484 + $0x30] sm:$0xff]
                  %2499 = vst [vmem:[%s2485 + $0x30] sm:$0xff] %v2498
                  %v2500 = vld [vmem:[%s2484 + $0x38] sm:$0xff]
                  %2501 = vst [vmem:[%s2485 + $0x38] sm:$0xff] %v2500
                  %v2502 = vld [vmem:[%s2484 + $0x40] sm:$0xff]
                  %2503 = vst [vmem:[%s2485 + $0x40] sm:$0xff] %v2502
                  %v2504 = vld [vmem:[%s2484 + $0x48] sm:$0xff]
                  %2505 = vst [vmem:[%s2485 + $0x48] sm:$0xff] %v2504
                  %v2506 = vld [vmem:[%s2484 + $0x50] sm:$0xff]
                  %2507 = vst [vmem:[%s2485 + $0x50] sm:$0xff] %v2506
                  %v2508 = vld [vmem:[%s2484 + $0x58] sm:$0xff]
                  %2509 = vst [vmem:[%s2485 + $0x58] sm:$0xff] %v2508
                  %v2510 = vld [vmem:[%s2484 + $0x60] sm:$0xff]
                  %2511 = vst [vmem:[%s2485 + $0x60] sm:$0xff] %v2510
                  %v2512 = vld [vmem:[%s2484 + $0x68] sm:$0xff]
                  %2513 = vst [vmem:[%s2485 + $0x68] sm:$0xff] %v2512
                  %v2514 = vld [vmem:[%s2484 + $0x70] sm:$0xff]
                  %2515 = vst [vmem:[%s2485 + $0x70] sm:$0xff] %v2514
                  %v2516 = vld [vmem:[%s2484 + $0x78] sm:$0xff]
                  %2517 = vst [vmem:[%s2485 + $0x78] sm:$0xff] %v2516
                  %v2518 = vld [vmem:[%s2484 + $0x80] sm:$0xff]
                  %2519 = vst [vmem:[%s2485 + $0x80] sm:$0xff] %v2518
                  %v2520 = vld [vmem:[%s2484 + $0x88] sm:$0xff]
                  %2521 = vst [vmem:[%s2485 + $0x88] sm:$0xff] %v2520
                  %v2522 = vld [vmem:[%s2484 + $0x90] sm:$0xff]
                  %2523 = vst [vmem:[%s2485 + $0x90] sm:$0xff] %v2522
                  %v2524 = vld [vmem:[%s2484 + $0x98] sm:$0xff]
                  %2525 = vst [vmem:[%s2485 + $0x98] sm:$0xff] %v2524
                  %v2526 = vld [vmem:[%s2484 + $0xa0] sm:$0xff]
                  %2527 = vst [vmem:[%s2485 + $0xa0] sm:$0xff] %v2526
                  %v2528 = vld [vmem:[%s2484 + $0xa8] sm:$0xff]
                  %2529 = vst [vmem:[%s2485 + $0xa8] sm:$0xff] %v2528
                  %v2530 = vld [vmem:[%s2484 + $0xb0] sm:$0xff]
                  %2531 = vst [vmem:[%s2485 + $0xb0] sm:$0xff] %v2530
                  %v2532 = vld [vmem:[%s2484 + $0xb8] sm:$0xff]
                  %2533 = vst [vmem:[%s2485 + $0xb8] sm:$0xff] %v2532
                  %v2534 = vld [vmem:[%s2484 + $0xc0] sm:$0xff]
                  %2535 = vst [vmem:[%s2485 + $0xc0] sm:$0xff] %v2534
                  %v2536 = vld [vmem:[%s2484 + $0xc8] sm:$0xff]
                  %2537 = vst [vmem:[%s2485 + $0xc8] sm:$0xff] %v2536
                  %v2538 = vld [vmem:[%s2484 + $0xd0] sm:$0xff]
                  %2539 = vst [vmem:[%s2485 + $0xd0] sm:$0xff] %v2538
                  %v2540 = vld [vmem:[%s2484 + $0xd8] sm:$0xff]
                  %2541 = vst [vmem:[%s2485 + $0xd8] sm:$0xff] %v2540
                  %v2542 = vld [vmem:[%s2484 + $0xe0] sm:$0xff]
                  %2543 = vst [vmem:[%s2485 + $0xe0] sm:$0xff] %v2542
                  %v2544 = vld [vmem:[%s2484 + $0xe8] sm:$0xff]
                  %2545 = vst [vmem:[%s2485 + $0xe8] sm:$0xff] %v2544
                  %v2546 = vld [vmem:[%s2484 + $0xf0] sm:$0xff]
                  %2547 = vst [vmem:[%s2485 + $0xf0] sm:$0xff] %v2546
                  %v2548 = vld [vmem:[%s2484 + $0xf8] sm:$0xff]
                  %2549 = vst [vmem:[%s2485 + $0xf8] sm:$0xff] %v2548
                  %s2550 = sadd.s32 1, %s2483
                  %p2551 = scmp.ge.s32.totalorder %s2550, %s2476
                  %s2552 = scalar_select %p2551, 0, %s2550
                  %s2553 = smul.u32 %s2552, 256
                  %s2554 = smul.u32 %s2552, 256
                  %s2555 = scalar_lea.vmem %s2348, %s2553 [#allocation3]
                  %s2556 = scalar_lea.vmem %s2359, %s2554
                $region87: #{mlp_pallas.1} parent=81 // loop_footer
                  %s2480 = sadd.s32 %s2478, 1
                $region88: #{mlp_pallas.1} parent=81 // loop_footer_branch
                  %2477 = sbr.rel target = $region84
                $region89: #{mlp_pallas.1} parent=81 // loop_exit
                  _
                %s2557 = sshrl.u32 %s2355, 5
                %s2558 = sand.u32 %s2355, 31
                %s2559 = smul.u32 %s2557, 32
                %s2560 = smul.u32 8, %s2559
                %s2561 = scalar_lea.vmem %s2348, %s2560 [#allocation3]
                %s2562 = smul.u32 8, %s2559
                %s2563 = scalar_lea.vmem %s2359, %s2562
                // While loop
                $region90: #{mlp_pallas.1} parent=81 // loop_pre_header
                  _
                $region91: #{mlp_pallas.1} parent=81 // loop_header
                  %s2565 = sphi 0, %s2567
                  %p2566 = scmp.ge.s32.totalorder %s2565, %s2558
                  %s2570 = sphi 0, %s2577
                  %s2571 = sphi %s2561, %s2580
                  %s2572 = sphi %s2563, %s2581
                $region92: #{mlp_pallas.1} parent=81 // loop_header_branch
                  %2569 = sbr.rel (%p2566) target = $region96
                $region93: #{mlp_pallas.1} parent=81 // loop_body
                  %v2573 = vld [vmem:[%s2571] sm:$0xff]
                  %2574 = vst [vmem:[%s2572] sm:$0xff] %v2573
                  %s2575 = sadd.s32 1, %s2570
                  %p2576 = scmp.ge.s32.totalorder %s2575, %s2558
                  %s2577 = scalar_select %p2576, 0, %s2575
                  %s2578 = smul.u32 %s2577, 8
                  %s2579 = smul.u32 %s2577, 8
                  %s2580 = scalar_lea.vmem %s2561, %s2578 [#allocation3]
                  %s2581 = scalar_lea.vmem %s2563, %s2579
                $region94: #{mlp_pallas.1} parent=81 // loop_footer
                  %s2567 = sadd.s32 %s2565, 1
                $region95: #{mlp_pallas.1} parent=81 // loop_footer_branch
                  %2564 = sbr.rel target = $region91
                $region96: #{mlp_pallas.1} parent=81 // loop_exit
                  _
              $region82: #{mlp_pallas.1} parent=59 // pred_fallthru
                _
              // Predicated region
              $region97: #{mlp_pallas.1} parent=59 // pred_check
                _
              $region98: #{mlp_pallas.1} parent=59 // pred_check_branch
                %2583 = sbr.rel target = $region100
              $region99: #{mlp_pallas.1} parent=59 // pred_region
                _
              $region100: #{mlp_pallas.1} parent=59 // pred_fallthru
                _
            $region60: #{mlp_pallas.1} parent=55 // pred_fallthru
              _
            // Predicated region
            $region61: #{mlp_pallas.1} parent=55 // pred_check
              _
            $region62: #{mlp_pallas.1} parent=55 // pred_check_branch
              %2366 = sbr.rel target = $region64
            $region63: #{mlp_pallas.1} parent=55 // pred_region
              %s2368 = sshrl.u32 %s2355, 5
              // While loop
              $region65: #{mlp_pallas.1} parent=63 // loop_pre_header
                _
              $region66: #{mlp_pallas.1} parent=63 // loop_header
                %s2370 = sphi 0, %s2372
                %p2371 = scmp.ge.s32.totalorder %s2370, %s2368
                %s2375 = sphi 0, %s2444
                %s2376 = sphi %s2348, %s2447
                %s2377 = sphi %s2359, %s2448
              $region67: #{mlp_pallas.1} parent=63 // loop_header_branch
                %2374 = sbr.rel (%p2371) target = $region71
              $region68: #{mlp_pallas.1} parent=63 // loop_body
                %v2378 = vld [vmem:[%s2376] sm:$0xff]
                %2379 = vst [vmem:[%s2377] sm:$0xff] %v2378
                %v2380 = vld [vmem:[%s2376 + $0x8] sm:$0xff]
                %2381 = vst [vmem:[%s2377 + $0x8] sm:$0xff] %v2380
                %v2382 = vld [vmem:[%s2376 + $0x10] sm:$0xff]
                %2383 = vst [vmem:[%s2377 + $0x10] sm:$0xff] %v2382
                %v2384 = vld [vmem:[%s2376 + $0x18] sm:$0xff]
                %2385 = vst [vmem:[%s2377 + $0x18] sm:$0xff] %v2384
                %v2386 = vld [vmem:[%s2376 + $0x20] sm:$0xff]
                %2387 = vst [vmem:[%s2377 + $0x20] sm:$0xff] %v2386
                %v2388 = vld [vmem:[%s2376 + $0x28] sm:$0xff]
                %2389 = vst [vmem:[%s2377 + $0x28] sm:$0xff] %v2388
                %v2390 = vld [vmem:[%s2376 + $0x30] sm:$0xff]
                %2391 = vst [vmem:[%s2377 + $0x30] sm:$0xff] %v2390
                %v2392 = vld [vmem:[%s2376 + $0x38] sm:$0xff]
                %2393 = vst [vmem:[%s2377 + $0x38] sm:$0xff] %v2392
                %v2394 = vld [vmem:[%s2376 + $0x40] sm:$0xff]
                %2395 = vst [vmem:[%s2377 + $0x40] sm:$0xff] %v2394
                %v2396 = vld [vmem:[%s2376 + $0x48] sm:$0xff]
                %2397 = vst [vmem:[%s2377 + $0x48] sm:$0xff] %v2396
                %v2398 = vld [vmem:[%s2376 + $0x50] sm:$0xff]
                %2399 = vst [vmem:[%s2377 + $0x50] sm:$0xff] %v2398
                %v2400 = vld [vmem:[%s2376 + $0x58] sm:$0xff]
                %2401 = vst [vmem:[%s2377 + $0x58] sm:$0xff] %v2400
                %v2402 = vld [vmem:[%s2376 + $0x60] sm:$0xff]
                %2403 = vst [vmem:[%s2377 + $0x60] sm:$0xff] %v2402
                %v2404 = vld [vmem:[%s2376 + $0x68] sm:$0xff]
                %2405 = vst [vmem:[%s2377 + $0x68] sm:$0xff] %v2404
                %v2406 = vld [vmem:[%s2376 + $0x70] sm:$0xff]
                %2407 = vst [vmem:[%s2377 + $0x70] sm:$0xff] %v2406
                %v2408 = vld [vmem:[%s2376 + $0x78] sm:$0xff]
                %2409 = vst [vmem:[%s2377 + $0x78] sm:$0xff] %v2408
                %v2410 = vld [vmem:[%s2376 + $0x80] sm:$0xff]
                %2411 = vst [vmem:[%s2377 + $0x80] sm:$0xff] %v2410
                %v2412 = vld [vmem:[%s2376 + $0x88] sm:$0xff]
                %2413 = vst [vmem:[%s2377 + $0x88] sm:$0xff] %v2412
                %v2414 = vld [vmem:[%s2376 + $0x90] sm:$0xff]
                %2415 = vst [vmem:[%s2377 + $0x90] sm:$0xff] %v2414
                %v2416 = vld [vmem:[%s2376 + $0x98] sm:$0xff]
                %2417 = vst [vmem:[%s2377 + $0x98] sm:$0xff] %v2416
                %v2418 = vld [vmem:[%s2376 + $0xa0] sm:$0xff]
                %2419 = vst [vmem:[%s2377 + $0xa0] sm:$0xff] %v2418
                %v2420 = vld [vmem:[%s2376 + $0xa8] sm:$0xff]
                %2421 = vst [vmem:[%s2377 + $0xa8] sm:$0xff] %v2420
                %v2422 = vld [vmem:[%s2376 + $0xb0] sm:$0xff]
                %2423 = vst [vmem:[%s2377 + $0xb0] sm:$0xff] %v2422
                %v2424 = vld [vmem:[%s2376 + $0xb8] sm:$0xff]
                %2425 = vst [vmem:[%s2377 + $0xb8] sm:$0xff] %v2424
                %v2426 = vld [vmem:[%s2376 + $0xc0] sm:$0xff]
                %2427 = vst [vmem:[%s2377 + $0xc0] sm:$0xff] %v2426
                %v2428 = vld [vmem:[%s2376 + $0xc8] sm:$0xff]
                %2429 = vst [vmem:[%s2377 + $0xc8] sm:$0xff] %v2428
                %v2430 = vld [vmem:[%s2376 + $0xd0] sm:$0xff]
                %2431 = vst [vmem:[%s2377 + $0xd0] sm:$0xff] %v2430
                %v2432 = vld [vmem:[%s2376 + $0xd8] sm:$0xff]
                %2433 = vst [vmem:[%s2377 + $0xd8] sm:$0xff] %v2432
                %v2434 = vld [vmem:[%s2376 + $0xe0] sm:$0xff]
                %2435 = vst [vmem:[%s2377 + $0xe0] sm:$0xff] %v2434
                %v2436 = vld [vmem:[%s2376 + $0xe8] sm:$0xff]
                %2437 = vst [vmem:[%s2377 + $0xe8] sm:$0xff] %v2436
                %v2438 = vld [vmem:[%s2376 + $0xf0] sm:$0xff]
                %2439 = vst [vmem:[%s2377 + $0xf0] sm:$0xff] %v2438
                %v2440 = vld [vmem:[%s2376 + $0xf8] sm:$0xff]
                %2441 = vst [vmem:[%s2377 + $0xf8] sm:$0xff] %v2440
                %s2442 = sadd.s32 1, %s2375
                %p2443 = scmp.ge.s32.totalorder %s2442, %s2368
                %s2444 = scalar_select %p2443, 0, %s2442
                %s2445 = smul.u32 %s2444, 256
                %s2446 = smul.u32 %s2444, 256
                %s2447 = scalar_lea.vmem %s2348, %s2445 [#allocation3]
                %s2448 = scalar_lea.vmem %s2359, %s2446
              $region69: #{mlp_pallas.1} parent=63 // loop_footer
                %s2372 = sadd.s32 %s2370, 1
              $region70: #{mlp_pallas.1} parent=63 // loop_footer_branch
                %2369 = sbr.rel target = $region66
              $region71: #{mlp_pallas.1} parent=63 // loop_exit
                _
              %s2449 = sshrl.u32 %s2355, 5
              %s2450 = sand.u32 %s2355, 31
              %s2451 = smul.u32 %s2449, 32
              %s2452 = smul.u32 8, %s2451
              %s2453 = scalar_lea.vmem %s2348, %s2452 [#allocation3]
              %s2454 = smul.u32 8, %s2451
              %s2455 = scalar_lea.vmem %s2359, %s2454
              // While loop
              $region72: #{mlp_pallas.1} parent=63 // loop_pre_header
                _
              $region73: #{mlp_pallas.1} parent=63 // loop_header
                %s2457 = sphi 0, %s2459
                %p2458 = scmp.ge.s32.totalorder %s2457, %s2450
                %s2462 = sphi 0, %s2469
                %s2463 = sphi %s2453, %s2472
                %s2464 = sphi %s2455, %s2473
              $region74: #{mlp_pallas.1} parent=63 // loop_header_branch
                %2461 = sbr.rel (%p2458) target = $region78
              $region75: #{mlp_pallas.1} parent=63 // loop_body
                %v2465 = vld [vmem:[%s2463] sm:$0xff]
                %2466 = vst [vmem:[%s2464] sm:$0xff] %v2465
                %s2467 = sadd.s32 1, %s2462
                %p2468 = scmp.ge.s32.totalorder %s2467, %s2450
                %s2469 = scalar_select %p2468, 0, %s2467
                %s2470 = smul.u32 %s2469, 8
                %s2471 = smul.u32 %s2469, 8
                %s2472 = scalar_lea.vmem %s2453, %s2470 [#allocation3]
                %s2473 = scalar_lea.vmem %s2455, %s2471
              $region76: #{mlp_pallas.1} parent=63 // loop_footer
                %s2459 = sadd.s32 %s2457, 1
              $region77: #{mlp_pallas.1} parent=63 // loop_footer_branch
                %2456 = sbr.rel target = $region73
              $region78: #{mlp_pallas.1} parent=63 // loop_exit
                _
            $region64: #{mlp_pallas.1} parent=55 // pred_fallthru
              _
          $region56: #{mlp_pallas.1} parent=51 // pred_fallthru
            _
          %2584 = vnop
        $region52: #{mlp_pallas.1} parent=39 // pred_fallthru
          _
      $region40: #{mlp_pallas.1} parent=5 // pred_fallthru
        _
      %p2585 = scmp.le.s32.totalorder 2, %s11
      // Predicated region
      $region101: #{mlp_pallas.1} parent=5 // pred_check
        %p2586 = pneg %p2585
      $region102: #{mlp_pallas.1} parent=5 // pred_check_branch
        %2588 = sbr.rel (%p2586) target = $region104
      $region103: #{mlp_pallas.1} parent=5 // pred_region
        %s2589 = ssub.s32 %s11, 2
        // Predicated region
        $region105: #{mlp_pallas.1} parent=103 // pred_check
          %p2590 = pneg %p177
        $region106: #{mlp_pallas.1} parent=103 // pred_check_branch
          %2592 = sbr.rel (%p2590) target = $region108
        $region107: #{mlp_pallas.1} parent=103 // pred_region
          %s2593 = sand.u32 %s162, 1
          %s2594 = sand.u32 %s162, 1
          %s2595 = smul.addr %s2594, 256
          %s2596 = scalar_lea.vmem [#allocation3], %s2595
        $region108: #{mlp_pallas.1} parent=103 // pred_fallthru
          _
      $region104: #{mlp_pallas.1} parent=5 // pred_fallthru
        _
    $region6: #{mlp_pallas.1} parent=1 // loop_footer
      %s15 = sadd.s32 1, %s11
    $region7: #{mlp_pallas.1} parent=1 // loop_footer_branch
      %10 = sbr.rel target = $region3
    $region8: #{mlp_pallas.1} parent=1 // loop_exit
      _

</llo_original>
